<compile_context>
chip_gen: v5e
topology: v5e:2x2
jax: 0.10.0
libtpu: 0.0.40
codegen_flags: <defaults>
</compile_context>

<pallas_src>
import functools

import numpy as np
import jax
import jax.numpy as jnp
from jax import lax
from jax.experimental import pallas as pl
from jax.experimental.pallas import tpu as pltpu


def _round_up(x, m):
    return (x + m - 1) // m * m


# ----------------------------------------------------------------------------
# Fused DoubleConv kernel: one batch image per grid step.
# ----------------------------------------------------------------------------
def _double_conv_kernel(x_ref, w1_ref, b1_ref, w2_ref, b2_ref, m_ref,
                        o_ref, mid_ref, p1_ref, p2_ref, *, W, guard):
    """Per grid step (channels on sublanes, flattened H*W pixels on lanes):
      x_ref  : (Cin_p, Lpad)      bf16  zero-guarded input slab
      w1_ref : (Cmid_p, 9*Cin_p)  bf16  BN-folded conv1 weights (tap-major cols)
      b1_ref : (Cmid_p, 1)        f32   folded conv1 bias
      w2_ref : (Cout, 9*Cmid_p)   bf16
      b2_ref : (Cout, 1)          f32
      m_ref  : (2, L)             bf16  row0: 0 where w==0, row1: 0 where w==W-1
      o_ref  : (Cout, L)          f32   interior-only, lane-dense output
      mid_ref: (Cmid_p, Lpad)     bf16  scratch: guarded mid-activation slab
      p1_ref : (9*Cin_p, L)       bf16  scratch: conv1 im2col patch
      p2_ref : (9*Cmid_p, L)      bf16  scratch: conv2 im2col patch
    with L = H*W, Lpad = L + 2*guard, guard >= W+1 (lane-tile aligned).
    """
    L = o_ref.shape[-1]
    cin_p = x_ref.shape[0]
    cmid = mid_ref.shape[0]

    mask_l = m_ref[0:1, :]   # zero where the pixel is in image column 0
    mask_r = m_ref[1:2, :]   # zero where the pixel is in image column W-1

    def im2col(read_tap, patch_ref, c):
        # Patch rows [t*c, (t+1)*c) <- tap t = (kh, kw); the kw=+-1 taps are
        # masked at the left/right image edges, which together with the zero
        # guard bands exactly reproduces the conv's zero padding.
        for t in range(9):
            kh, kw = t // 3 - 1, t % 3 - 1
            piece = read_tap(guard + kh * W + kw)        # static lane shift
            if kw == -1:
                piece = piece * mask_l
            elif kw == 1:
                piece = piece * mask_r
            patch_ref[t * c:(t + 1) * c, :] = piece      # tile-aligned store

    # ---- conv1 + folded-BN bias + ReLU: ONE MXU matmul (K = 9*Cin_p) --------
    im2col(lambda s: x_ref[:, s:s + L], p1_ref, cin_p)
    acc1 = jnp.dot(w1_ref[...], p1_ref[...], preferred_element_type=jnp.float32)
    mid = jnp.maximum(acc1 + b1_ref[...], 0.0).astype(mid_ref.dtype)

    # Mid activation never leaves VMEM.  Zero only the guard bands (interior is
    # fully overwritten); done every step so results stay correct when the
    # batch grid axis is sharded across megacore TensorCores.
    mid_ref[:, :guard] = jnp.zeros((cmid, guard), mid_ref.dtype)
    mid_ref[:, guard + L:] = jnp.zeros((cmid, guard), mid_ref.dtype)
    mid_ref[:, guard:guard + L] = mid

    # ---- conv2 + folded-BN bias + ReLU: ONE MXU matmul (K = 9*Cmid_p) -------
    im2col(lambda s: mid_ref[:, s:s + L], p2_ref, cmid)
    acc2 = jnp.dot(w2_ref[...], p2_ref[...], preferred_element_type=jnp.float32)
    o_ref[...] = jnp.maximum(acc2 + b2_ref[...], 0.0)    # (Cout, L) f32, 256 lanes


def double_conv_pallas(x_nchw, params):
    """DoubleConv forward. x_nchw: (N, Cin, H, W) f32 -> (N, Cout, H, W) f32."""
    w1, b1, w2, b2 = params["w1"], params["b1"], params["w2"], params["b2"]
    N, Cin, H, W = x_nchw.shape
    cmid_p, k1 = w1.shape
    cin_p = k1 // 9
    cout = w2.shape[0]
    assert cin_p >= Cin

    L = H * W
    guard = _round_up(W + 1, 128)          # zero guard band, lane-tile aligned
    Lpad = L + 2 * guard

    # Input prep: a single fused cast+pad (channel pad to cin_p + lane guards).
    # No layout transpose -- NCHW is already channels-on-sublanes/pixels-on-lanes.
    x = x_nchw.reshape(N, Cin, L).astype(jnp.bfloat16)
    x_slab = jnp.pad(x, ((0, 0), (0, cin_p - Cin), (guard, guard)))

    # Lane-dense edge masks emulating the horizontal zero padding of both convs.
    w_idx = jnp.arange(L, dtype=jnp.int32) % W
    masks = jnp.stack([w_idx != 0, w_idx != W - 1]).astype(jnp.bfloat16)

    kern = functools.partial(_double_conv_kernel, W=W, guard=guard)
    # TODO(synk): for large spatial extents (per-image slabs no longer comfortable
    # in VMEM, especially v7x's 64 MiB), tile the grid over bands of image rows
    # with a 2-row halo (manual DMA of the overlapping window) instead of one
    # whole image per grid step.
    out = pl.pallas_call(
        kern,
        out_shape=jax.ShapeDtypeStruct((N, cout, L), jnp.float32),
        grid=(N,),
        in_specs=[
            pl.BlockSpec((None, cin_p, Lpad), lambda n: (n, 0, 0)),
            pl.BlockSpec((cmid_p, 9 * cin_p), lambda n: (0, 0)),
            pl.BlockSpec((cmid_p, 1), lambda n: (0, 0)),
            pl.BlockSpec((cout, 9 * cmid_p), lambda n: (0, 0)),
            pl.BlockSpec((cout, 1), lambda n: (0, 0)),
            pl.BlockSpec((2, L), lambda n: (0, 0)),
        ],
        out_specs=pl.BlockSpec((None, cout, L), lambda n: (n, 0, 0)),
        scratch_shapes=[
            pltpu.VMEM((cmid_p, Lpad), jnp.bfloat16),    # mid slab
            pltpu.VMEM((9 * cin_p, L), jnp.bfloat16),    # conv1 im2col patch
            pltpu.VMEM((9 * cmid_p, L), jnp.bfloat16),   # conv2 im2col patch
        ],
        compiler_params=pltpu.CompilerParams(
            dimension_semantics=("parallel",),
        ),
    )(x_slab, w1, b1, w2, b2, masks)

    # Free reshape: kernel output is already channel-major (NCHW order).
    return out.reshape(N, cout, H, W)


# ----------------------------------------------------------------------------
# Parameters: PyTorch-style init; eval-mode BN folded into weights/bias.
# ----------------------------------------------------------------------------
def init_double_conv_params(key, cin, cout, cmid=None, eps=1e-5):
    cmid = cmid or cout
    cin_p = _round_up(cin, 16)       # bf16 sublane-tile aligned channel dims
    cmid_p = _round_up(cmid, 16)

    def conv_bn(k, ci, co):
        k1, k2, k3, k4, k5, k6 = jax.random.split(k, 6)
        bound = 1.0 / np.sqrt(ci * 9)
        w = jax.random.uniform(k1, (co, ci, 3, 3), jnp.float32, -bound, bound)  # OIHW
        b = jax.random.uniform(k2, (co,), jnp.float32, -bound, bound)
        gamma = 1.0 + 0.1 * jax.random.normal(k3, (co,), jnp.float32)
        beta = 0.1 * jax.random.normal(k4, (co,), jnp.float32)
        mean = 0.1 * jax.random.normal(k5, (co,), jnp.float32)
        var = 1.0 + 0.1 * jax.random.uniform(k6, (co,), jnp.float32)
        return dict(w=w, b=b, gamma=gamma, beta=beta, mean=mean, var=var)

    def fold(p, ci_pad, co_pad):
        # Fold eval-mode BN into the conv: (x conv w)*s + t == x conv (w*s) + t.
        co, ci = p["w"].shape[:2]
        scale = p["gamma"] / jnp.sqrt(p["var"] + eps)
        w_fold = p["w"] * scale[:, None, None, None]
        b_fold = (p["b"] - p["mean"]) * scale + p["beta"]
        # Zero-pad channel dims, then (co,ci,3,3) -> (co_pad, 9*ci_pad) with
        # tap-major columns (kh, kw, ci) matching the kernel's patch rows.
        w_fold = jnp.pad(w_fold, ((0, co_pad - co), (0, ci_pad - ci),
                                  (0, 0), (0, 0)))
        w_mat = jnp.transpose(w_fold, (0, 2, 3, 1)).reshape(co_pad, 9 * ci_pad)
        b_col = jnp.pad(b_fold, (0, co_pad - co)).reshape(co_pad, 1)
        return w_mat.astype(jnp.bfloat16), b_col.astype(jnp.float32)

    ka, kb = jax.random.split(key)
    raw = {"c1": conv_bn(ka, cin, cmid), "c2": conv_bn(kb, cmid, cout)}
    w1, b1 = fold(raw["c1"], cin_p, cmid_p)
    w2, b2 = fold(raw["c2"], cmid_p, cout)     # conv2 output channels unpadded
    kparams = {"w1": w1, "b1": b1, "w2": w2, "b2": b2}
    return raw, kparams


# Pure-JAX f32 reference with the ORIGINAL (unfolded) conv/BN parameters.
def double_conv_reference(x, raw, eps=1e-5):
    def conv_bn_relu(h, p):
        y = lax.conv_general_dilated(
            h, p["w"], window_strides=(1, 1), padding=((1, 1), (1, 1)),
            dimension_numbers=("NCHW", "OIHW", "NCHW"))
        y = y + p["b"][None, :, None, None]
        scale = p["gamma"] / jnp.sqrt(p["var"] + eps)
        y = (y - p["mean"][None, :, None, None]) * scale[None, :, None, None] \
            + p["beta"][None, :, None, None]
        return jnp.maximum(y, 0.0)
    return conv_bn_relu(conv_bn_relu(x, raw["c1"]), raw["c2"])


# ----------------------------------------------------------------------------
if __name__ == "__main__":
    N, CIN, H, W = 2, 4, 16, 16
    COUT = 64

    root = jax.random.PRNGKey(0)
    k_param, k_x = jax.random.split(root)
    raw, kparams = init_double_conv_params(k_param, CIN, COUT)
    x = jax.random.normal(k_x, (N, CIN, H, W), jnp.float32)

    out = jax.jit(double_conv_pallas)(x, kparams)
    out = jax.block_until_ready(out)

    assert out.shape == (N, COUT, H, W), out.shape
    assert bool(jnp.all(jnp.isfinite(out)))

    ref = double_conv_reference(x, raw)
    err = float(jnp.max(jnp.abs(out - ref)))
    assert bool(jnp.allclose(out, ref, rtol=5e-2, atol=5e-2)), f"max abs err {err}"

    print("KERNEL_OK")
</pallas_src>

<mosaic_0001>
module attributes {stable_mosaic.version = 11 : i64} {
  func.func @_double_conv_kernel(%arg0: i32, %arg1: memref<1x16x512xbf16, #tpu.memory_space<vmem>>, %arg2: memref<64x144xbf16, #tpu.memory_space<vmem>>, %arg3: memref<64x1xf32, #tpu.memory_space<vmem>>, %arg4: memref<64x576xbf16, #tpu.memory_space<vmem>>, %arg5: memref<64x1xf32, #tpu.memory_space<vmem>>, %arg6: memref<2x256xbf16, #tpu.memory_space<vmem>>, %arg7: memref<1x64x256xf32, #tpu.memory_space<vmem>>, %arg8: memref<64x512xbf16, #tpu.memory_space<vmem>>, %arg9: memref<144x256xbf16, #tpu.memory_space<vmem>>, %arg10: memref<576x256xbf16, #tpu.memory_space<vmem>>) attributes {dimension_semantics = [#tpu.dimension_semantics<parallel>], iteration_bounds = array<i64: 2>, scalar_prefetch = 0 : i64, scratch_operands = 3 : i64, tpu.core_type = #tpu.core_type<tc>, window_params = [{transform_indices = @transform_0, window_bounds = array<i64: 1, 16, 512>}, {pipeline_mode = #tpu.pipeline_mode<synchronous>, transform_indices = @transform_1, window_bounds = array<i64: 64, 144>}, {pipeline_mode = #tpu.pipeline_mode<synchronous>, transform_indices = @transform_2, window_bounds = array<i64: 64, 1>}, {pipeline_mode = #tpu.pipeline_mode<synchronous>, transform_indices = @transform_3, window_bounds = array<i64: 64, 576>}, {pipeline_mode = #tpu.pipeline_mode<synchronous>, transform_indices = @transform_4, window_bounds = array<i64: 64, 1>}, {pipeline_mode = #tpu.pipeline_mode<synchronous>, transform_indices = @transform_5, window_bounds = array<i64: 2, 256>}, {transform_indices = @transform_6, window_bounds = array<i64: 1, 64, 256>}]} {
    %c0 = arith.constant 0 : index
    %c0_0 = arith.constant 0 : index
    %0 = vector.load %arg6[%c0, %c0_0] : memref<2x256xbf16, #tpu.memory_space<vmem>>, vector<1x256xbf16>
    %c1 = arith.constant 1 : index
    %c0_1 = arith.constant 0 : index
    %1 = vector.load %arg6[%c1, %c0_1] : memref<2x256xbf16, #tpu.memory_space<vmem>>, vector<1x256xbf16>
    %c0_2 = arith.constant 0 : index
    %c0_3 = arith.constant 0 : index
    %c111 = arith.constant 111 : index
    %2 = vector.load %arg1[%c0_2, %c0_3, %c111] : memref<1x16x512xbf16, #tpu.memory_space<vmem>>, vector<1x16x256xbf16>
    %3 = vector.shape_cast %2 : vector<1x16x256xbf16> to vector<16x256xbf16>
    %4 = vector.broadcast %0 : vector<1x256xbf16> to vector<16x256xbf16>
    %5 = arith.mulf %3, %4 : vector<16x256xbf16>
    %c0_4 = arith.constant 0 : index
    %c0_5 = arith.constant 0 : index
    %6 = vector.load %arg9[%c0_4, %c0_5] : memref<144x256xbf16, #tpu.memory_space<vmem>>, vector<16x256xbf16>
    tpu.vector_store %arg9[%c0_4, %c0_5], %5 {strides = array<i32>} : memref<144x256xbf16, #tpu.memory_space<vmem>>, vector<16x256xbf16>,
    %c0_6 = arith.constant 0 : index
    %c0_7 = arith.constant 0 : index
    %c112 = arith.constant 112 : index
    %7 = vector.load %arg1[%c0_6, %c0_7, %c112] : memref<1x16x512xbf16, #tpu.memory_space<vmem>>, vector<1x16x256xbf16>
    %8 = vector.shape_cast %7 : vector<1x16x256xbf16> to vector<16x256xbf16>
    %c16 = arith.constant 16 : index
    %c0_8 = arith.constant 0 : index
    %9 = vector.load %arg9[%c16, %c0_8] : memref<144x256xbf16, #tpu.memory_space<vmem>>, vector<16x256xbf16>
    tpu.vector_store %arg9[%c16, %c0_8], %8 {strides = array<i32>} : memref<144x256xbf16, #tpu.memory_space<vmem>>, vector<16x256xbf16>,
    %c0_9 = arith.constant 0 : index
    %c0_10 = arith.constant 0 : index
    %c113 = arith.constant 113 : index
    %10 = vector.load %arg1[%c0_9, %c0_10, %c113] : memref<1x16x512xbf16, #tpu.memory_space<vmem>>, vector<1x16x256xbf16>
    %11 = vector.shape_cast %10 : vector<1x16x256xbf16> to vector<16x256xbf16>
    %12 = vector.broadcast %1 : vector<1x256xbf16> to vector<16x256xbf16>
    %13 = arith.mulf %11, %12 : vector<16x256xbf16>
    %c32 = arith.constant 32 : index
    %c0_11 = arith.constant 0 : index
    %14 = vector.load %arg9[%c32, %c0_11] : memref<144x256xbf16, #tpu.memory_space<vmem>>, vector<16x256xbf16>
    tpu.vector_store %arg9[%c32, %c0_11], %13 {strides = array<i32>} : memref<144x256xbf16, #tpu.memory_space<vmem>>, vector<16x256xbf16>,
    %c0_12 = arith.constant 0 : index
    %c0_13 = arith.constant 0 : index
    %c127 = arith.constant 127 : index
    %15 = vector.load %arg1[%c0_12, %c0_13, %c127] : memref<1x16x512xbf16, #tpu.memory_space<vmem>>, vector<1x16x256xbf16>
    %16 = vector.shape_cast %15 : vector<1x16x256xbf16> to vector<16x256xbf16>
    %17 = vector.broadcast %0 : vector<1x256xbf16> to vector<16x256xbf16>
    %18 = arith.mulf %16, %17 : vector<16x256xbf16>
    %c48 = arith.constant 48 : index
    %c0_14 = arith.constant 0 : index
    %19 = vector.load %arg9[%c48, %c0_14] : memref<144x256xbf16, #tpu.memory_space<vmem>>, vector<16x256xbf16>
    tpu.vector_store %arg9[%c48, %c0_14], %18 {strides = array<i32>} : memref<144x256xbf16, #tpu.memory_space<vmem>>, vector<16x256xbf16>,
    %c0_15 = arith.constant 0 : index
    %c0_16 = arith.constant 0 : index
    %c128 = arith.constant 128 : index
    %20 = vector.load %arg1[%c0_15, %c0_16, %c128] : memref<1x16x512xbf16, #tpu.memory_space<vmem>>, vector<1x16x256xbf16>
    %21 = vector.shape_cast %20 : vector<1x16x256xbf16> to vector<16x256xbf16>
    %c64 = arith.constant 64 : index
    %c0_17 = arith.constant 0 : index
    %22 = vector.load %arg9[%c64, %c0_17] : memref<144x256xbf16, #tpu.memory_space<vmem>>, vector<16x256xbf16>
    tpu.vector_store %arg9[%c64, %c0_17], %21 {strides = array<i32>} : memref<144x256xbf16, #tpu.memory_space<vmem>>, vector<16x256xbf16>,
    %c0_18 = arith.constant 0 : index
    %c0_19 = arith.constant 0 : index
    %c129 = arith.constant 129 : index
    %23 = vector.load %arg1[%c0_18, %c0_19, %c129] : memref<1x16x512xbf16, #tpu.memory_space<vmem>>, vector<1x16x256xbf16>
    %24 = vector.shape_cast %23 : vector<1x16x256xbf16> to vector<16x256xbf16>
    %25 = vector.broadcast %1 : vector<1x256xbf16> to vector<16x256xbf16>
    %26 = arith.mulf %24, %25 : vector<16x256xbf16>
    %c80 = arith.constant 80 : index
    %c0_20 = arith.constant 0 : index
    %27 = vector.load %arg9[%c80, %c0_20] : memref<144x256xbf16, #tpu.memory_space<vmem>>, vector<16x256xbf16>
    tpu.vector_store %arg9[%c80, %c0_20], %26 {strides = array<i32>} : memref<144x256xbf16, #tpu.memory_space<vmem>>, vector<16x256xbf16>,
    %c0_21 = arith.constant 0 : index
    %c0_22 = arith.constant 0 : index
    %c143 = arith.constant 143 : index
    %28 = vector.load %arg1[%c0_21, %c0_22, %c143] : memref<1x16x512xbf16, #tpu.memory_space<vmem>>, vector<1x16x256xbf16>
    %29 = vector.shape_cast %28 : vector<1x16x256xbf16> to vector<16x256xbf16>
    %30 = vector.broadcast %0 : vector<1x256xbf16> to vector<16x256xbf16>
    %31 = arith.mulf %29, %30 : vector<16x256xbf16>
    %c96 = arith.constant 96 : index
    %c0_23 = arith.constant 0 : index
    %32 = vector.load %arg9[%c96, %c0_23] : memref<144x256xbf16, #tpu.memory_space<vmem>>, vector<16x256xbf16>
    tpu.vector_store %arg9[%c96, %c0_23], %31 {strides = array<i32>} : memref<144x256xbf16, #tpu.memory_space<vmem>>, vector<16x256xbf16>,
    %c0_24 = arith.constant 0 : index
    %c0_25 = arith.constant 0 : index
    %c144 = arith.constant 144 : index
    %33 = vector.load %arg1[%c0_24, %c0_25, %c144] : memref<1x16x512xbf16, #tpu.memory_space<vmem>>, vector<1x16x256xbf16>
    %34 = vector.shape_cast %33 : vector<1x16x256xbf16> to vector<16x256xbf16>
    %c112_26 = arith.constant 112 : index
    %c0_27 = arith.constant 0 : index
    %35 = vector.load %arg9[%c112_26, %c0_27] : memref<144x256xbf16, #tpu.memory_space<vmem>>, vector<16x256xbf16>
    tpu.vector_store %arg9[%c112_26, %c0_27], %34 {strides = array<i32>} : memref<144x256xbf16, #tpu.memory_space<vmem>>, vector<16x256xbf16>,
    %c0_28 = arith.constant 0 : index
    %c0_29 = arith.constant 0 : index
    %c145 = arith.constant 145 : index
    %36 = vector.load %arg1[%c0_28, %c0_29, %c145] : memref<1x16x512xbf16, #tpu.memory_space<vmem>>, vector<1x16x256xbf16>
    %37 = vector.shape_cast %36 : vector<1x16x256xbf16> to vector<16x256xbf16>
    %38 = vector.broadcast %1 : vector<1x256xbf16> to vector<16x256xbf16>
    %39 = arith.mulf %37, %38 : vector<16x256xbf16>
    %c128_30 = arith.constant 128 : index
    %c0_31 = arith.constant 0 : index
    %40 = vector.load %arg9[%c128_30, %c0_31] : memref<144x256xbf16, #tpu.memory_space<vmem>>, vector<16x256xbf16>
    tpu.vector_store %arg9[%c128_30, %c0_31], %39 {strides = array<i32>} : memref<144x256xbf16, #tpu.memory_space<vmem>>, vector<16x256xbf16>,
    %c0_32 = arith.constant 0 : index
    %c0_33 = arith.constant 0 : index
    %41 = vector.load %arg2[%c0_32, %c0_33] : memref<64x144xbf16, #tpu.memory_space<vmem>>, vector<64x144xbf16>
    %c0_34 = arith.constant 0 : index
    %c0_35 = arith.constant 0 : index
    %42 = vector.load %arg9[%c0_34, %c0_35] : memref<144x256xbf16, #tpu.memory_space<vmem>>, vector<144x256xbf16>
    %cst = arith.constant dense<0.000000e+00> : vector<64x256xf32>
    %43 = tpu.matmul %41, %42, %cst {dimension_numbers = #tpu.dot_dimension_numbers<[1], [0], [0], [1], [0, 0, 1, 1], [], []>} : vector<64x144xbf16>, vector<144x256xbf16>, vector<64x256xf32> -> vector<64x256xf32>
    %c0_36 = arith.constant 0 : index
    %c0_37 = arith.constant 0 : index
    %44 = vector.load %arg3[%c0_36, %c0_37] : memref<64x1xf32, #tpu.memory_space<vmem>>, vector<64x1xf32>
    %45 = vector.broadcast %44 : vector<64x1xf32> to vector<64x256xf32>
    %46 = arith.addf %43, %45 : vector<64x256xf32>
    %cst_38 = arith.constant 0.000000e+00 : f32
    %47 = vector.broadcast %cst_38 : f32 to vector<64x256xf32>
    %48 = arith.maximumf %46, %47 : vector<64x256xf32>
    %49 = arith.truncf %48 : vector<64x256xf32> to vector<64x256xbf16>
    %cst_39 = arith.constant 0.000000e+00 : bf16
    %50 = vector.broadcast %cst_39 : bf16 to vector<64x128xbf16>
    %c0_40 = arith.constant 0 : index
    %c0_41 = arith.constant 0 : index
    %51 = vector.load %arg8[%c0_40, %c0_41] : memref<64x512xbf16, #tpu.memory_space<vmem>>, vector<64x128xbf16>
    tpu.vector_store %arg8[%c0_40, %c0_41], %50 {strides = array<i32>} : memref<64x512xbf16, #tpu.memory_space<vmem>>, vector<64x128xbf16>,
    %cst_42 = arith.constant 0.000000e+00 : bf16
    %52 = vector.broadcast %cst_42 : bf16 to vector<64x128xbf16>
    %c0_43 = arith.constant 0 : index
    %c384 = arith.constant 384 : index
    %53 = vector.load %arg8[%c0_43, %c384] : memref<64x512xbf16, #tpu.memory_space<vmem>>, vector<64x128xbf16>
    tpu.vector_store %arg8[%c0_43, %c384], %52 {strides = array<i32>} : memref<64x512xbf16, #tpu.memory_space<vmem>>, vector<64x128xbf16>,
    %c0_44 = arith.constant 0 : index
    %c128_45 = arith.constant 128 : index
    %54 = vector.load %arg8[%c0_44, %c128_45] : memref<64x512xbf16, #tpu.memory_space<vmem>>, vector<64x256xbf16>
    tpu.vector_store %arg8[%c0_44, %c128_45], %49 {strides = array<i32>} : memref<64x512xbf16, #tpu.memory_space<vmem>>, vector<64x256xbf16>,
    %c0_46 = arith.constant 0 : index
    %c111_47 = arith.constant 111 : index
    %55 = vector.load %arg8[%c0_46, %c111_47] : memref<64x512xbf16, #tpu.memory_space<vmem>>, vector<64x256xbf16>
    %56 = vector.broadcast %0 : vector<1x256xbf16> to vector<64x256xbf16>
    %57 = arith.mulf %55, %56 : vector<64x256xbf16>
    %c0_48 = arith.constant 0 : index
    %c0_49 = arith.constant 0 : index
    %58 = vector.load %arg10[%c0_48, %c0_49] : memref<576x256xbf16, #tpu.memory_space<vmem>>, vector<64x256xbf16>
    tpu.vector_store %arg10[%c0_48, %c0_49], %57 {strides = array<i32>} : memref<576x256xbf16, #tpu.memory_space<vmem>>, vector<64x256xbf16>,
    %c0_50 = arith.constant 0 : index
    %c112_51 = arith.constant 112 : index
    %59 = vector.load %arg8[%c0_50, %c112_51] : memref<64x512xbf16, #tpu.memory_space<vmem>>, vector<64x256xbf16>
    %c64_52 = arith.constant 64 : index
    %c0_53 = arith.constant 0 : index
    %60 = vector.load %arg10[%c64_52, %c0_53] : memref<576x256xbf16, #tpu.memory_space<vmem>>, vector<64x256xbf16>
    tpu.vector_store %arg10[%c64_52, %c0_53], %59 {strides = array<i32>} : memref<576x256xbf16, #tpu.memory_space<vmem>>, vector<64x256xbf16>,
    %c0_54 = arith.constant 0 : index
    %c113_55 = arith.constant 113 : index
    %61 = vector.load %arg8[%c0_54, %c113_55] : memref<64x512xbf16, #tpu.memory_space<vmem>>, vector<64x256xbf16>
    %62 = vector.broadcast %1 : vector<1x256xbf16> to vector<64x256xbf16>
    %63 = arith.mulf %61, %62 : vector<64x256xbf16>
    %c128_56 = arith.constant 128 : index
    %c0_57 = arith.constant 0 : index
    %64 = vector.load %arg10[%c128_56, %c0_57] : memref<576x256xbf16, #tpu.memory_space<vmem>>, vector<64x256xbf16>
    tpu.vector_store %arg10[%c128_56, %c0_57], %63 {strides = array<i32>} : memref<576x256xbf16, #tpu.memory_space<vmem>>, vector<64x256xbf16>,
    %c0_58 = arith.constant 0 : index
    %c127_59 = arith.constant 127 : index
    %65 = vector.load %arg8[%c0_58, %c127_59] : memref<64x512xbf16, #tpu.memory_space<vmem>>, vector<64x256xbf16>
    %66 = vector.broadcast %0 : vector<1x256xbf16> to vector<64x256xbf16>
    %67 = arith.mulf %65, %66 : vector<64x256xbf16>
    %c192 = arith.constant 192 : index
    %c0_60 = arith.constant 0 : index
    %68 = vector.load %arg10[%c192, %c0_60] : memref<576x256xbf16, #tpu.memory_space<vmem>>, vector<64x256xbf16>
    tpu.vector_store %arg10[%c192, %c0_60], %67 {strides = array<i32>} : memref<576x256xbf16, #tpu.memory_space<vmem>>, vector<64x256xbf16>,
    %c0_61 = arith.constant 0 : index
    %c128_62 = arith.constant 128 : index
    %69 = vector.load %arg8[%c0_61, %c128_62] : memref<64x512xbf16, #tpu.memory_space<vmem>>, vector<64x256xbf16>
    %c256 = arith.constant 256 : index
    %c0_63 = arith.constant 0 : index
    %70 = vector.load %arg10[%c256, %c0_63] : memref<576x256xbf16, #tpu.memory_space<vmem>>, vector<64x256xbf16>
    tpu.vector_store %arg10[%c256, %c0_63], %69 {strides = array<i32>} : memref<576x256xbf16, #tpu.memory_space<vmem>>, vector<64x256xbf16>,
    %c0_64 = arith.constant 0 : index
    %c129_65 = arith.constant 129 : index
    %71 = vector.load %arg8[%c0_64, %c129_65] : memref<64x512xbf16, #tpu.memory_space<vmem>>, vector<64x256xbf16>
    %72 = vector.broadcast %1 : vector<1x256xbf16> to vector<64x256xbf16>
    %73 = arith.mulf %71, %72 : vector<64x256xbf16>
    %c320 = arith.constant 320 : index
    %c0_66 = arith.constant 0 : index
    %74 = vector.load %arg10[%c320, %c0_66] : memref<576x256xbf16, #tpu.memory_space<vmem>>, vector<64x256xbf16>
    tpu.vector_store %arg10[%c320, %c0_66], %73 {strides = array<i32>} : memref<576x256xbf16, #tpu.memory_space<vmem>>, vector<64x256xbf16>,
    %c0_67 = arith.constant 0 : index
    %c143_68 = arith.constant 143 : index
    %75 = vector.load %arg8[%c0_67, %c143_68] : memref<64x512xbf16, #tpu.memory_space<vmem>>, vector<64x256xbf16>
    %76 = vector.broadcast %0 : vector<1x256xbf16> to vector<64x256xbf16>
    %77 = arith.mulf %75, %76 : vector<64x256xbf16>
    %c384_69 = arith.constant 384 : index
    %c0_70 = arith.constant 0 : index
    %78 = vector.load %arg10[%c384_69, %c0_70] : memref<576x256xbf16, #tpu.memory_space<vmem>>, vector<64x256xbf16>
    tpu.vector_store %arg10[%c384_69, %c0_70], %77 {strides = array<i32>} : memref<576x256xbf16, #tpu.memory_space<vmem>>, vector<64x256xbf16>,
    %c0_71 = arith.constant 0 : index
    %c144_72 = arith.constant 144 : index
    %79 = vector.load %arg8[%c0_71, %c144_72] : memref<64x512xbf16, #tpu.memory_space<vmem>>, vector<64x256xbf16>
    %c448 = arith.constant 448 : index
    %c0_73 = arith.constant 0 : index
    %80 = vector.load %arg10[%c448, %c0_73] : memref<576x256xbf16, #tpu.memory_space<vmem>>, vector<64x256xbf16>
    tpu.vector_store %arg10[%c448, %c0_73], %79 {strides = array<i32>} : memref<576x256xbf16, #tpu.memory_space<vmem>>, vector<64x256xbf16>,
    %c0_74 = arith.constant 0 : index
    %c145_75 = arith.constant 145 : index
    %81 = vector.load %arg8[%c0_74, %c145_75] : memref<64x512xbf16, #tpu.memory_space<vmem>>, vector<64x256xbf16>
    %82 = vector.broadcast %1 : vector<1x256xbf16> to vector<64x256xbf16>
    %83 = arith.mulf %81, %82 : vector<64x256xbf16>
    %c512 = arith.constant 512 : index
    %c0_76 = arith.constant 0 : index
    %84 = vector.load %arg10[%c512, %c0_76] : memref<576x256xbf16, #tpu.memory_space<vmem>>, vector<64x256xbf16>
    tpu.vector_store %arg10[%c512, %c0_76], %83 {strides = array<i32>} : memref<576x256xbf16, #tpu.memory_space<vmem>>, vector<64x256xbf16>,
    %c0_77 = arith.constant 0 : index
    %c0_78 = arith.constant 0 : index
    %85 = vector.load %arg4[%c0_77, %c0_78] : memref<64x576xbf16, #tpu.memory_space<vmem>>, vector<64x576xbf16>
    %c0_79 = arith.constant 0 : index
    %c0_80 = arith.constant 0 : index
    %86 = vector.load %arg10[%c0_79, %c0_80] : memref<576x256xbf16, #tpu.memory_space<vmem>>, vector<576x256xbf16>
    %cst_81 = arith.constant dense<0.000000e+00> : vector<64x256xf32>
    %87 = tpu.matmul %85, %86, %cst_81 {dimension_numbers = #tpu.dot_dimension_numbers<[1], [0], [0], [1], [0, 0, 1, 1], [], []>} : vector<64x576xbf16>, vector<576x256xbf16>, vector<64x256xf32> -> vector<64x256xf32>
    %c0_82 = arith.constant 0 : index
    %c0_83 = arith.constant 0 : index
    %88 = vector.load %arg5[%c0_82, %c0_83] : memref<64x1xf32, #tpu.memory_space<vmem>>, vector<64x1xf32>
    %89 = vector.broadcast %88 : vector<64x1xf32> to vector<64x256xf32>
    %90 = arith.addf %87, %89 : vector<64x256xf32>
    %cst_84 = arith.constant 0.000000e+00 : f32
    %91 = vector.broadcast %cst_84 : f32 to vector<64x256xf32>
    %92 = arith.maximumf %90, %91 : vector<64x256xf32>
    %c0_85 = arith.constant 0 : index
    %c0_86 = arith.constant 0 : index
    %c0_87 = arith.constant 0 : index
    %93 = vector.load %arg7[%c0_85, %c0_86, %c0_87] : memref<1x64x256xf32, #tpu.memory_space<vmem>>, vector<1x64x256xf32>
    %94 = vector.shape_cast %93 : vector<1x64x256xf32> to vector<64x256xf32>
    %95 = vector.shape_cast %92 : vector<64x256xf32> to vector<1x64x256xf32>
    tpu.vector_store %arg7[%c0_85, %c0_86, %c0_87], %95 {strides = array<i32>} : memref<1x64x256xf32, #tpu.memory_space<vmem>>, vector<1x64x256xf32>,
    return
  }
  func.func @transform_0(%arg0: i32) -> (i32, i32, i32) {
    %c0_i32 = arith.constant 0 : i32
    %c0_i32_0 = arith.constant 0 : i32
    %c0_i32_1 = arith.constant 0 : i32
    return %arg0, %c0_i32, %c0_i32_0 : i32, i32, i32
  }
  func.func @transform_1(%arg0: i32) -> (i32, i32) {
    %c0_i32 = arith.constant 0 : i32
    %c0_i32_0 = arith.constant 0 : i32
    %c0_i32_1 = arith.constant 0 : i32
    return %c0_i32, %c0_i32_0 : i32, i32
  }
  func.func @transform_2(%arg0: i32) -> (i32, i32) {
    %c0_i32 = arith.constant 0 : i32
    %c0_i32_0 = arith.constant 0 : i32
    %c0_i32_1 = arith.constant 0 : i32
    return %c0_i32, %c0_i32_0 : i32, i32
  }
  func.func @transform_3(%arg0: i32) -> (i32, i32) {
    %c0_i32 = arith.constant 0 : i32
    %c0_i32_0 = arith.constant 0 : i32
    %c0_i32_1 = arith.constant 0 : i32
    return %c0_i32, %c0_i32_0 : i32, i32
  }
  func.func @transform_4(%arg0: i32) -> (i32, i32) {
    %c0_i32 = arith.constant 0 : i32
    %c0_i32_0 = arith.constant 0 : i32
    %c0_i32_1 = arith.constant 0 : i32
    return %c0_i32, %c0_i32_0 : i32, i32
  }
  func.func @transform_5(%arg0: i32) -> (i32, i32) {
    %c0_i32 = arith.constant 0 : i32
    %c0_i32_0 = arith.constant 0 : i32
    %c0_i32_1 = arith.constant 0 : i32
    return %c0_i32, %c0_i32_0 : i32, i32
  }
  func.func @transform_6(%arg0: i32) -> (i32, i32, i32) {
    %c0_i32 = arith.constant 0 : i32
    %c0_i32_0 = arith.constant 0 : i32
    %c0_i32_1 = arith.constant 0 : i32
    return %arg0, %c0_i32, %c0_i32_0 : i32, i32, i32
  }
}

</mosaic_0001>

<llo_original>
// kernel: double_conv_pallas.1
$region0: #{double_conv_pallas.1}
  #allocation0 [shape = 'u32[]', space=smem, size = 0x4, offset = 0x4, fixed_abs, tag = 'smem constant byte address 0x4 - core index']
  #allocation1 [shape = 'u32[72,128]{1,0:T(1,128)}', space=vmem, size = 0x9000, scoped, tag = 'internal scratch']
  #allocation2 [shape = 'bf16[64,512]{1,0:T(8,128)(2,1)}', space=vmem, size = 0x10000, scoped, tag = 'scratch operand']
  #allocation3 [shape = 'bf16[144,256]{1,0:T(8,128)(2,1)}', space=vmem, size = 0x12000, scoped, tag = 'scratch operand']
  #allocation4 [shape = 'bf16[576,256]{1,0:T(8,128)(2,1)}', space=vmem, size = 0x48000, scoped, tag = 'scratch operand']
  %s0 = inlined_call_operand.vmem [shape: bf16[2,16,512], index: 0, kind: input, shape index: {}]
  %s1 = inlined_call_operand.vmem [shape: bf16[64,144], index: 1, kind: input, shape index: {}]
  %s2 = inlined_call_operand.vmem [shape: f32[64,1], index: 2, kind: input, shape index: {}]
  %s3 = inlined_call_operand.vmem [shape: bf16[64,576], index: 3, kind: input, shape index: {}]
  %s4 = inlined_call_operand.vmem [shape: f32[64,1], index: 4, kind: input, shape index: {}]
  %s5 = inlined_call_operand.vmem [shape: bf16[2,256], index: 5, kind: input, shape index: {}]
  %s6 = inlined_call_operand.vmem [shape: f32[2,64,256], index: 6, kind: output, shape index: {}]
  %s7 = sld [smem:[#allocation0]]
  $region57: #{double_conv_pallas.1} parent=0
    _
  %s9 = ssub.s32 1, %s7
  %s10 = scalar_select 0, %s9, %s7
  loop: start=0, step=1, limit=4
  $region2: #{double_conv_pallas.1} parent=0 // loop_pre_header
    _
  $region3: #{double_conv_pallas.1} parent=0 // loop_header
    %s12 = sphi 0, %s16
    %p13 = scmp.ge.s32.totalorder %s12, 4
    %s22 = sphi 0, %s24
    %s25 = sphi 0, %s22
    %s26 = sphi 0, %s25
    %s42 = sphi 0, %s26
    %s46 = sphi 0, %s46
    %s48 = sphi 0, %s46
    %s49 = sphi 0, %s48
    %s63 = sphi 0, %s49
    %s67 = sphi 0, %s67
    %s69 = sphi 0, %s67
    %s70 = sphi 0, %s69
    %s84 = sphi 0, %s70
    %s88 = sphi 0, %s88
    %s90 = sphi 0, %s88
    %s91 = sphi 0, %s90
    %s105 = sphi 0, %s91
    %s109 = sphi 0, %s109
    %s111 = sphi 0, %s109
    %s112 = sphi 0, %s111
    %s126 = sphi 0, %s112
    %s130 = sphi 0, %s130
    %s132 = sphi 0, %s130
    %s133 = sphi 0, %s132
    %s147 = sphi 0, %s133
    %s153 = sphi 0, %s155
    %s156 = sphi 0, %s153
    %s157 = sphi 0, %s156
    %s173 = sphi 0, %s157
  $region4: #{double_conv_pallas.1} parent=0 // loop_header_branch
    %15 = sbr.rel (%p13) target = $region8
  $region5: #{double_conv_pallas.1} parent=0 // loop_body
    %s17 = ssub.s32 %s12, 1
    %s18 = ssub.s32 %s12, 2
    %s19 = sadd.s32 %s12, 1
    %s20 = ssub.s32 %s12, %s19
    %p21 = scmp.eq.s32.totalorder %s20, 0
    %s23 = sadd.s32 %s22, 1
    %s24 = scalar_select %p21, %s22, %s23
    %p27 = pneg %p21
    %p28 = scmp.eq.s32.totalorder %s12, 1
    %p29 = por %p27, %p28
    %p30 = scmp.ne.s32.totalorder %s22, %s25
    %p31 = scmp.eq.s32.totalorder %s12, 0
    %p32 = por %p30, %p31
    %p33 = scmp.ne.s32.totalorder %s22, %s25
    %p34 = scmp.eq.s32.totalorder %s17, 1
    %p35 = por %p33, %p34
    %p36 = scmp.ne.s32.totalorder %s25, %s26
    %p37 = scmp.eq.s32.totalorder %s17, 0
    %p38 = por %p36, %p37
    %p39 = scmp.ne.s32.totalorder %s25, %s26
    %p40 = scmp.eq.s32.totalorder %s18, 1
    %p41 = por %p39, %p40
    %p43 = scmp.ne.s32.totalorder %s26, %s42
    %p44 = scmp.eq.s32.totalorder %s18, 0
    %p45 = por %p43, %p44
    %s47 = sadd.s32 %s46, 1
    %p50 = scmp.eq.s32.totalorder %s12, 1
    %p51 = scmp.ne.s32.totalorder %s46, %s48
    %p52 = scmp.eq.s32.totalorder %s12, 0
    %p53 = por %p51, %p52
    %p54 = scmp.ne.s32.totalorder %s46, %s48
    %p55 = scmp.eq.s32.totalorder %s17, 1
    %p56 = por %p54, %p55
    %p57 = scmp.ne.s32.totalorder %s48, %s49
    %p58 = scmp.eq.s32.totalorder %s17, 0
    %p59 = por %p57, %p58
    %p60 = scmp.ne.s32.totalorder %s48, %s49
    %p61 = scmp.eq.s32.totalorder %s18, 1
    %p62 = por %p60, %p61
    %p64 = scmp.ne.s32.totalorder %s49, %s63
    %p65 = scmp.eq.s32.totalorder %s18, 0
    %p66 = por %p64, %p65
    %s68 = sadd.s32 %s67, 1
    %p71 = scmp.eq.s32.totalorder %s12, 1
    %p72 = scmp.ne.s32.totalorder %s67, %s69
    %p73 = scmp.eq.s32.totalorder %s12, 0
    %p74 = por %p72, %p73
    %p75 = scmp.ne.s32.totalorder %s67, %s69
    %p76 = scmp.eq.s32.totalorder %s17, 1
    %p77 = por %p75, %p76
    %p78 = scmp.ne.s32.totalorder %s69, %s70
    %p79 = scmp.eq.s32.totalorder %s17, 0
    %p80 = por %p78, %p79
    %p81 = scmp.ne.s32.totalorder %s69, %s70
    %p82 = scmp.eq.s32.totalorder %s18, 1
    %p83 = por %p81, %p82
    %p85 = scmp.ne.s32.totalorder %s70, %s84
    %p86 = scmp.eq.s32.totalorder %s18, 0
    %p87 = por %p85, %p86
    %s89 = sadd.s32 %s88, 1
    %p92 = scmp.eq.s32.totalorder %s12, 1
    %p93 = scmp.ne.s32.totalorder %s88, %s90
    %p94 = scmp.eq.s32.totalorder %s12, 0
    %p95 = por %p93, %p94
    %p96 = scmp.ne.s32.totalorder %s88, %s90
    %p97 = scmp.eq.s32.totalorder %s17, 1
    %p98 = por %p96, %p97
    %p99 = scmp.ne.s32.totalorder %s90, %s91
    %p100 = scmp.eq.s32.totalorder %s17, 0
    %p101 = por %p99, %p100
    %p102 = scmp.ne.s32.totalorder %s90, %s91
    %p103 = scmp.eq.s32.totalorder %s18, 1
    %p104 = por %p102, %p103
    %p106 = scmp.ne.s32.totalorder %s91, %s105
    %p107 = scmp.eq.s32.totalorder %s18, 0
    %p108 = por %p106, %p107
    %s110 = sadd.s32 %s109, 1
    %p113 = scmp.eq.s32.totalorder %s12, 1
    %p114 = scmp.ne.s32.totalorder %s109, %s111
    %p115 = scmp.eq.s32.totalorder %s12, 0
    %p116 = por %p114, %p115
    %p117 = scmp.ne.s32.totalorder %s109, %s111
    %p118 = scmp.eq.s32.totalorder %s17, 1
    %p119 = por %p117, %p118
    %p120 = scmp.ne.s32.totalorder %s111, %s112
    %p121 = scmp.eq.s32.totalorder %s17, 0
    %p122 = por %p120, %p121
    %p123 = scmp.ne.s32.totalorder %s111, %s112
    %p124 = scmp.eq.s32.totalorder %s18, 1
    %p125 = por %p123, %p124
    %p127 = scmp.ne.s32.totalorder %s112, %s126
    %p128 = scmp.eq.s32.totalorder %s18, 0
    %p129 = por %p127, %p128
    %s131 = sadd.s32 %s130, 1
    %p134 = scmp.eq.s32.totalorder %s12, 1
    %p135 = scmp.ne.s32.totalorder %s130, %s132
    %p136 = scmp.eq.s32.totalorder %s12, 0
    %p137 = por %p135, %p136
    %p138 = scmp.ne.s32.totalorder %s130, %s132
    %p139 = scmp.eq.s32.totalorder %s17, 1
    %p140 = por %p138, %p139
    %p141 = scmp.ne.s32.totalorder %s132, %s133
    %p142 = scmp.eq.s32.totalorder %s17, 0
    %p143 = por %p141, %p142
    %p144 = scmp.ne.s32.totalorder %s132, %s133
    %p145 = scmp.eq.s32.totalorder %s18, 1
    %p146 = por %p144, %p145
    %p148 = scmp.ne.s32.totalorder %s133, %s147
    %p149 = scmp.eq.s32.totalorder %s18, 0
    %p150 = por %p148, %p149
    %s151 = ssub.s32 %s12, %s19
    %p152 = scmp.eq.s32.totalorder %s151, 0
    %s154 = sadd.s32 %s153, 1
    %s155 = scalar_select %p152, %s153, %s154
    %p158 = pneg %p152
    %p159 = scmp.eq.s32.totalorder %s12, 1
    %p160 = por %p158, %p159
    %p161 = scmp.ne.s32.totalorder %s153, %s156
    %p162 = scmp.eq.s32.totalorder %s12, 0
    %p163 = por %p161, %p162
    %p164 = scmp.ne.s32.totalorder %s153, %s156
    %p165 = scmp.eq.s32.totalorder %s17, 1
    %p166 = por %p164, %p165
    %p167 = scmp.ne.s32.totalorder %s156, %s157
    %p168 = scmp.eq.s32.totalorder %s17, 0
    %p169 = por %p167, %p168
    %p170 = scmp.ne.s32.totalorder %s156, %s157
    %p171 = scmp.eq.s32.totalorder %s18, 1
    %p172 = por %p170, %p171
    %p174 = scmp.ne.s32.totalorder %s157, %s173
    %p175 = scmp.eq.s32.totalorder %s18, 0
    %p176 = por %p174, %p175
    %p177 = scmp.le.s32.totalorder 1, %s12
    %p178 = scmp.lt.s32.totalorder %s12, 3
    %p179 = pnand %p177, %p178
    %p180 = pneg %p179
    // Predicated region
    $region9: #{double_conv_pallas.1} parent=5 // pred_check
      _
    $region10: #{double_conv_pallas.1} parent=5 // pred_check_branch
      %182 = sbr.rel (%p179) target = $region12
    $region11: #{double_conv_pallas.1} parent=5 // pred_region
      %s183 = ssub.s32 %s12, 1
      // Predicated region
      $region13: #{double_conv_pallas.1} parent=11 // pred_check
        %p184 = pneg %p59
      $region14: #{double_conv_pallas.1} parent=11 // pred_check_branch
        %186 = sbr.rel (%p184) target = $region16
      $region15: #{double_conv_pallas.1} parent=11 // pred_region
        _
      $region16: #{double_conv_pallas.1} parent=11 // pred_fallthru
        _
      // Predicated region
      $region17: #{double_conv_pallas.1} parent=11 // pred_check
        %p187 = pneg %p80
      $region18: #{double_conv_pallas.1} parent=11 // pred_check_branch
        %189 = sbr.rel (%p187) target = $region20
      $region19: #{double_conv_pallas.1} parent=11 // pred_region
        _
      $region20: #{double_conv_pallas.1} parent=11 // pred_fallthru
        _
      // Predicated region
      $region21: #{double_conv_pallas.1} parent=11 // pred_check
        %p190 = pneg %p101
      $region22: #{double_conv_pallas.1} parent=11 // pred_check_branch
        %192 = sbr.rel (%p190) target = $region24
      $region23: #{double_conv_pallas.1} parent=11 // pred_region
        _
      $region24: #{double_conv_pallas.1} parent=11 // pred_fallthru
        _
      // Predicated region
      $region25: #{double_conv_pallas.1} parent=11 // pred_check
        %p193 = pneg %p122
      $region26: #{double_conv_pallas.1} parent=11 // pred_check_branch
        %195 = sbr.rel (%p193) target = $region28
      $region27: #{double_conv_pallas.1} parent=11 // pred_region
        _
      $region28: #{double_conv_pallas.1} parent=11 // pred_fallthru
        _
      // Predicated region
      $region29: #{double_conv_pallas.1} parent=11 // pred_check
        %p196 = pneg %p143
      $region30: #{double_conv_pallas.1} parent=11 // pred_check_branch
        %198 = sbr.rel (%p196) target = $region32
      $region31: #{double_conv_pallas.1} parent=11 // pred_region
        _
      $region32: #{double_conv_pallas.1} parent=11 // pred_fallthru
        _
    $region12: #{double_conv_pallas.1} parent=5 // pred_fallthru
      _
    %p199 = scmp.lt.s32.totalorder %s12, 2
    // Predicated region
    $region33: #{double_conv_pallas.1} parent=5 // pred_check
      %p200 = pneg %p199
    $region34: #{double_conv_pallas.1} parent=5 // pred_check_branch
      %202 = sbr.rel (%p200) target = $region36
    $region35: #{double_conv_pallas.1} parent=5 // pred_region
      // Predicated region
      $region37: #{double_conv_pallas.1} parent=35 // pred_check
        %p203 = pneg %p32
      $region38: #{double_conv_pallas.1} parent=35 // pred_check_branch
        %205 = sbr.rel (%p203) target = $region40
      $region39: #{double_conv_pallas.1} parent=35 // pred_region
        %p206 = scmp.lt.s32.totalorder %s12, 1
        %s207 = scalar_select %p206, %s12, 1
        %s208 = smul.addr %s207, 8
        %s209 = smul.addr %s208, 4
        %s210 = scalar_lea.vmem %s0, %s209
      $region40: #{double_conv_pallas.1} parent=35 // pred_fallthru
        _
    $region36: #{double_conv_pallas.1} parent=5 // pred_fallthru
      _
    %p211 = scmp.le.s32.totalorder 1, %s12
    %p212 = scmp.lt.s32.totalorder %s12, 3
    %p213 = pnand %p211, %p212
    %p214 = pneg %p213
    // Predicated region
    $region41: #{double_conv_pallas.1} parent=5 // pred_check
      _
    $region42: #{double_conv_pallas.1} parent=5 // pred_check_branch
      %216 = sbr.rel (%p213) target = $region44
    $region43: #{double_conv_pallas.1} parent=5 // pred_region
      %s217 = ssub.s32 %s12, 1
      %p218 = scmp.lt.s32.totalorder %s17, 1
      %s219 = scalar_select %p218, %s17, 1
      %s220 = smul.addr %s219, 8
      %s221 = smul.addr %s220, 4
      %s222 = scalar_lea.vmem %s0, %s221
      %p223 = pneg %p38
      %p224 = pneg %p35
      %p225 = pneg %p59
      %p226 = pneg %p56
      %p227 = pneg %p80
      %p228 = pneg %p77
      %p229 = pneg %p101
      %p230 = pneg %p98
      %p231 = pneg %p122
      %p232 = pneg %p119
      %p233 = pneg %p143
      %p234 = pneg %p140
      %p235 = pneg %p169
      %p236 = pneg %p166
      %p237 = scmp.lt.s32.totalorder %s17, 1
      %s238 = scalar_select %p237, %s17, 1
      %s239 = smul.addr %s238, 16
      %s240 = smul.addr %s239, 8
      %s241 = scalar_lea.vmem %s6, %s240
      %p242 = scmp.lt.s32.totalorder %s17, 1
      %s243 = scalar_select %p242, %s17, 1
      %s244 = smul.addr %s243, 8
      %s245 = smul.addr %s244, 4
      %s246 = scalar_lea.vmem %s0, %s245
      %p247 = scmp.lt.s32.totalorder %s17, 1
      %s248 = scalar_select %p247, %s17, 1
      %s249 = smul.addr %s248, 16
      %s250 = smul.addr %s249, 8
      %s251 = scalar_lea.vmem %s6, %s250
      %v253 = vld [vmem:[%s5] sm:$0x3]
      %v254 = vld [vmem:[%s246] sm:$0xff]
      %v255 = vld [vmem:[%s246 + $0x8] sm:$0xf]
      %v256 = vld [vmem:[%s246 + $0x10] sm:$0xff]
      %v257 = vld [vmem:[%s246 + $0x18] sm:$0xf]
      %259 = vst [vmem:[#allocation1] ss:$9 sm:$0xff] %v253
      %v260 = vld [vmem:[#allocation1] sm:$0xff]
      %v261 = vld [vmem:[#allocation1 + $0x9] sm:$0xff]
      %v262 = vpack.i.b16 %v260, %v260
      %v264 = vperm.slane %v262, 0
      %v265 = vpack.i.b16 %v261, %v261
      %v267 = vperm.slane %v265, 0
      %v268 = vunpack.c.l.bf16 %v254
      %v269 = vunpack.c.h.bf16 %v254
      %v270 = vunpack.c.l.bf16 %v255
      %v271 = vunpack.c.l.bf16 %v256
      %v272 = vunpack.c.h.bf16 %v256
      %v273 = vunpack.c.l.bf16 %v257
      %v274 = vunpack.c.l.bf16 %v264
      %v275 = vunpack.c.l.bf16 %v267
      %278 = vrot.lane.b32.xlu0 %v274, 111
      %v279 = vpop.permute.xlu0 %278
      %280 = vrot.lane.b32.xlu0 %v275, 111
      %v281 = vpop.permute.xlu0 %280
      %vm282 = vcmask 908288
      %v283 = vsel %vm282, %v279, %v281
      %v287 = vmul.f32 %v268, %v279
      %v288 = vmul.f32 %v269, %v283
      %v289 = vmul.f32 %v270, %v281
      %v290 = vmul.f32 %v271, %v279
      %v291 = vmul.f32 %v272, %v283
      %v292 = vmul.f32 %v273, %v281
      %v293 = vpack.c.bf16 %v288, %v287
      %v294 = vpack.c.bf16 %v289, %v289
      %v295 = vpack.c.bf16 %v291, %v290
      %v296 = vpack.c.bf16 %v292, %v292
      %301 = vrot.lane.b32.xlu0 %v293, 17
      %v302 = vpop.permute.xlu0 %301
      %303 = vrot.lane.b32.xlu0 %v294, 17
      %v304 = vpop.permute.xlu0 %303
      %305 = vrot.lane.b32.xlu0 %v295, 17
      %v306 = vpop.permute.xlu0 %305
      %307 = vrot.lane.b32.xlu0 %v296, 17
      %v308 = vpop.permute.xlu0 %307
      %v309 = vrot.slane %v302, 4
      %v310 = vrot.slane %v304, 4
      %v311 = vrot.slane %v306, 4
      %v312 = vrot.slane %v308, 4
      %vm313 = vcmask 1043456
      %v314 = vsel %vm313, %v309, %v310
      %vm315 = vcmask 138240
      %v316 = vsel %vm315, %v302, %v314
      %v317 = vsel %vm313, %v311, %v312
      %v318 = vsel %vm315, %v306, %v317
      %321 = vst [vmem:[#allocation3] sm:$0xff] %v316
      %322 = vst [vmem:[#allocation3 + $0x8] sm:$0xff] %v318
      %v323 = vld [vmem:[%s246] sm:$0xff]
      %v324 = vld [vmem:[%s246 + $0x8] sm:$0xf]
      %v325 = vld [vmem:[%s246 + $0x10] sm:$0xff]
      %v326 = vld [vmem:[%s246 + $0x18] sm:$0xf]
      %331 = vrot.lane.b32.xlu0 %v323, 16
      %v332 = vpop.permute.xlu0 %331
      %333 = vrot.lane.b32.xlu0 %v324, 16
      %v334 = vpop.permute.xlu0 %333
      %335 = vrot.lane.b32.xlu0 %v325, 16
      %v336 = vpop.permute.xlu0 %335
      %337 = vrot.lane.b32.xlu0 %v326, 16
      %v338 = vpop.permute.xlu0 %337
      %v339 = vrot.slane %v332, 4
      %v340 = vrot.slane %v334, 4
      %v341 = vrot.slane %v336, 4
      %v342 = vrot.slane %v338, 4
      %v343 = vsel %vm313, %v339, %v340
      %vm344 = vcmask 130048
      %v345 = vsel %vm344, %v332, %v343
      %v346 = vsel %vm313, %v341, %v342
      %v347 = vsel %vm344, %v336, %v346
      %350 = vst [vmem:[#allocation3 + $0x10] sm:$0xff] %v345
      %351 = vst [vmem:[#allocation3 + $0x18] sm:$0xff] %v347
      %v352 = vld [vmem:[%s246] sm:$0xff]
      %v353 = vld [vmem:[%s246 + $0x8] sm:$0xf]
      %v354 = vld [vmem:[%s246 + $0x10] sm:$0xff]
      %v355 = vld [vmem:[%s246 + $0x18] sm:$0xf]
      %356 = vst [vmem:[#allocation1] ss:$9 sm:$0xff] %v253
      %v357 = vld [vmem:[#allocation1] sm:$0xff]
      %v358 = vld [vmem:[#allocation1 + $0x9] sm:$0xff]
      %v359 = vshrl.u32 %v357, 16
      %v360 = vpack.i.b16 %v359, %v359
      %v362 = vperm.slane %v360, 0
      %v363 = vshrl.u32 %v358, 16
      %v364 = vpack.i.b16 %v363, %v363
      %v366 = vperm.slane %v364, 0
      %v367 = vunpack.c.l.bf16 %v352
      %v368 = vunpack.c.h.bf16 %v352
      %v369 = vunpack.c.l.bf16 %v353
      %v370 = vunpack.c.l.bf16 %v354
      %v371 = vunpack.c.h.bf16 %v354
      %v372 = vunpack.c.l.bf16 %v355
      %v373 = vunpack.c.l.bf16 %v362
      %v374 = vunpack.c.l.bf16 %v366
      %377 = vrot.lane.b32.xlu0 %v373, 113
      %v378 = vpop.permute.xlu0 %377
      %379 = vrot.lane.b32.xlu0 %v374, 113
      %v380 = vpop.permute.xlu0 %379
      %vm381 = vcmask 924672
      %v382 = vsel %vm381, %v378, %v380
      %v386 = vmul.f32 %v367, %v378
      %v387 = vmul.f32 %v368, %v382
      %v388 = vmul.f32 %v369, %v380
      %v389 = vmul.f32 %v370, %v378
      %v390 = vmul.f32 %v371, %v382
      %v391 = vmul.f32 %v372, %v380
      %v392 = vpack.c.bf16 %v387, %v386
      %v393 = vpack.c.bf16 %v388, %v388
      %v394 = vpack.c.bf16 %v390, %v389
      %v395 = vpack.c.bf16 %v391, %v391
      %400 = vrot.lane.b32.xlu0 %v392, 15
      %v401 = vpop.permute.xlu0 %400
      %402 = vrot.lane.b32.xlu0 %v393, 15
      %v403 = vpop.permute.xlu0 %402
      %404 = vrot.lane.b32.xlu0 %v394, 15
      %v405 = vpop.permute.xlu0 %404
      %406 = vrot.lane.b32.xlu0 %v395, 15
      %v407 = vpop.permute.xlu0 %406
      %v408 = vrot.slane %v401, 4
      %v409 = vrot.slane %v403, 4
      %v410 = vrot.slane %v405, 4
      %v411 = vrot.slane %v407, 4
      %v412 = vsel %vm313, %v408, %v409
      %vm413 = vcmask 121856
      %v414 = vsel %vm413, %v401, %v412
      %v415 = vsel %vm313, %v410, %v411
      %v416 = vsel %vm413, %v405, %v415
      %419 = vst [vmem:[#allocation3 + $0x20] sm:$0xff] %v414
      %420 = vst [vmem:[#allocation3 + $0x28] sm:$0xff] %v416
      %v421 = vld [vmem:[%s246] sm:$0xff]
      %v422 = vld [vmem:[%s246 + $0x8] sm:$0xf]
      %v423 = vld [vmem:[%s246 + $0x10] sm:$0xff]
      %v424 = vld [vmem:[%s246 + $0x18] sm:$0xf]
      %v425 = vunpack.c.l.bf16 %v421
      %v426 = vunpack.c.h.bf16 %v421
      %v427 = vunpack.c.l.bf16 %v422
      %v428 = vunpack.c.l.bf16 %v423
      %v429 = vunpack.c.h.bf16 %v423
      %v430 = vunpack.c.l.bf16 %v424
      %431 = vrot.lane.b32.xlu0 %v274, 127
      %v432 = vpop.permute.xlu0 %431
      %433 = vrot.lane.b32.xlu0 %v275, 127
      %v434 = vpop.permute.xlu0 %433
      %vm435 = vcmask 1039360
      %v436 = vsel %vm435, %v432, %v434
      %v440 = vmul.f32 %v425, %v432
      %v441 = vmul.f32 %v426, %v436
      %v442 = vmul.f32 %v427, %v434
      %v443 = vmul.f32 %v428, %v432
      %v444 = vmul.f32 %v429, %v436
      %v445 = vmul.f32 %v430, %v434
      %v446 = vpack.c.bf16 %v441, %v440
      %v447 = vpack.c.bf16 %v442, %v442
      %v448 = vpack.c.bf16 %v444, %v443
      %v449 = vpack.c.bf16 %v445, %v445
      %454 = vrot.lane.b32.xlu0 %v446, 1
      %v455 = vpop.permute.xlu0 %454
      %456 = vrot.lane.b32.xlu0 %v447, 1
      %v457 = vpop.permute.xlu0 %456
      %458 = vrot.lane.b32.xlu0 %v448, 1
      %v459 = vpop.permute.xlu0 %458
      %460 = vrot.lane.b32.xlu0 %v449, 1
      %v461 = vpop.permute.xlu0 %460
      %v462 = vrot.slane %v455, 4
      %v463 = vrot.slane %v457, 4
      %v464 = vrot.slane %v459, 4
      %v465 = vrot.slane %v461, 4
      %v466 = vsel %vm313, %v462, %v463
      %vm467 = vcmask 7168
      %v468 = vsel %vm467, %v455, %v466
      %v469 = vsel %vm313, %v464, %v465
      %v470 = vsel %vm467, %v459, %v469
      %473 = vst [vmem:[#allocation3 + $0x30] sm:$0xff] %v468
      %474 = vst [vmem:[#allocation3 + $0x38] sm:$0xff] %v470
      %v475 = vld [vmem:[%s246 + $0x4] sm:$0xff]
      %v476 = vld [vmem:[%s246 + $0x14] sm:$0xff]
      %477 = vst [vmem:[#allocation3 + $0x40] sm:$0xff] %v475
      %478 = vst [vmem:[#allocation3 + $0x48] sm:$0xff] %v476
      %v479 = vld [vmem:[%s246 + $0x4] sm:$0xff]
      %v480 = vld [vmem:[%s246 + $0xc] sm:$0xf]
      %v481 = vld [vmem:[%s246 + $0x14] sm:$0xff]
      %v482 = vld [vmem:[%s246 + $0x1c] sm:$0xf]
      %v483 = vunpack.c.l.bf16 %v479
      %v484 = vunpack.c.h.bf16 %v479
      %v485 = vunpack.c.l.bf16 %v480
      %v486 = vunpack.c.l.bf16 %v481
      %v487 = vunpack.c.h.bf16 %v481
      %v488 = vunpack.c.l.bf16 %v482
      %489 = vrot.lane.b32.xlu0 %v373, 1
      %v490 = vpop.permute.xlu0 %489
      %491 = vrot.lane.b32.xlu0 %v374, 1
      %v492 = vpop.permute.xlu0 %491
      %vm493 = vcmask 7168
      %v494 = vsel %vm493, %v490, %v492
      %v498 = vmul.f32 %v483, %v490
      %v499 = vmul.f32 %v484, %v494
      %v500 = vmul.f32 %v485, %v492
      %v501 = vmul.f32 %v486, %v490
      %v502 = vmul.f32 %v487, %v494
      %v503 = vmul.f32 %v488, %v492
      %v504 = vpack.c.bf16 %v499, %v498
      %v505 = vpack.c.bf16 %v500, %v500
      %v506 = vpack.c.bf16 %v502, %v501
      %v507 = vpack.c.bf16 %v503, %v503
      %512 = vrot.lane.b32.xlu0 %v504, 127
      %v513 = vpop.permute.xlu0 %512
      %514 = vrot.lane.b32.xlu0 %v505, 127
      %v515 = vpop.permute.xlu0 %514
      %516 = vrot.lane.b32.xlu0 %v506, 127
      %v517 = vpop.permute.xlu0 %516
      %518 = vrot.lane.b32.xlu0 %v507, 127
      %v519 = vpop.permute.xlu0 %518
      %v520 = vrot.slane %v513, 4
      %v521 = vrot.slane %v515, 4
      %v522 = vrot.slane %v517, 4
      %v523 = vrot.slane %v519, 4
      %v524 = vsel %vm313, %v520, %v521
      %vm525 = vcmask 1039360
      %v526 = vsel %vm525, %v513, %v524
      %v527 = vsel %vm313, %v522, %v523
      %v528 = vsel %vm525, %v517, %v527
      %531 = vst [vmem:[#allocation3 + $0x50] sm:$0xff] %v526
      %532 = vst [vmem:[#allocation3 + $0x58] sm:$0xff] %v528
      %v533 = vld [vmem:[%s246 + $0x4] sm:$0xff]
      %v534 = vld [vmem:[%s246 + $0xc] sm:$0xf]
      %v535 = vld [vmem:[%s246 + $0x14] sm:$0xff]
      %v536 = vld [vmem:[%s246 + $0x1c] sm:$0xf]
      %v537 = vunpack.c.l.bf16 %v533
      %v538 = vunpack.c.h.bf16 %v533
      %v539 = vunpack.c.l.bf16 %v534
      %v540 = vunpack.c.l.bf16 %v535
      %v541 = vunpack.c.h.bf16 %v535
      %v542 = vunpack.c.l.bf16 %v536
      %543 = vrot.lane.b32.xlu0 %v274, 15
      %v544 = vpop.permute.xlu0 %543
      %545 = vrot.lane.b32.xlu0 %v275, 15
      %v546 = vpop.permute.xlu0 %545
      %vm547 = vcmask 121856
      %v548 = vsel %vm547, %v544, %v546
      %v552 = vmul.f32 %v537, %v544
      %v553 = vmul.f32 %v538, %v548
      %v554 = vmul.f32 %v539, %v546
      %v555 = vmul.f32 %v540, %v544
      %v556 = vmul.f32 %v541, %v548
      %v557 = vmul.f32 %v542, %v546
      %v558 = vpack.c.bf16 %v553, %v552
      %v559 = vpack.c.bf16 %v554, %v554
      %v560 = vpack.c.bf16 %v556, %v555
      %v561 = vpack.c.bf16 %v557, %v557
      %566 = vrot.lane.b32.xlu0 %v558, 113
      %v567 = vpop.permute.xlu0 %566
      %568 = vrot.lane.b32.xlu0 %v559, 113
      %v569 = vpop.permute.xlu0 %568
      %570 = vrot.lane.b32.xlu0 %v560, 113
      %v571 = vpop.permute.xlu0 %570
      %572 = vrot.lane.b32.xlu0 %v561, 113
      %v573 = vpop.permute.xlu0 %572
      %v574 = vrot.slane %v567, 4
      %v575 = vrot.slane %v569, 4
      %v576 = vrot.slane %v571, 4
      %v577 = vrot.slane %v573, 4
      %v578 = vsel %vm313, %v574, %v575
      %vm579 = vcmask 924672
      %v580 = vsel %vm579, %v567, %v578
      %v581 = vsel %vm313, %v576, %v577
      %v582 = vsel %vm579, %v571, %v581
      %585 = vst [vmem:[#allocation3 + $0x60] sm:$0xff] %v580
      %586 = vst [vmem:[#allocation3 + $0x68] sm:$0xff] %v582
      %v587 = vld [vmem:[%s246 + $0x4] sm:$0xff]
      %v588 = vld [vmem:[%s246 + $0xc] sm:$0xf]
      %v589 = vld [vmem:[%s246 + $0x14] sm:$0xff]
      %v590 = vld [vmem:[%s246 + $0x1c] sm:$0xf]
      %595 = vrot.lane.b32.xlu0 %v587, 112
      %v596 = vpop.permute.xlu0 %595
      %597 = vrot.lane.b32.xlu0 %v588, 112
      %v598 = vpop.permute.xlu0 %597
      %599 = vrot.lane.b32.xlu0 %v589, 112
      %v600 = vpop.permute.xlu0 %599
      %601 = vrot.lane.b32.xlu0 %v590, 112
      %v602 = vpop.permute.xlu0 %601
      %v603 = vrot.slane %v596, 4
      %v604 = vrot.slane %v598, 4
      %v605 = vrot.slane %v600, 4
      %v606 = vrot.slane %v602, 4
      %v607 = vsel %vm313, %v603, %v604
      %vm608 = vcmask 916480
      %v609 = vsel %vm608, %v596, %v607
      %v610 = vsel %vm313, %v605, %v606
      %v611 = vsel %vm608, %v600, %v610
      %614 = vst [vmem:[#allocation3 + $0x70] sm:$0xff] %v609
      %615 = vst [vmem:[#allocation3 + $0x78] sm:$0xff] %v611
      %v616 = vld [vmem:[%s246 + $0x4] sm:$0xff]
      %v617 = vld [vmem:[%s246 + $0xc] sm:$0xf]
      %v618 = vld [vmem:[%s246 + $0x14] sm:$0xff]
      %v619 = vld [vmem:[%s246 + $0x1c] sm:$0xf]
      %v620 = vunpack.c.l.bf16 %v616
      %v621 = vunpack.c.h.bf16 %v616
      %v622 = vunpack.c.l.bf16 %v617
      %v623 = vunpack.c.l.bf16 %v618
      %v624 = vunpack.c.h.bf16 %v618
      %v625 = vunpack.c.l.bf16 %v619
      %626 = vrot.lane.b32.xlu0 %v373, 17
      %v627 = vpop.permute.xlu0 %626
      %628 = vrot.lane.b32.xlu0 %v374, 17
      %v629 = vpop.permute.xlu0 %628
      %vm630 = vcmask 138240
      %v631 = vsel %vm630, %v627, %v629
      %v635 = vmul.f32 %v620, %v627
      %v636 = vmul.f32 %v621, %v631
      %v637 = vmul.f32 %v622, %v629
      %v638 = vmul.f32 %v623, %v627
      %v639 = vmul.f32 %v624, %v631
      %v640 = vmul.f32 %v625, %v629
      %v641 = vpack.c.bf16 %v636, %v635
      %v642 = vpack.c.bf16 %v637, %v637
      %v643 = vpack.c.bf16 %v639, %v638
      %v644 = vpack.c.bf16 %v640, %v640
      %649 = vrot.lane.b32.xlu0 %v641, 111
      %v650 = vpop.permute.xlu0 %649
      %651 = vrot.lane.b32.xlu0 %v642, 111
      %v652 = vpop.permute.xlu0 %651
      %653 = vrot.lane.b32.xlu0 %v643, 111
      %v654 = vpop.permute.xlu0 %653
      %655 = vrot.lane.b32.xlu0 %v644, 111
      %v656 = vpop.permute.xlu0 %655
      %v657 = vrot.slane %v650, 4
      %v658 = vrot.slane %v652, 4
      %v659 = vrot.slane %v654, 4
      %v660 = vrot.slane %v656, 4
      %v661 = vsel %vm313, %v657, %v658
      %vm662 = vcmask 908288
      %v663 = vsel %vm662, %v650, %v661
      %v664 = vsel %vm313, %v659, %v660
      %v665 = vsel %vm662, %v654, %v664
      %668 = vst [vmem:[#allocation3 + $0x80] sm:$0xff] %v663
      %669 = vst [vmem:[#allocation3 + $0x88] sm:$0xff] %v665
      %v670 = vld [vmem:[%s1] sm:$0xff]
      %v671 = vld [vmem:[%s1 + $0x8] sm:$0xff]
      %v672 = vld [vmem:[%s1 + $0x10] sm:$0xff]
      %v673 = vld [vmem:[%s1 + $0x18] sm:$0xff]
      %v674 = vld [vmem:[%s1 + $0x20] sm:$0xff]
      %v675 = vld [vmem:[%s1 + $0x28] sm:$0xff]
      %v676 = vld [vmem:[%s1 + $0x30] sm:$0xff]
      %v677 = vld [vmem:[%s1 + $0x38] sm:$0xff]
      %v678 = vld [vmem:[#allocation3] sm:$0xff]
      %v679 = vld [vmem:[#allocation3 + $0x8] sm:$0xff]
      %v680 = vld [vmem:[#allocation3 + $0x10] sm:$0xff]
      %v681 = vld [vmem:[#allocation3 + $0x18] sm:$0xff]
      %v682 = vld [vmem:[#allocation3 + $0x20] sm:$0xff]
      %v683 = vld [vmem:[#allocation3 + $0x28] sm:$0xff]
      %v684 = vld [vmem:[#allocation3 + $0x30] sm:$0xff]
      %v685 = vld [vmem:[#allocation3 + $0x38] sm:$0xff]
      %v686 = vld [vmem:[#allocation3 + $0x40] sm:$0xff]
      %v687 = vld [vmem:[#allocation3 + $0x48] sm:$0xff]
      %v688 = vld [vmem:[#allocation3 + $0x50] sm:$0xff]
      %v689 = vld [vmem:[#allocation3 + $0x58] sm:$0xff]
      %v690 = vld [vmem:[#allocation3 + $0x60] sm:$0xff]
      %v691 = vld [vmem:[#allocation3 + $0x68] sm:$0xff]
      %v692 = vld [vmem:[#allocation3 + $0x70] sm:$0xff]
      %v693 = vld [vmem:[#allocation3 + $0x78] sm:$0xff]
      %v694 = vld [vmem:[#allocation3 + $0x80] sm:$0xff]
      %v695 = vld [vmem:[#allocation3 + $0x88] sm:$0xff]
      %v696 = vld [vmem:[%s2] sm:$0xff]
      %v697 = vld [vmem:[%s2 + $0x8] sm:$0xff]
      %v698 = vld [vmem:[%s2 + $0x10] sm:$0xff]
      %v699 = vld [vmem:[%s2 + $0x18] sm:$0xff]
      %v700 = vld [vmem:[%s2 + $0x20] sm:$0xff]
      %v701 = vld [vmem:[%s2 + $0x28] sm:$0xff]
      %v702 = vld [vmem:[%s2 + $0x30] sm:$0xff]
      %v703 = vld [vmem:[%s2 + $0x38] sm:$0xff]
      %705 = vset.pattern.permute.xlu0 0
      %706 = vperm.xlu0 %705, %v696
      %v707 = vpop.permute.xlu0 %706
      %710 = vset.pattern.permute.xlu0 0
      %711 = vperm.xlu0 %710, %v697
      %v712 = vpop.permute.xlu0 %711
      %715 = vset.pattern.permute.xlu0 0
      %716 = vperm.xlu0 %715, %v698
      %v717 = vpop.permute.xlu0 %716
      %720 = vset.pattern.permute.xlu0 0
      %721 = vperm.xlu0 %720, %v699
      %v722 = vpop.permute.xlu0 %721
      %725 = vset.pattern.permute.xlu0 0
      %726 = vperm.xlu0 %725, %v700
      %v727 = vpop.permute.xlu0 %726
      %730 = vset.pattern.permute.xlu0 0
      %731 = vperm.xlu0 %730, %v701
      %v732 = vpop.permute.xlu0 %731
      %735 = vset.pattern.permute.xlu0 0
      %736 = vperm.xlu0 %735, %v702
      %v737 = vpop.permute.xlu0 %736
      %740 = vset.pattern.permute.xlu0 0
      %741 = vperm.xlu0 %740, %v703
      %v742 = vpop.permute.xlu0 %741
      %v752 = vunpack.c.l.b16 %v670
      %v753 = vunpack.c.h.b16 %v670
      %v754 = vunpack.c.l.b16 %v671
      %v755 = vunpack.c.h.b16 %v671
      %v756 = vunpack.c.l.b16 %v672
      %v757 = vunpack.c.h.b16 %v672
      %v758 = vunpack.c.l.b16 %v673
      %v759 = vunpack.c.h.b16 %v673
      %v760 = vunpack.c.l.b16 %v674
      %v761 = vunpack.c.h.b16 %v674
      %v762 = vunpack.c.l.b16 %v675
      %v763 = vunpack.c.h.b16 %v675
      %v764 = vunpack.c.l.b16 %v676
      %v765 = vunpack.c.h.b16 %v676
      %v766 = vunpack.c.l.b16 %v677
      %v767 = vunpack.c.h.b16 %v677
      %v768 = vpack.c.b16 %v754, %v752
      %v769 = vpack.c.b16 %v755, %v753
      %v770 = vpack.c.b16 %v758, %v756
      %v771 = vpack.c.b16 %v759, %v757
      %v772 = vpack.c.b16 %v762, %v760
      %v773 = vpack.c.b16 %v763, %v761
      %v774 = vpack.c.b16 %v766, %v764
      %v775 = vpack.c.b16 %v767, %v765
      %v798 = vunpack.c.l.b16 %v678
      %v799 = vunpack.c.h.b16 %v678
      %v800 = vunpack.c.l.b16 %v679
      %v801 = vunpack.c.h.b16 %v679
      %v802 = vunpack.c.l.b16 %v680
      %v803 = vunpack.c.h.b16 %v680
      %v804 = vunpack.c.l.b16 %v681
      %v805 = vunpack.c.h.b16 %v681
      %v806 = vunpack.c.l.b16 %v682
      %v807 = vunpack.c.h.b16 %v682
      %v808 = vunpack.c.l.b16 %v683
      %v809 = vunpack.c.h.b16 %v683
      %v810 = vunpack.c.l.b16 %v684
      %v811 = vunpack.c.h.b16 %v684
      %v812 = vunpack.c.l.b16 %v685
      %v813 = vunpack.c.h.b16 %v685
      %v814 = vunpack.c.l.b16 %v686
      %v815 = vunpack.c.h.b16 %v686
      %v816 = vunpack.c.l.b16 %v687
      %v817 = vunpack.c.h.b16 %v687
      %v818 = vunpack.c.l.b16 %v688
      %v819 = vunpack.c.h.b16 %v688
      %v820 = vunpack.c.l.b16 %v689
      %v821 = vunpack.c.h.b16 %v689
      %v822 = vunpack.c.l.b16 %v690
      %v823 = vunpack.c.h.b16 %v690
      %v824 = vunpack.c.l.b16 %v691
      %v825 = vunpack.c.h.b16 %v691
      %v826 = vunpack.c.l.b16 %v692
      %v827 = vunpack.c.h.b16 %v692
      %v828 = vunpack.c.l.b16 %v693
      %v829 = vunpack.c.h.b16 %v693
      %v830 = vunpack.c.l.b16 %v694
      %v831 = vunpack.c.h.b16 %v694
      %v832 = vunpack.c.l.b16 %v695
      %v833 = vunpack.c.h.b16 %v695
      %v834 = vpack.c.b16 %v800, %v798
      %v835 = vpack.c.b16 %v801, %v799
      %v836 = vpack.c.b16 %v804, %v802
      %v837 = vpack.c.b16 %v805, %v803
      %v838 = vpack.c.b16 %v808, %v806
      %v839 = vpack.c.b16 %v809, %v807
      %v840 = vpack.c.b16 %v812, %v810
      %v841 = vpack.c.b16 %v813, %v811
      %v842 = vpack.c.b16 %v816, %v814
      %v843 = vpack.c.b16 %v817, %v815
      %v844 = vpack.c.b16 %v820, %v818
      %v845 = vpack.c.b16 %v821, %v819
      %v846 = vpack.c.b16 %v824, %v822
      %v847 = vpack.c.b16 %v825, %v823
      %v848 = vpack.c.b16 %v828, %v826
      %v849 = vpack.c.b16 %v829, %v827
      %v850 = vpack.c.b16 %v832, %v830
      %v851 = vpack.c.b16 %v833, %v831
      %vm870 = vcmask 130048
      %v872 = vsel %vm870, %v769, 0
      %v875 = vsel %vm870, %v771, 0
      %v878 = vsel %vm870, %v773, 0
      %v881 = vsel %vm870, %v775, 0
      %883 = vmatpush.bf16.msra.mxu0 %v848
      %884 = vmatpush.bf16.msra.mxu0 %v846
      %885 = vmatpush.bf16.msra.mxu0 %v844
      %886 = vmatpush.bf16.msra.mxu0 %v842
      %887 = vmatpush.bf16.msra.mxu0 %v840
      %888 = vmatpush.bf16.msra.mxu0 %v838
      %889 = vmatpush.bf16.msra.mxu0 %v836
      %890 = vmatpush.bf16.msra.mxu0 %v834
      %891 = vmatmul.bf16.gmra.mxu0 %v768
      %v892 = vpop.f32.mrf.mxu0
      %v893 = vadd.f32 %v707, %v892
      %v894 = vpop.f32.mrf.mxu0
      %v895 = vadd.f32 %v712, %v894
      %896 = vmatmul.bf16.gmra.mxu0 %v770
      %v897 = vpop.f32.mrf.mxu0
      %v898 = vadd.f32 %v717, %v897
      %v899 = vpop.f32.mrf.mxu0
      %v900 = vadd.f32 %v722, %v899
      %901 = vmatmul.bf16.gmra.mxu0 %v772
      %v902 = vpop.f32.mrf.mxu0
      %v903 = vadd.f32 %v727, %v902
      %v904 = vpop.f32.mrf.mxu0
      %v905 = vadd.f32 %v732, %v904
      %906 = vmatmul.bf16.gmra.mxu0 %v774
      %v907 = vpop.f32.mrf.mxu0
      %v908 = vadd.f32 %v737, %v907
      %v909 = vpop.f32.mrf.mxu0
      %v910 = vadd.f32 %v742, %v909
      %911 = vdwg.mxu0
      %912 = vmatpush.bf16.msra.mxu0 0
      %913 = vmatpush.bf16.msra.mxu0 0
      %914 = vmatpush.bf16.msra.mxu0 0
      %915 = vmatpush.bf16.msra.mxu0 0
      %916 = vmatpush.bf16.msra.mxu0 0
      %917 = vmatpush.bf16.msra.mxu0 0
      %918 = vmatpush.bf16.msra.mxu0 0
      %919 = vmatpush.bf16.msra.mxu0 %v850
      %920 = vmatmul.bf16.gmra.mxu0 %v872
      %v921 = vpop.f32.mrf.mxu0
      %v922 = vadd.f32 %v893, %v921
      %v923 = vpop.f32.mrf.mxu0
      %v924 = vadd.f32 %v895, %v923
      %925 = vmatmul.bf16.gmra.mxu0 %v875
      %v926 = vpop.f32.mrf.mxu0
      %v927 = vadd.f32 %v898, %v926
      %v928 = vpop.f32.mrf.mxu0
      %v929 = vadd.f32 %v900, %v928
      %930 = vmatmul.bf16.gmra.mxu0 %v878
      %v931 = vpop.f32.mrf.mxu0
      %v932 = vadd.f32 %v903, %v931
      %v933 = vpop.f32.mrf.mxu0
      %v934 = vadd.f32 %v905, %v933
      %935 = vmatmul.bf16.gmra.mxu0 %v881
      %v936 = vpop.f32.mrf.mxu0
      %v937 = vadd.f32 %v908, %v936
      %v938 = vpop.f32.mrf.mxu0
      %v939 = vadd.f32 %v910, %v938
      %940 = vdwg.mxu0
      %941 = vmatpush.bf16.msra.mxu0 %v849
      %942 = vmatpush.bf16.msra.mxu0 %v847
      %943 = vmatpush.bf16.msra.mxu0 %v845
      %944 = vmatpush.bf16.msra.mxu0 %v843
      %945 = vmatpush.bf16.msra.mxu0 %v841
      %946 = vmatpush.bf16.msra.mxu0 %v839
      %947 = vmatpush.bf16.msra.mxu0 %v837
      %948 = vmatpush.bf16.msra.mxu0 %v835
      %949 = vmatmul.bf16.gmra.mxu0 %v768
      %v950 = vpop.f32.mrf.mxu0
      %v951 = vadd.f32 %v707, %v950
      %v952 = vpop.f32.mrf.mxu0
      %v953 = vadd.f32 %v712, %v952
      %954 = vmatmul.bf16.gmra.mxu0 %v770
      %v955 = vpop.f32.mrf.mxu0
      %v956 = vadd.f32 %v717, %v955
      %v957 = vpop.f32.mrf.mxu0
      %v958 = vadd.f32 %v722, %v957
      %959 = vmatmul.bf16.gmra.mxu0 %v772
      %v960 = vpop.f32.mrf.mxu0
      %v961 = vadd.f32 %v727, %v960
      %v962 = vpop.f32.mrf.mxu0
      %v963 = vadd.f32 %v732, %v962
      %964 = vmatmul.bf16.gmra.mxu0 %v774
      %v965 = vpop.f32.mrf.mxu0
      %v966 = vadd.f32 %v737, %v965
      %v967 = vpop.f32.mrf.mxu0
      %v968 = vadd.f32 %v742, %v967
      %969 = vdwg.mxu0
      %970 = vmatpush.bf16.msra.mxu0 0
      %971 = vmatpush.bf16.msra.mxu0 0
      %972 = vmatpush.bf16.msra.mxu0 0
      %973 = vmatpush.bf16.msra.mxu0 0
      %974 = vmatpush.bf16.msra.mxu0 0
      %975 = vmatpush.bf16.msra.mxu0 0
      %976 = vmatpush.bf16.msra.mxu0 0
      %977 = vmatpush.bf16.msra.mxu0 %v851
      %978 = vmatmul.bf16.gmra.mxu0 %v872
      %v979 = vpop.f32.mrf.mxu0
      %v980 = vadd.f32 %v951, %v979
      %v981 = vpop.f32.mrf.mxu0
      %v982 = vadd.f32 %v953, %v981
      %983 = vmatmul.bf16.gmra.mxu0 %v875
      %v984 = vpop.f32.mrf.mxu0
      %v985 = vadd.f32 %v956, %v984
      %v986 = vpop.f32.mrf.mxu0
      %v987 = vadd.f32 %v958, %v986
      %988 = vmatmul.bf16.gmra.mxu0 %v878
      %v989 = vpop.f32.mrf.mxu0
      %v990 = vadd.f32 %v961, %v989
      %v991 = vpop.f32.mrf.mxu0
      %v992 = vadd.f32 %v963, %v991
      %993 = vmatmul.bf16.gmra.mxu0 %v881
      %v994 = vpop.f32.mrf.mxu0
      %v995 = vadd.f32 %v966, %v994
      %v996 = vpop.f32.mrf.mxu0
      %v997 = vadd.f32 %v968, %v996
      %998 = vdwg.mxu0
      %v999 = vmax.f32 %v922, 0.0
      %v1000 = vmax.f32 %v980, 0.0
      %v1001 = vmax.f32 %v924, 0.0
      %v1002 = vmax.f32 %v982, 0.0
      %v1003 = vmax.f32 %v927, 0.0
      %v1004 = vmax.f32 %v985, 0.0
      %v1005 = vmax.f32 %v929, 0.0
      %v1006 = vmax.f32 %v987, 0.0
      %v1007 = vmax.f32 %v932, 0.0
      %v1008 = vmax.f32 %v990, 0.0
      %v1009 = vmax.f32 %v934, 0.0
      %v1010 = vmax.f32 %v992, 0.0
      %v1011 = vmax.f32 %v937, 0.0
      %v1012 = vmax.f32 %v995, 0.0
      %v1013 = vmax.f32 %v939, 0.0
      %v1014 = vmax.f32 %v997, 0.0
      %v1015 = vpack.c.bf16 %v1000, %v999
      %v1016 = vpack.c.bf16 %v1002, %v1001
      %v1017 = vpack.c.bf16 %v1004, %v1003
      %v1018 = vpack.c.bf16 %v1006, %v1005
      %v1019 = vpack.c.bf16 %v1008, %v1007
      %v1020 = vpack.c.bf16 %v1010, %v1009
      %v1021 = vpack.c.bf16 %v1012, %v1011
      %v1022 = vpack.c.bf16 %v1014, %v1013
      %1023 = vst [vmem:[#allocation2] sm:$0xf] 0
      %1024 = vst [vmem:[#allocation2 + $0x10] sm:$0xf] 0
      %1025 = vst [vmem:[#allocation2 + $0x20] sm:$0xf] 0
      %1026 = vst [vmem:[#allocation2 + $0x30] sm:$0xf] 0
      %1027 = vst [vmem:[#allocation2 + $0x40] sm:$0xf] 0
      %1028 = vst [vmem:[#allocation2 + $0x50] sm:$0xf] 0
      %1029 = vst [vmem:[#allocation2 + $0x60] sm:$0xf] 0
      %1030 = vst [vmem:[#allocation2 + $0x70] sm:$0xf] 0
      %1031 = vst [vmem:[#allocation2 + $0xc] sm:$0xf] 0
      %1032 = vst [vmem:[#allocation2 + $0x1c] sm:$0xf] 0
      %1033 = vst [vmem:[#allocation2 + $0x2c] sm:$0xf] 0
      %1034 = vst [vmem:[#allocation2 + $0x3c] sm:$0xf] 0
      %1035 = vst [vmem:[#allocation2 + $0x4c] sm:$0xf] 0
      %1036 = vst [vmem:[#allocation2 + $0x5c] sm:$0xf] 0
      %1037 = vst [vmem:[#allocation2 + $0x6c] sm:$0xf] 0
      %1038 = vst [vmem:[#allocation2 + $0x7c] sm:$0xf] 0
      %1039 = vst [vmem:[#allocation2 + $0x4] sm:$0xff] %v1015
      %1040 = vst [vmem:[#allocation2 + $0x14] sm:$0xff] %v1016
      %1041 = vst [vmem:[#allocation2 + $0x24] sm:$0xff] %v1017
      %1042 = vst [vmem:[#allocation2 + $0x34] sm:$0xff] %v1018
      %1043 = vst [vmem:[#allocation2 + $0x44] sm:$0xff] %v1019
      %1044 = vst [vmem:[#allocation2 + $0x54] sm:$0xff] %v1020
      %1045 = vst [vmem:[#allocation2 + $0x64] sm:$0xff] %v1021
      %1046 = vst [vmem:[#allocation2 + $0x74] sm:$0xff] %v1022
      %v1047 = vld [vmem:[#allocation2] sm:$0xff]
      %v1048 = vld [vmem:[#allocation2 + $0x8] sm:$0xf]
      %v1049 = vld [vmem:[#allocation2 + $0x10] sm:$0xff]
      %v1050 = vld [vmem:[#allocation2 + $0x18] sm:$0xf]
      %v1051 = vld [vmem:[#allocation2 + $0x20] sm:$0xff]
      %v1052 = vld [vmem:[#allocation2 + $0x28] sm:$0xf]
      %v1053 = vld [vmem:[#allocation2 + $0x30] sm:$0xff]
      %v1054 = vld [vmem:[#allocation2 + $0x38] sm:$0xf]
      %v1055 = vld [vmem:[#allocation2 + $0x40] sm:$0xff]
      %v1056 = vld [vmem:[#allocation2 + $0x48] sm:$0xf]
      %v1057 = vld [vmem:[#allocation2 + $0x50] sm:$0xff]
      %v1058 = vld [vmem:[#allocation2 + $0x58] sm:$0xf]
      %v1059 = vld [vmem:[#allocation2 + $0x60] sm:$0xff]
      %v1060 = vld [vmem:[#allocation2 + $0x68] sm:$0xf]
      %v1061 = vld [vmem:[#allocation2 + $0x70] sm:$0xff]
      %v1062 = vld [vmem:[#allocation2 + $0x78] sm:$0xf]
      %1063 = vst [vmem:[#allocation1] ss:$9 sm:$0xff] %v253
      %v1064 = vld [vmem:[#allocation1] sm:$0xff]
      %v1065 = vld [vmem:[#allocation1 + $0x9] sm:$0xff]
      %v1066 = vpack.i.b16 %v1064, %v1064
      %v1068 = vperm.slane %v1066, 0
      %v1069 = vpack.i.b16 %v1065, %v1065
      %v1071 = vperm.slane %v1069, 0
      %v1072 = vunpack.c.l.bf16 %v1047
      %v1073 = vunpack.c.h.bf16 %v1047
      %v1074 = vunpack.c.l.bf16 %v1048
      %v1075 = vunpack.c.l.bf16 %v1049
      %v1076 = vunpack.c.h.bf16 %v1049
      %v1077 = vunpack.c.l.bf16 %v1050
      %v1078 = vunpack.c.l.bf16 %v1051
      %v1079 = vunpack.c.h.bf16 %v1051
      %v1080 = vunpack.c.l.bf16 %v1052
      %v1081 = vunpack.c.l.bf16 %v1053
      %v1082 = vunpack.c.h.bf16 %v1053
      %v1083 = vunpack.c.l.bf16 %v1054
      %v1084 = vunpack.c.l.bf16 %v1055
      %v1085 = vunpack.c.h.bf16 %v1055
      %v1086 = vunpack.c.l.bf16 %v1056
      %v1087 = vunpack.c.l.bf16 %v1057
      %v1088 = vunpack.c.h.bf16 %v1057
      %v1089 = vunpack.c.l.bf16 %v1058
      %v1090 = vunpack.c.l.bf16 %v1059
      %v1091 = vunpack.c.h.bf16 %v1059
      %v1092 = vunpack.c.l.bf16 %v1060
      %v1093 = vunpack.c.l.bf16 %v1061
      %v1094 = vunpack.c.h.bf16 %v1061
      %v1095 = vunpack.c.l.bf16 %v1062
      %v1096 = vunpack.c.l.bf16 %v1068
      %v1097 = vunpack.c.l.bf16 %v1071
      %1100 = vrot.lane.b32.xlu0 %v1096, 111
      %v1101 = vpop.permute.xlu0 %1100
      %1102 = vrot.lane.b32.xlu0 %v1097, 111
      %v1103 = vpop.permute.xlu0 %1102
      %v1104 = vsel %vm282, %v1101, %v1103
      %v1108 = vmul.f32 %v1072, %v1101
      %v1109 = vmul.f32 %v1073, %v1104
      %v1110 = vmul.f32 %v1074, %v1103
      %v1111 = vmul.f32 %v1075, %v1101
      %v1112 = vmul.f32 %v1076, %v1104
      %v1113 = vmul.f32 %v1077, %v1103
      %v1114 = vmul.f32 %v1078, %v1101
      %v1115 = vmul.f32 %v1079, %v1104
      %v1116 = vmul.f32 %v1080, %v1103
      %v1117 = vmul.f32 %v1081, %v1101
      %v1118 = vmul.f32 %v1082, %v1104
      %v1119 = vmul.f32 %v1083, %v1103
      %v1120 = vmul.f32 %v1084, %v1101
      %v1121 = vmul.f32 %v1085, %v1104
      %v1122 = vmul.f32 %v1086, %v1103
      %v1123 = vmul.f32 %v1087, %v1101
      %v1124 = vmul.f32 %v1088, %v1104
      %v1125 = vmul.f32 %v1089, %v1103
      %v1126 = vmul.f32 %v1090, %v1101
      %v1127 = vmul.f32 %v1091, %v1104
      %v1128 = vmul.f32 %v1092, %v1103
      %v1129 = vmul.f32 %v1093, %v1101
      %v1130 = vmul.f32 %v1094, %v1104
      %v1131 = vmul.f32 %v1095, %v1103
      %v1132 = vpack.c.bf16 %v1109, %v1108
      %v1133 = vpack.c.bf16 %v1110, %v1110
      %v1134 = vpack.c.bf16 %v1112, %v1111
      %v1135 = vpack.c.bf16 %v1113, %v1113
      %v1136 = vpack.c.bf16 %v1115, %v1114
      %v1137 = vpack.c.bf16 %v1116, %v1116
      %v1138 = vpack.c.bf16 %v1118, %v1117
      %v1139 = vpack.c.bf16 %v1119, %v1119
      %v1140 = vpack.c.bf16 %v1121, %v1120
      %v1141 = vpack.c.bf16 %v1122, %v1122
      %v1142 = vpack.c.bf16 %v1124, %v1123
      %v1143 = vpack.c.bf16 %v1125, %v1125
      %v1144 = vpack.c.bf16 %v1127, %v1126
      %v1145 = vpack.c.bf16 %v1128, %v1128
      %v1146 = vpack.c.bf16 %v1130, %v1129
      %v1147 = vpack.c.bf16 %v1131, %v1131
      %1164 = vrot.lane.b32.xlu0 %v1132, 17
      %v1165 = vpop.permute.xlu0 %1164
      %1166 = vrot.lane.b32.xlu0 %v1133, 17
      %v1167 = vpop.permute.xlu0 %1166
      %1168 = vrot.lane.b32.xlu0 %v1134, 17
      %v1169 = vpop.permute.xlu0 %1168
      %1170 = vrot.lane.b32.xlu0 %v1135, 17
      %v1171 = vpop.permute.xlu0 %1170
      %1172 = vrot.lane.b32.xlu0 %v1136, 17
      %v1173 = vpop.permute.xlu0 %1172
      %1174 = vrot.lane.b32.xlu0 %v1137, 17
      %v1175 = vpop.permute.xlu0 %1174
      %1176 = vrot.lane.b32.xlu0 %v1138, 17
      %v1177 = vpop.permute.xlu0 %1176
      %1178 = vrot.lane.b32.xlu0 %v1139, 17
      %v1179 = vpop.permute.xlu0 %1178
      %1180 = vrot.lane.b32.xlu0 %v1140, 17
      %v1181 = vpop.permute.xlu0 %1180
      %1182 = vrot.lane.b32.xlu0 %v1141, 17
      %v1183 = vpop.permute.xlu0 %1182
      %1184 = vrot.lane.b32.xlu0 %v1142, 17
      %v1185 = vpop.permute.xlu0 %1184
      %1186 = vrot.lane.b32.xlu0 %v1143, 17
      %v1187 = vpop.permute.xlu0 %1186
      %1188 = vrot.lane.b32.xlu0 %v1144, 17
      %v1189 = vpop.permute.xlu0 %1188
      %1190 = vrot.lane.b32.xlu0 %v1145, 17
      %v1191 = vpop.permute.xlu0 %1190
      %1192 = vrot.lane.b32.xlu0 %v1146, 17
      %v1193 = vpop.permute.xlu0 %1192
      %1194 = vrot.lane.b32.xlu0 %v1147, 17
      %v1195 = vpop.permute.xlu0 %1194
      %v1196 = vrot.slane %v1165, 4
      %v1197 = vrot.slane %v1167, 4
      %v1198 = vrot.slane %v1169, 4
      %v1199 = vrot.slane %v1171, 4
      %v1200 = vrot.slane %v1173, 4
      %v1201 = vrot.slane %v1175, 4
      %v1202 = vrot.slane %v1177, 4
      %v1203 = vrot.slane %v1179, 4
      %v1204 = vrot.slane %v1181, 4
      %v1205 = vrot.slane %v1183, 4
      %v1206 = vrot.slane %v1185, 4
      %v1207 = vrot.slane %v1187, 4
      %v1208 = vrot.slane %v1189, 4
      %v1209 = vrot.slane %v1191, 4
      %v1210 = vrot.slane %v1193, 4
      %v1211 = vrot.slane %v1195, 4
      %v1212 = vsel %vm313, %v1196, %v1197
      %v1213 = vsel %vm315, %v1165, %v1212
      %v1214 = vsel %vm313, %v1198, %v1199
      %v1215 = vsel %vm315, %v1169, %v1214
      %v1216 = vsel %vm313, %v1200, %v1201
      %v1217 = vsel %vm315, %v1173, %v1216
      %v1218 = vsel %vm313, %v1202, %v1203
      %v1219 = vsel %vm315, %v1177, %v1218
      %v1220 = vsel %vm313, %v1204, %v1205
      %v1221 = vsel %vm315, %v1181, %v1220
      %v1222 = vsel %vm313, %v1206, %v1207
      %v1223 = vsel %vm315, %v1185, %v1222
      %v1224 = vsel %vm313, %v1208, %v1209
      %v1225 = vsel %vm315, %v1189, %v1224
      %v1226 = vsel %vm313, %v1210, %v1211
      %v1227 = vsel %vm315, %v1193, %v1226
      %1236 = vst [vmem:[#allocation4] sm:$0xff] %v1213
      %1237 = vst [vmem:[#allocation4 + $0x8] sm:$0xff] %v1215
      %1238 = vst [vmem:[#allocation4 + $0x10] sm:$0xff] %v1217
      %1239 = vst [vmem:[#allocation4 + $0x18] sm:$0xff] %v1219
      %1240 = vst [vmem:[#allocation4 + $0x20] sm:$0xff] %v1221
      %1241 = vst [vmem:[#allocation4 + $0x28] sm:$0xff] %v1223
      %1242 = vst [vmem:[#allocation4 + $0x30] sm:$0xff] %v1225
      %1243 = vst [vmem:[#allocation4 + $0x38] sm:$0xff] %v1227
      %v1244 = vld [vmem:[#allocation2] sm:$0xff]
      %v1245 = vld [vmem:[#allocation2 + $0x8] sm:$0xf]
      %v1246 = vld [vmem:[#allocation2 + $0x10] sm:$0xff]
      %v1247 = vld [vmem:[#allocation2 + $0x18] sm:$0xf]
      %v1248 = vld [vmem:[#allocation2 + $0x20] sm:$0xff]
      %v1249 = vld [vmem:[#allocation2 + $0x28] sm:$0xf]
      %v1250 = vld [vmem:[#allocation2 + $0x30] sm:$0xff]
      %v1251 = vld [vmem:[#allocation2 + $0x38] sm:$0xf]
      %v1252 = vld [vmem:[#allocation2 + $0x40] sm:$0xff]
      %v1253 = vld [vmem:[#allocation2 + $0x48] sm:$0xf]
      %v1254 = vld [vmem:[#allocation2 + $0x50] sm:$0xff]
      %v1255 = vld [vmem:[#allocation2 + $0x58] sm:$0xf]
      %v1256 = vld [vmem:[#allocation2 + $0x60] sm:$0xff]
      %v1257 = vld [vmem:[#allocation2 + $0x68] sm:$0xf]
      %v1258 = vld [vmem:[#allocation2 + $0x70] sm:$0xff]
      %v1259 = vld [vmem:[#allocation2 + $0x78] sm:$0xf]
      %1276 = vrot.lane.b32.xlu0 %v1244, 16
      %v1277 = vpop.permute.xlu0 %1276
      %1278 = vrot.lane.b32.xlu0 %v1245, 16
      %v1279 = vpop.permute.xlu0 %1278
      %1280 = vrot.lane.b32.xlu0 %v1246, 16
      %v1281 = vpop.permute.xlu0 %1280
      %1282 = vrot.lane.b32.xlu0 %v1247, 16
      %v1283 = vpop.permute.xlu0 %1282
      %1284 = vrot.lane.b32.xlu0 %v1248, 16
      %v1285 = vpop.permute.xlu0 %1284
      %1286 = vrot.lane.b32.xlu0 %v1249, 16
      %v1287 = vpop.permute.xlu0 %1286
      %1288 = vrot.lane.b32.xlu0 %v1250, 16
      %v1289 = vpop.permute.xlu0 %1288
      %1290 = vrot.lane.b32.xlu0 %v1251, 16
      %v1291 = vpop.permute.xlu0 %1290
      %1292 = vrot.lane.b32.xlu0 %v1252, 16
      %v1293 = vpop.permute.xlu0 %1292
      %1294 = vrot.lane.b32.xlu0 %v1253, 16
      %v1295 = vpop.permute.xlu0 %1294
      %1296 = vrot.lane.b32.xlu0 %v1254, 16
      %v1297 = vpop.permute.xlu0 %1296
      %1298 = vrot.lane.b32.xlu0 %v1255, 16
      %v1299 = vpop.permute.xlu0 %1298
      %1300 = vrot.lane.b32.xlu0 %v1256, 16
      %v1301 = vpop.permute.xlu0 %1300
      %1302 = vrot.lane.b32.xlu0 %v1257, 16
      %v1303 = vpop.permute.xlu0 %1302
      %1304 = vrot.lane.b32.xlu0 %v1258, 16
      %v1305 = vpop.permute.xlu0 %1304
      %1306 = vrot.lane.b32.xlu0 %v1259, 16
      %v1307 = vpop.permute.xlu0 %1306
      %v1308 = vrot.slane %v1277, 4
      %v1309 = vrot.slane %v1279, 4
      %v1310 = vrot.slane %v1281, 4
      %v1311 = vrot.slane %v1283, 4
      %v1312 = vrot.slane %v1285, 4
      %v1313 = vrot.slane %v1287, 4
      %v1314 = vrot.slane %v1289, 4
      %v1315 = vrot.slane %v1291, 4
      %v1316 = vrot.slane %v1293, 4
      %v1317 = vrot.slane %v1295, 4
      %v1318 = vrot.slane %v1297, 4
      %v1319 = vrot.slane %v1299, 4
      %v1320 = vrot.slane %v1301, 4
      %v1321 = vrot.slane %v1303, 4
      %v1322 = vrot.slane %v1305, 4
      %v1323 = vrot.slane %v1307, 4
      %v1324 = vsel %vm313, %v1308, %v1309
      %v1325 = vsel %vm344, %v1277, %v1324
      %v1326 = vsel %vm313, %v1310, %v1311
      %v1327 = vsel %vm344, %v1281, %v1326
      %v1328 = vsel %vm313, %v1312, %v1313
      %v1329 = vsel %vm344, %v1285, %v1328
      %v1330 = vsel %vm313, %v1314, %v1315
      %v1331 = vsel %vm344, %v1289, %v1330
      %v1332 = vsel %vm313, %v1316, %v1317
      %v1333 = vsel %vm344, %v1293, %v1332
      %v1334 = vsel %vm313, %v1318, %v1319
      %v1335 = vsel %vm344, %v1297, %v1334
      %v1336 = vsel %vm313, %v1320, %v1321
      %v1337 = vsel %vm344, %v1301, %v1336
      %v1338 = vsel %vm313, %v1322, %v1323
      %v1339 = vsel %vm344, %v1305, %v1338
      %1348 = vst [vmem:[#allocation4 + $0x40] sm:$0xff] %v1325
      %1349 = vst [vmem:[#allocation4 + $0x48] sm:$0xff] %v1327
      %1350 = vst [vmem:[#allocation4 + $0x50] sm:$0xff] %v1329
      %1351 = vst [vmem:[#allocation4 + $0x58] sm:$0xff] %v1331
      %1352 = vst [vmem:[#allocation4 + $0x60] sm:$0xff] %v1333
      %1353 = vst [vmem:[#allocation4 + $0x68] sm:$0xff] %v1335
      %1354 = vst [vmem:[#allocation4 + $0x70] sm:$0xff] %v1337
      %1355 = vst [vmem:[#allocation4 + $0x78] sm:$0xff] %v1339
      %v1356 = vld [vmem:[#allocation2] sm:$0xff]
      %v1357 = vld [vmem:[#allocation2 + $0x8] sm:$0xf]
      %v1358 = vld [vmem:[#allocation2 + $0x10] sm:$0xff]
      %v1359 = vld [vmem:[#allocation2 + $0x18] sm:$0xf]
      %v1360 = vld [vmem:[#allocation2 + $0x20] sm:$0xff]
      %v1361 = vld [vmem:[#allocation2 + $0x28] sm:$0xf]
      %v1362 = vld [vmem:[#allocation2 + $0x30] sm:$0xff]
      %v1363 = vld [vmem:[#allocation2 + $0x38] sm:$0xf]
      %v1364 = vld [vmem:[#allocation2 + $0x40] sm:$0xff]
      %v1365 = vld [vmem:[#allocation2 + $0x48] sm:$0xf]
      %v1366 = vld [vmem:[#allocation2 + $0x50] sm:$0xff]
      %v1367 = vld [vmem:[#allocation2 + $0x58] sm:$0xf]
      %v1368 = vld [vmem:[#allocation2 + $0x60] sm:$0xff]
      %v1369 = vld [vmem:[#allocation2 + $0x68] sm:$0xf]
      %v1370 = vld [vmem:[#allocation2 + $0x70] sm:$0xff]
      %v1371 = vld [vmem:[#allocation2 + $0x78] sm:$0xf]
      %1372 = vst [vmem:[#allocation1] ss:$9 sm:$0xff] %v253
      %v1373 = vld [vmem:[#allocation1] sm:$0xff]
      %v1374 = vld [vmem:[#allocation1 + $0x9] sm:$0xff]
      %v1375 = vshrl.u32 %v1373, 16
      %v1376 = vpack.i.b16 %v1375, %v1375
      %v1378 = vperm.slane %v1376, 0
      %v1379 = vshrl.u32 %v1374, 16
      %v1380 = vpack.i.b16 %v1379, %v1379
      %v1382 = vperm.slane %v1380, 0
      %v1383 = vunpack.c.l.bf16 %v1356
      %v1384 = vunpack.c.h.bf16 %v1356
      %v1385 = vunpack.c.l.bf16 %v1357
      %v1386 = vunpack.c.l.bf16 %v1358
      %v1387 = vunpack.c.h.bf16 %v1358
      %v1388 = vunpack.c.l.bf16 %v1359
      %v1389 = vunpack.c.l.bf16 %v1360
      %v1390 = vunpack.c.h.bf16 %v1360
      %v1391 = vunpack.c.l.bf16 %v1361
      %v1392 = vunpack.c.l.bf16 %v1362
      %v1393 = vunpack.c.h.bf16 %v1362
      %v1394 = vunpack.c.l.bf16 %v1363
      %v1395 = vunpack.c.l.bf16 %v1364
      %v1396 = vunpack.c.h.bf16 %v1364
      %v1397 = vunpack.c.l.bf16 %v1365
      %v1398 = vunpack.c.l.bf16 %v1366
      %v1399 = vunpack.c.h.bf16 %v1366
      %v1400 = vunpack.c.l.bf16 %v1367
      %v1401 = vunpack.c.l.bf16 %v1368
      %v1402 = vunpack.c.h.bf16 %v1368
      %v1403 = vunpack.c.l.bf16 %v1369
      %v1404 = vunpack.c.l.bf16 %v1370
      %v1405 = vunpack.c.h.bf16 %v1370
      %v1406 = vunpack.c.l.bf16 %v1371
      %v1407 = vunpack.c.l.bf16 %v1378
      %v1408 = vunpack.c.l.bf16 %v1382
      %1411 = vrot.lane.b32.xlu0 %v1407, 113
      %v1412 = vpop.permute.xlu0 %1411
      %1413 = vrot.lane.b32.xlu0 %v1408, 113
      %v1414 = vpop.permute.xlu0 %1413
      %v1415 = vsel %vm381, %v1412, %v1414
      %v1419 = vmul.f32 %v1383, %v1412
      %v1420 = vmul.f32 %v1384, %v1415
      %v1421 = vmul.f32 %v1385, %v1414
      %v1422 = vmul.f32 %v1386, %v1412
      %v1423 = vmul.f32 %v1387, %v1415
      %v1424 = vmul.f32 %v1388, %v1414
      %v1425 = vmul.f32 %v1389, %v1412
      %v1426 = vmul.f32 %v1390, %v1415
      %v1427 = vmul.f32 %v1391, %v1414
      %v1428 = vmul.f32 %v1392, %v1412
      %v1429 = vmul.f32 %v1393, %v1415
      %v1430 = vmul.f32 %v1394, %v1414
      %v1431 = vmul.f32 %v1395, %v1412
      %v1432 = vmul.f32 %v1396, %v1415
      %v1433 = vmul.f32 %v1397, %v1414
      %v1434 = vmul.f32 %v1398, %v1412
      %v1435 = vmul.f32 %v1399, %v1415
      %v1436 = vmul.f32 %v1400, %v1414
      %v1437 = vmul.f32 %v1401, %v1412
      %v1438 = vmul.f32 %v1402, %v1415
      %v1439 = vmul.f32 %v1403, %v1414
      %v1440 = vmul.f32 %v1404, %v1412
      %v1441 = vmul.f32 %v1405, %v1415
      %v1442 = vmul.f32 %v1406, %v1414
      %v1443 = vpack.c.bf16 %v1420, %v1419
      %v1444 = vpack.c.bf16 %v1421, %v1421
      %v1445 = vpack.c.bf16 %v1423, %v1422
      %v1446 = vpack.c.bf16 %v1424, %v1424
      %v1447 = vpack.c.bf16 %v1426, %v1425
      %v1448 = vpack.c.bf16 %v1427, %v1427
      %v1449 = vpack.c.bf16 %v1429, %v1428
      %v1450 = vpack.c.bf16 %v1430, %v1430
      %v1451 = vpack.c.bf16 %v1432, %v1431
      %v1452 = vpack.c.bf16 %v1433, %v1433
      %v1453 = vpack.c.bf16 %v1435, %v1434
      %v1454 = vpack.c.bf16 %v1436, %v1436
      %v1455 = vpack.c.bf16 %v1438, %v1437
      %v1456 = vpack.c.bf16 %v1439, %v1439
      %v1457 = vpack.c.bf16 %v1441, %v1440
      %v1458 = vpack.c.bf16 %v1442, %v1442
      %1475 = vrot.lane.b32.xlu0 %v1443, 15
      %v1476 = vpop.permute.xlu0 %1475
      %1477 = vrot.lane.b32.xlu0 %v1444, 15
      %v1478 = vpop.permute.xlu0 %1477
      %1479 = vrot.lane.b32.xlu0 %v1445, 15
      %v1480 = vpop.permute.xlu0 %1479
      %1481 = vrot.lane.b32.xlu0 %v1446, 15
      %v1482 = vpop.permute.xlu0 %1481
      %1483 = vrot.lane.b32.xlu0 %v1447, 15
      %v1484 = vpop.permute.xlu0 %1483
      %1485 = vrot.lane.b32.xlu0 %v1448, 15
      %v1486 = vpop.permute.xlu0 %1485
      %1487 = vrot.lane.b32.xlu0 %v1449, 15
      %v1488 = vpop.permute.xlu0 %1487
      %1489 = vrot.lane.b32.xlu0 %v1450, 15
      %v1490 = vpop.permute.xlu0 %1489
      %1491 = vrot.lane.b32.xlu0 %v1451, 15
      %v1492 = vpop.permute.xlu0 %1491
      %1493 = vrot.lane.b32.xlu0 %v1452, 15
      %v1494 = vpop.permute.xlu0 %1493
      %1495 = vrot.lane.b32.xlu0 %v1453, 15
      %v1496 = vpop.permute.xlu0 %1495
      %1497 = vrot.lane.b32.xlu0 %v1454, 15
      %v1498 = vpop.permute.xlu0 %1497
      %1499 = vrot.lane.b32.xlu0 %v1455, 15
      %v1500 = vpop.permute.xlu0 %1499
      %1501 = vrot.lane.b32.xlu0 %v1456, 15
      %v1502 = vpop.permute.xlu0 %1501
      %1503 = vrot.lane.b32.xlu0 %v1457, 15
      %v1504 = vpop.permute.xlu0 %1503
      %1505 = vrot.lane.b32.xlu0 %v1458, 15
      %v1506 = vpop.permute.xlu0 %1505
      %v1507 = vrot.slane %v1476, 4
      %v1508 = vrot.slane %v1478, 4
      %v1509 = vrot.slane %v1480, 4
      %v1510 = vrot.slane %v1482, 4
      %v1511 = vrot.slane %v1484, 4
      %v1512 = vrot.slane %v1486, 4
      %v1513 = vrot.slane %v1488, 4
      %v1514 = vrot.slane %v1490, 4
      %v1515 = vrot.slane %v1492, 4
      %v1516 = vrot.slane %v1494, 4
      %v1517 = vrot.slane %v1496, 4
      %v1518 = vrot.slane %v1498, 4
      %v1519 = vrot.slane %v1500, 4
      %v1520 = vrot.slane %v1502, 4
      %v1521 = vrot.slane %v1504, 4
      %v1522 = vrot.slane %v1506, 4
      %v1523 = vsel %vm313, %v1507, %v1508
      %v1524 = vsel %vm413, %v1476, %v1523
      %v1525 = vsel %vm313, %v1509, %v1510
      %v1526 = vsel %vm413, %v1480, %v1525
      %v1527 = vsel %vm313, %v1511, %v1512
      %v1528 = vsel %vm413, %v1484, %v1527
      %v1529 = vsel %vm313, %v1513, %v1514
      %v1530 = vsel %vm413, %v1488, %v1529
      %v1531 = vsel %vm313, %v1515, %v1516
      %v1532 = vsel %vm413, %v1492, %v1531
      %v1533 = vsel %vm313, %v1517, %v1518
      %v1534 = vsel %vm413, %v1496, %v1533
      %v1535 = vsel %vm313, %v1519, %v1520
      %v1536 = vsel %vm413, %v1500, %v1535
      %v1537 = vsel %vm313, %v1521, %v1522
      %v1538 = vsel %vm413, %v1504, %v1537
      %1547 = vst [vmem:[#allocation4 + $0x80] sm:$0xff] %v1524
      %1548 = vst [vmem:[#allocation4 + $0x88] sm:$0xff] %v1526
      %1549 = vst [vmem:[#allocation4 + $0x90] sm:$0xff] %v1528
      %1550 = vst [vmem:[#allocation4 + $0x98] sm:$0xff] %v1530
      %1551 = vst [vmem:[#allocation4 + $0xa0] sm:$0xff] %v1532
      %1552 = vst [vmem:[#allocation4 + $0xa8] sm:$0xff] %v1534
      %1553 = vst [vmem:[#allocation4 + $0xb0] sm:$0xff] %v1536
      %1554 = vst [vmem:[#allocation4 + $0xb8] sm:$0xff] %v1538
      %v1555 = vld [vmem:[#allocation2] sm:$0xff]
      %v1556 = vld [vmem:[#allocation2 + $0x8] sm:$0xf]
      %v1557 = vld [vmem:[#allocation2 + $0x10] sm:$0xff]
      %v1558 = vld [vmem:[#allocation2 + $0x18] sm:$0xf]
      %v1559 = vld [vmem:[#allocation2 + $0x20] sm:$0xff]
      %v1560 = vld [vmem:[#allocation2 + $0x28] sm:$0xf]
      %v1561 = vld [vmem:[#allocation2 + $0x30] sm:$0xff]
      %v1562 = vld [vmem:[#allocation2 + $0x38] sm:$0xf]
      %v1563 = vld [vmem:[#allocation2 + $0x40] sm:$0xff]
      %v1564 = vld [vmem:[#allocation2 + $0x48] sm:$0xf]
      %v1565 = vld [vmem:[#allocation2 + $0x50] sm:$0xff]
      %v1566 = vld [vmem:[#allocation2 + $0x58] sm:$0xf]
      %v1567 = vld [vmem:[#allocation2 + $0x60] sm:$0xff]
      %v1568 = vld [vmem:[#allocation2 + $0x68] sm:$0xf]
      %v1569 = vld [vmem:[#allocation2 + $0x70] sm:$0xff]
      %v1570 = vld [vmem:[#allocation2 + $0x78] sm:$0xf]
      %v1571 = vunpack.c.l.bf16 %v1555
      %v1572 = vunpack.c.h.bf16 %v1555
      %v1573 = vunpack.c.l.bf16 %v1556
      %v1574 = vunpack.c.l.bf16 %v1557
      %v1575 = vunpack.c.h.bf16 %v1557
      %v1576 = vunpack.c.l.bf16 %v1558
      %v1577 = vunpack.c.l.bf16 %v1559
      %v1578 = vunpack.c.h.bf16 %v1559
      %v1579 = vunpack.c.l.bf16 %v1560
      %v1580 = vunpack.c.l.bf16 %v1561
      %v1581 = vunpack.c.h.bf16 %v1561
      %v1582 = vunpack.c.l.bf16 %v1562
      %v1583 = vunpack.c.l.bf16 %v1563
      %v1584 = vunpack.c.h.bf16 %v1563
      %v1585 = vunpack.c.l.bf16 %v1564
      %v1586 = vunpack.c.l.bf16 %v1565
      %v1587 = vunpack.c.h.bf16 %v1565
      %v1588 = vunpack.c.l.bf16 %v1566
      %v1589 = vunpack.c.l.bf16 %v1567
      %v1590 = vunpack.c.h.bf16 %v1567
      %v1591 = vunpack.c.l.bf16 %v1568
      %v1592 = vunpack.c.l.bf16 %v1569
      %v1593 = vunpack.c.h.bf16 %v1569
      %v1594 = vunpack.c.l.bf16 %v1570
      %1595 = vrot.lane.b32.xlu0 %v1096, 127
      %v1596 = vpop.permute.xlu0 %1595
      %1597 = vrot.lane.b32.xlu0 %v1097, 127
      %v1598 = vpop.permute.xlu0 %1597
      %v1599 = vsel %vm435, %v1596, %v1598
      %v1603 = vmul.f32 %v1571, %v1596
      %v1604 = vmul.f32 %v1572, %v1599
      %v1605 = vmul.f32 %v1573, %v1598
      %v1606 = vmul.f32 %v1574, %v1596
      %v1607 = vmul.f32 %v1575, %v1599
      %v1608 = vmul.f32 %v1576, %v1598
      %v1609 = vmul.f32 %v1577, %v1596
      %v1610 = vmul.f32 %v1578, %v1599
      %v1611 = vmul.f32 %v1579, %v1598
      %v1612 = vmul.f32 %v1580, %v1596
      %v1613 = vmul.f32 %v1581, %v1599
      %v1614 = vmul.f32 %v1582, %v1598
      %v1615 = vmul.f32 %v1583, %v1596
      %v1616 = vmul.f32 %v1584, %v1599
      %v1617 = vmul.f32 %v1585, %v1598
      %v1618 = vmul.f32 %v1586, %v1596
      %v1619 = vmul.f32 %v1587, %v1599
      %v1620 = vmul.f32 %v1588, %v1598
      %v1621 = vmul.f32 %v1589, %v1596
      %v1622 = vmul.f32 %v1590, %v1599
      %v1623 = vmul.f32 %v1591, %v1598
      %v1624 = vmul.f32 %v1592, %v1596
      %v1625 = vmul.f32 %v1593, %v1599
      %v1626 = vmul.f32 %v1594, %v1598
      %v1627 = vpack.c.bf16 %v1604, %v1603
      %v1628 = vpack.c.bf16 %v1605, %v1605
      %v1629 = vpack.c.bf16 %v1607, %v1606
      %v1630 = vpack.c.bf16 %v1608, %v1608
      %v1631 = vpack.c.bf16 %v1610, %v1609
      %v1632 = vpack.c.bf16 %v1611, %v1611
      %v1633 = vpack.c.bf16 %v1613, %v1612
      %v1634 = vpack.c.bf16 %v1614, %v1614
      %v1635 = vpack.c.bf16 %v1616, %v1615
      %v1636 = vpack.c.bf16 %v1617, %v1617
      %v1637 = vpack.c.bf16 %v1619, %v1618
      %v1638 = vpack.c.bf16 %v1620, %v1620
      %v1639 = vpack.c.bf16 %v1622, %v1621
      %v1640 = vpack.c.bf16 %v1623, %v1623
      %v1641 = vpack.c.bf16 %v1625, %v1624
      %v1642 = vpack.c.bf16 %v1626, %v1626
      %1659 = vrot.lane.b32.xlu0 %v1627, 1
      %v1660 = vpop.permute.xlu0 %1659
      %1661 = vrot.lane.b32.xlu0 %v1628, 1
      %v1662 = vpop.permute.xlu0 %1661
      %1663 = vrot.lane.b32.xlu0 %v1629, 1
      %v1664 = vpop.permute.xlu0 %1663
      %1665 = vrot.lane.b32.xlu0 %v1630, 1
      %v1666 = vpop.permute.xlu0 %1665
      %1667 = vrot.lane.b32.xlu0 %v1631, 1
      %v1668 = vpop.permute.xlu0 %1667
      %1669 = vrot.lane.b32.xlu0 %v1632, 1
      %v1670 = vpop.permute.xlu0 %1669
      %1671 = vrot.lane.b32.xlu0 %v1633, 1
      %v1672 = vpop.permute.xlu0 %1671
      %1673 = vrot.lane.b32.xlu0 %v1634, 1
      %v1674 = vpop.permute.xlu0 %1673
      %1675 = vrot.lane.b32.xlu0 %v1635, 1
      %v1676 = vpop.permute.xlu0 %1675
      %1677 = vrot.lane.b32.xlu0 %v1636, 1
      %v1678 = vpop.permute.xlu0 %1677
      %1679 = vrot.lane.b32.xlu0 %v1637, 1
      %v1680 = vpop.permute.xlu0 %1679
      %1681 = vrot.lane.b32.xlu0 %v1638, 1
      %v1682 = vpop.permute.xlu0 %1681
      %1683 = vrot.lane.b32.xlu0 %v1639, 1
      %v1684 = vpop.permute.xlu0 %1683
      %1685 = vrot.lane.b32.xlu0 %v1640, 1
      %v1686 = vpop.permute.xlu0 %1685
      %1687 = vrot.lane.b32.xlu0 %v1641, 1
      %v1688 = vpop.permute.xlu0 %1687
      %1689 = vrot.lane.b32.xlu0 %v1642, 1
      %v1690 = vpop.permute.xlu0 %1689
      %v1691 = vrot.slane %v1660, 4
      %v1692 = vrot.slane %v1662, 4
      %v1693 = vrot.slane %v1664, 4
      %v1694 = vrot.slane %v1666, 4
      %v1695 = vrot.slane %v1668, 4
      %v1696 = vrot.slane %v1670, 4
      %v1697 = vrot.slane %v1672, 4
      %v1698 = vrot.slane %v1674, 4
      %v1699 = vrot.slane %v1676, 4
      %v1700 = vrot.slane %v1678, 4
      %v1701 = vrot.slane %v1680, 4
      %v1702 = vrot.slane %v1682, 4
      %v1703 = vrot.slane %v1684, 4
      %v1704 = vrot.slane %v1686, 4
      %v1705 = vrot.slane %v1688, 4
      %v1706 = vrot.slane %v1690, 4
      %v1707 = vsel %vm313, %v1691, %v1692
      %v1708 = vsel %vm467, %v1660, %v1707
      %v1709 = vsel %vm313, %v1693, %v1694
      %v1710 = vsel %vm467, %v1664, %v1709
      %v1711 = vsel %vm313, %v1695, %v1696
      %v1712 = vsel %vm467, %v1668, %v1711
      %v1713 = vsel %vm313, %v1697, %v1698
      %v1714 = vsel %vm467, %v1672, %v1713
      %v1715 = vsel %vm313, %v1699, %v1700
      %v1716 = vsel %vm467, %v1676, %v1715
      %v1717 = vsel %vm313, %v1701, %v1702
      %v1718 = vsel %vm467, %v1680, %v1717
      %v1719 = vsel %vm313, %v1703, %v1704
      %v1720 = vsel %vm467, %v1684, %v1719
      %v1721 = vsel %vm313, %v1705, %v1706
      %v1722 = vsel %vm467, %v1688, %v1721
      %1731 = vst [vmem:[#allocation4 + $0xc0] sm:$0xff] %v1708
      %1732 = vst [vmem:[#allocation4 + $0xc8] sm:$0xff] %v1710
      %1733 = vst [vmem:[#allocation4 + $0xd0] sm:$0xff] %v1712
      %1734 = vst [vmem:[#allocation4 + $0xd8] sm:$0xff] %v1714
      %1735 = vst [vmem:[#allocation4 + $0xe0] sm:$0xff] %v1716
      %1736 = vst [vmem:[#allocation4 + $0xe8] sm:$0xff] %v1718
      %1737 = vst [vmem:[#allocation4 + $0xf0] sm:$0xff] %v1720
      %1738 = vst [vmem:[#allocation4 + $0xf8] sm:$0xff] %v1722
      %v1739 = vld [vmem:[#allocation2 + $0x4] sm:$0xff]
      %v1740 = vld [vmem:[#allocation2 + $0x14] sm:$0xff]
      %v1741 = vld [vmem:[#allocation2 + $0x24] sm:$0xff]
      %v1742 = vld [vmem:[#allocation2 + $0x34] sm:$0xff]
      %v1743 = vld [vmem:[#allocation2 + $0x44] sm:$0xff]
      %v1744 = vld [vmem:[#allocation2 + $0x54] sm:$0xff]
      %v1745 = vld [vmem:[#allocation2 + $0x64] sm:$0xff]
      %v1746 = vld [vmem:[#allocation2 + $0x74] sm:$0xff]
      %1747 = vst [vmem:[#allocation4 + $0x100] sm:$0xff] %v1739
      %1748 = vst [vmem:[#allocation4 + $0x108] sm:$0xff] %v1740
      %1749 = vst [vmem:[#allocation4 + $0x110] sm:$0xff] %v1741
      %1750 = vst [vmem:[#allocation4 + $0x118] sm:$0xff] %v1742
      %1751 = vst [vmem:[#allocation4 + $0x120] sm:$0xff] %v1743
      %1752 = vst [vmem:[#allocation4 + $0x128] sm:$0xff] %v1744
      %1753 = vst [vmem:[#allocation4 + $0x130] sm:$0xff] %v1745
      %1754 = vst [vmem:[#allocation4 + $0x138] sm:$0xff] %v1746
      %v1755 = vld [vmem:[#allocation2 + $0x4] sm:$0xff]
      %v1756 = vld [vmem:[#allocation2 + $0xc] sm:$0xf]
      %v1757 = vld [vmem:[#allocation2 + $0x14] sm:$0xff]
      %v1758 = vld [vmem:[#allocation2 + $0x1c] sm:$0xf]
      %v1759 = vld [vmem:[#allocation2 + $0x24] sm:$0xff]
      %v1760 = vld [vmem:[#allocation2 + $0x2c] sm:$0xf]
      %v1761 = vld [vmem:[#allocation2 + $0x34] sm:$0xff]
      %v1762 = vld [vmem:[#allocation2 + $0x3c] sm:$0xf]
      %v1763 = vld [vmem:[#allocation2 + $0x44] sm:$0xff]
      %v1764 = vld [vmem:[#allocation2 + $0x4c] sm:$0xf]
      %v1765 = vld [vmem:[#allocation2 + $0x54] sm:$0xff]
      %v1766 = vld [vmem:[#allocation2 + $0x5c] sm:$0xf]
      %v1767 = vld [vmem:[#allocation2 + $0x64] sm:$0xff]
      %v1768 = vld [vmem:[#allocation2 + $0x6c] sm:$0xf]
      %v1769 = vld [vmem:[#allocation2 + $0x74] sm:$0xff]
      %v1770 = vld [vmem:[#allocation2 + $0x7c] sm:$0xf]
      %v1771 = vunpack.c.l.bf16 %v1755
      %v1772 = vunpack.c.h.bf16 %v1755
      %v1773 = vunpack.c.l.bf16 %v1756
      %v1774 = vunpack.c.l.bf16 %v1757
      %v1775 = vunpack.c.h.bf16 %v1757
      %v1776 = vunpack.c.l.bf16 %v1758
      %v1777 = vunpack.c.l.bf16 %v1759
      %v1778 = vunpack.c.h.bf16 %v1759
      %v1779 = vunpack.c.l.bf16 %v1760
      %v1780 = vunpack.c.l.bf16 %v1761
      %v1781 = vunpack.c.h.bf16 %v1761
      %v1782 = vunpack.c.l.bf16 %v1762
      %v1783 = vunpack.c.l.bf16 %v1763
      %v1784 = vunpack.c.h.bf16 %v1763
      %v1785 = vunpack.c.l.bf16 %v1764
      %v1786 = vunpack.c.l.bf16 %v1765
      %v1787 = vunpack.c.h.bf16 %v1765
      %v1788 = vunpack.c.l.bf16 %v1766
      %v1789 = vunpack.c.l.bf16 %v1767
      %v1790 = vunpack.c.h.bf16 %v1767
      %v1791 = vunpack.c.l.bf16 %v1768
      %v1792 = vunpack.c.l.bf16 %v1769
      %v1793 = vunpack.c.h.bf16 %v1769
      %v1794 = vunpack.c.l.bf16 %v1770
      %1795 = vrot.lane.b32.xlu0 %v1407, 1
      %v1796 = vpop.permute.xlu0 %1795
      %1797 = vrot.lane.b32.xlu0 %v1408, 1
      %v1798 = vpop.permute.xlu0 %1797
      %v1799 = vsel %vm493, %v1796, %v1798
      %v1803 = vmul.f32 %v1771, %v1796
      %v1804 = vmul.f32 %v1772, %v1799
      %v1805 = vmul.f32 %v1773, %v1798
      %v1806 = vmul.f32 %v1774, %v1796
      %v1807 = vmul.f32 %v1775, %v1799
      %v1808 = vmul.f32 %v1776, %v1798
      %v1809 = vmul.f32 %v1777, %v1796
      %v1810 = vmul.f32 %v1778, %v1799
      %v1811 = vmul.f32 %v1779, %v1798
      %v1812 = vmul.f32 %v1780, %v1796
      %v1813 = vmul.f32 %v1781, %v1799
      %v1814 = vmul.f32 %v1782, %v1798
      %v1815 = vmul.f32 %v1783, %v1796
      %v1816 = vmul.f32 %v1784, %v1799
      %v1817 = vmul.f32 %v1785, %v1798
      %v1818 = vmul.f32 %v1786, %v1796
      %v1819 = vmul.f32 %v1787, %v1799
      %v1820 = vmul.f32 %v1788, %v1798
      %v1821 = vmul.f32 %v1789, %v1796
      %v1822 = vmul.f32 %v1790, %v1799
      %v1823 = vmul.f32 %v1791, %v1798
      %v1824 = vmul.f32 %v1792, %v1796
      %v1825 = vmul.f32 %v1793, %v1799
      %v1826 = vmul.f32 %v1794, %v1798
      %v1827 = vpack.c.bf16 %v1804, %v1803
      %v1828 = vpack.c.bf16 %v1805, %v1805
      %v1829 = vpack.c.bf16 %v1807, %v1806
      %v1830 = vpack.c.bf16 %v1808, %v1808
      %v1831 = vpack.c.bf16 %v1810, %v1809
      %v1832 = vpack.c.bf16 %v1811, %v1811
      %v1833 = vpack.c.bf16 %v1813, %v1812
      %v1834 = vpack.c.bf16 %v1814, %v1814
      %v1835 = vpack.c.bf16 %v1816, %v1815
      %v1836 = vpack.c.bf16 %v1817, %v1817
      %v1837 = vpack.c.bf16 %v1819, %v1818
      %v1838 = vpack.c.bf16 %v1820, %v1820
      %v1839 = vpack.c.bf16 %v1822, %v1821
      %v1840 = vpack.c.bf16 %v1823, %v1823
      %v1841 = vpack.c.bf16 %v1825, %v1824
      %v1842 = vpack.c.bf16 %v1826, %v1826
      %1859 = vrot.lane.b32.xlu0 %v1827, 127
      %v1860 = vpop.permute.xlu0 %1859
      %1861 = vrot.lane.b32.xlu0 %v1828, 127
      %v1862 = vpop.permute.xlu0 %1861
      %1863 = vrot.lane.b32.xlu0 %v1829, 127
      %v1864 = vpop.permute.xlu0 %1863
      %1865 = vrot.lane.b32.xlu0 %v1830, 127
      %v1866 = vpop.permute.xlu0 %1865
      %1867 = vrot.lane.b32.xlu0 %v1831, 127
      %v1868 = vpop.permute.xlu0 %1867
      %1869 = vrot.lane.b32.xlu0 %v1832, 127
      %v1870 = vpop.permute.xlu0 %1869
      %1871 = vrot.lane.b32.xlu0 %v1833, 127
      %v1872 = vpop.permute.xlu0 %1871
      %1873 = vrot.lane.b32.xlu0 %v1834, 127
      %v1874 = vpop.permute.xlu0 %1873
      %1875 = vrot.lane.b32.xlu0 %v1835, 127
      %v1876 = vpop.permute.xlu0 %1875
      %1877 = vrot.lane.b32.xlu0 %v1836, 127
      %v1878 = vpop.permute.xlu0 %1877
      %1879 = vrot.lane.b32.xlu0 %v1837, 127
      %v1880 = vpop.permute.xlu0 %1879
      %1881 = vrot.lane.b32.xlu0 %v1838, 127
      %v1882 = vpop.permute.xlu0 %1881
      %1883 = vrot.lane.b32.xlu0 %v1839, 127
      %v1884 = vpop.permute.xlu0 %1883
      %1885 = vrot.lane.b32.xlu0 %v1840, 127
      %v1886 = vpop.permute.xlu0 %1885
      %1887 = vrot.lane.b32.xlu0 %v1841, 127
      %v1888 = vpop.permute.xlu0 %1887
      %1889 = vrot.lane.b32.xlu0 %v1842, 127
      %v1890 = vpop.permute.xlu0 %1889
      %v1891 = vrot.slane %v1860, 4
      %v1892 = vrot.slane %v1862, 4
      %v1893 = vrot.slane %v1864, 4
      %v1894 = vrot.slane %v1866, 4
      %v1895 = vrot.slane %v1868, 4
      %v1896 = vrot.slane %v1870, 4
      %v1897 = vrot.slane %v1872, 4
      %v1898 = vrot.slane %v1874, 4
      %v1899 = vrot.slane %v1876, 4
      %v1900 = vrot.slane %v1878, 4
      %v1901 = vrot.slane %v1880, 4
      %v1902 = vrot.slane %v1882, 4
      %v1903 = vrot.slane %v1884, 4
      %v1904 = vrot.slane %v1886, 4
      %v1905 = vrot.slane %v1888, 4
      %v1906 = vrot.slane %v1890, 4
      %v1907 = vsel %vm313, %v1891, %v1892
      %v1908 = vsel %vm525, %v1860, %v1907
      %v1909 = vsel %vm313, %v1893, %v1894
      %v1910 = vsel %vm525, %v1864, %v1909
      %v1911 = vsel %vm313, %v1895, %v1896
      %v1912 = vsel %vm525, %v1868, %v1911
      %v1913 = vsel %vm313, %v1897, %v1898
      %v1914 = vsel %vm525, %v1872, %v1913
      %v1915 = vsel %vm313, %v1899, %v1900
      %v1916 = vsel %vm525, %v1876, %v1915
      %v1917 = vsel %vm313, %v1901, %v1902
      %v1918 = vsel %vm525, %v1880, %v1917
      %v1919 = vsel %vm313, %v1903, %v1904
      %v1920 = vsel %vm525, %v1884, %v1919
      %v1921 = vsel %vm313, %v1905, %v1906
      %v1922 = vsel %vm525, %v1888, %v1921
      %1931 = vst [vmem:[#allocation4 + $0x140] sm:$0xff] %v1908
      %1932 = vst [vmem:[#allocation4 + $0x148] sm:$0xff] %v1910
      %1933 = vst [vmem:[#allocation4 + $0x150] sm:$0xff] %v1912
      %1934 = vst [vmem:[#allocation4 + $0x158] sm:$0xff] %v1914
      %1935 = vst [vmem:[#allocation4 + $0x160] sm:$0xff] %v1916
      %1936 = vst [vmem:[#allocation4 + $0x168] sm:$0xff] %v1918
      %1937 = vst [vmem:[#allocation4 + $0x170] sm:$0xff] %v1920
      %1938 = vst [vmem:[#allocation4 + $0x178] sm:$0xff] %v1922
      %v1939 = vld [vmem:[#allocation2 + $0x4] sm:$0xff]
      %v1940 = vld [vmem:[#allocation2 + $0xc] sm:$0xf]
      %v1941 = vld [vmem:[#allocation2 + $0x14] sm:$0xff]
      %v1942 = vld [vmem:[#allocation2 + $0x1c] sm:$0xf]
      %v1943 = vld [vmem:[#allocation2 + $0x24] sm:$0xff]
      %v1944 = vld [vmem:[#allocation2 + $0x2c] sm:$0xf]
      %v1945 = vld [vmem:[#allocation2 + $0x34] sm:$0xff]
      %v1946 = vld [vmem:[#allocation2 + $0x3c] sm:$0xf]
      %v1947 = vld [vmem:[#allocation2 + $0x44] sm:$0xff]
      %v1948 = vld [vmem:[#allocation2 + $0x4c] sm:$0xf]
      %v1949 = vld [vmem:[#allocation2 + $0x54] sm:$0xff]
      %v1950 = vld [vmem:[#allocation2 + $0x5c] sm:$0xf]
      %v1951 = vld [vmem:[#allocation2 + $0x64] sm:$0xff]
      %v1952 = vld [vmem:[#allocation2 + $0x6c] sm:$0xf]
      %v1953 = vld [vmem:[#allocation2 + $0x74] sm:$0xff]
      %v1954 = vld [vmem:[#allocation2 + $0x7c] sm:$0xf]
      %v1955 = vunpack.c.l.bf16 %v1939
      %v1956 = vunpack.c.h.bf16 %v1939
      %v1957 = vunpack.c.l.bf16 %v1940
      %v1958 = vunpack.c.l.bf16 %v1941
      %v1959 = vunpack.c.h.bf16 %v1941
      %v1960 = vunpack.c.l.bf16 %v1942
      %v1961 = vunpack.c.l.bf16 %v1943
      %v1962 = vunpack.c.h.bf16 %v1943
      %v1963 = vunpack.c.l.bf16 %v1944
      %v1964 = vunpack.c.l.bf16 %v1945
      %v1965 = vunpack.c.h.bf16 %v1945
      %v1966 = vunpack.c.l.bf16 %v1946
      %v1967 = vunpack.c.l.bf16 %v1947
      %v1968 = vunpack.c.h.bf16 %v1947
      %v1969 = vunpack.c.l.bf16 %v1948
      %v1970 = vunpack.c.l.bf16 %v1949
      %v1971 = vunpack.c.h.bf16 %v1949
      %v1972 = vunpack.c.l.bf16 %v1950
      %v1973 = vunpack.c.l.bf16 %v1951
      %v1974 = vunpack.c.h.bf16 %v1951
      %v1975 = vunpack.c.l.bf16 %v1952
      %v1976 = vunpack.c.l.bf16 %v1953
      %v1977 = vunpack.c.h.bf16 %v1953
      %v1978 = vunpack.c.l.bf16 %v1954
      %1979 = vrot.lane.b32.xlu0 %v1096, 15
      %v1980 = vpop.permute.xlu0 %1979
      %1981 = vrot.lane.b32.xlu0 %v1097, 15
      %v1982 = vpop.permute.xlu0 %1981
      %v1983 = vsel %vm547, %v1980, %v1982
      %v1987 = vmul.f32 %v1955, %v1980
      %v1988 = vmul.f32 %v1956, %v1983
      %v1989 = vmul.f32 %v1957, %v1982
      %v1990 = vmul.f32 %v1958, %v1980
      %v1991 = vmul.f32 %v1959, %v1983
      %v1992 = vmul.f32 %v1960, %v1982
      %v1993 = vmul.f32 %v1961, %v1980
      %v1994 = vmul.f32 %v1962, %v1983
      %v1995 = vmul.f32 %v1963, %v1982
      %v1996 = vmul.f32 %v1964, %v1980
      %v1997 = vmul.f32 %v1965, %v1983
      %v1998 = vmul.f32 %v1966, %v1982
      %v1999 = vmul.f32 %v1967, %v1980
      %v2000 = vmul.f32 %v1968, %v1983
      %v2001 = vmul.f32 %v1969, %v1982
      %v2002 = vmul.f32 %v1970, %v1980
      %v2003 = vmul.f32 %v1971, %v1983
      %v2004 = vmul.f32 %v1972, %v1982
      %v2005 = vmul.f32 %v1973, %v1980
      %v2006 = vmul.f32 %v1974, %v1983
      %v2007 = vmul.f32 %v1975, %v1982
      %v2008 = vmul.f32 %v1976, %v1980
      %v2009 = vmul.f32 %v1977, %v1983
      %v2010 = vmul.f32 %v1978, %v1982
      %v2011 = vpack.c.bf16 %v1988, %v1987
      %v2012 = vpack.c.bf16 %v1989, %v1989
      %v2013 = vpack.c.bf16 %v1991, %v1990
      %v2014 = vpack.c.bf16 %v1992, %v1992
      %v2015 = vpack.c.bf16 %v1994, %v1993
      %v2016 = vpack.c.bf16 %v1995, %v1995
      %v2017 = vpack.c.bf16 %v1997, %v1996
      %v2018 = vpack.c.bf16 %v1998, %v1998
      %v2019 = vpack.c.bf16 %v2000, %v1999
      %v2020 = vpack.c.bf16 %v2001, %v2001
      %v2021 = vpack.c.bf16 %v2003, %v2002
      %v2022 = vpack.c.bf16 %v2004, %v2004
      %v2023 = vpack.c.bf16 %v2006, %v2005
      %v2024 = vpack.c.bf16 %v2007, %v2007
      %v2025 = vpack.c.bf16 %v2009, %v2008
      %v2026 = vpack.c.bf16 %v2010, %v2010
      %2043 = vrot.lane.b32.xlu0 %v2011, 113
      %v2044 = vpop.permute.xlu0 %2043
      %2045 = vrot.lane.b32.xlu0 %v2012, 113
      %v2046 = vpop.permute.xlu0 %2045
      %2047 = vrot.lane.b32.xlu0 %v2013, 113
      %v2048 = vpop.permute.xlu0 %2047
      %2049 = vrot.lane.b32.xlu0 %v2014, 113
      %v2050 = vpop.permute.xlu0 %2049
      %2051 = vrot.lane.b32.xlu0 %v2015, 113
      %v2052 = vpop.permute.xlu0 %2051
      %2053 = vrot.lane.b32.xlu0 %v2016, 113
      %v2054 = vpop.permute.xlu0 %2053
      %2055 = vrot.lane.b32.xlu0 %v2017, 113
      %v2056 = vpop.permute.xlu0 %2055
      %2057 = vrot.lane.b32.xlu0 %v2018, 113
      %v2058 = vpop.permute.xlu0 %2057
      %2059 = vrot.lane.b32.xlu0 %v2019, 113
      %v2060 = vpop.permute.xlu0 %2059
      %2061 = vrot.lane.b32.xlu0 %v2020, 113
      %v2062 = vpop.permute.xlu0 %2061
      %2063 = vrot.lane.b32.xlu0 %v2021, 113
      %v2064 = vpop.permute.xlu0 %2063
      %2065 = vrot.lane.b32.xlu0 %v2022, 113
      %v2066 = vpop.permute.xlu0 %2065
      %2067 = vrot.lane.b32.xlu0 %v2023, 113
      %v2068 = vpop.permute.xlu0 %2067
      %2069 = vrot.lane.b32.xlu0 %v2024, 113
      %v2070 = vpop.permute.xlu0 %2069
      %2071 = vrot.lane.b32.xlu0 %v2025, 113
      %v2072 = vpop.permute.xlu0 %2071
      %2073 = vrot.lane.b32.xlu0 %v2026, 113
      %v2074 = vpop.permute.xlu0 %2073
      %v2075 = vrot.slane %v2044, 4
      %v2076 = vrot.slane %v2046, 4
      %v2077 = vrot.slane %v2048, 4
      %v2078 = vrot.slane %v2050, 4
      %v2079 = vrot.slane %v2052, 4
      %v2080 = vrot.slane %v2054, 4
      %v2081 = vrot.slane %v2056, 4
      %v2082 = vrot.slane %v2058, 4
      %v2083 = vrot.slane %v2060, 4
      %v2084 = vrot.slane %v2062, 4
      %v2085 = vrot.slane %v2064, 4
      %v2086 = vrot.slane %v2066, 4
      %v2087 = vrot.slane %v2068, 4
      %v2088 = vrot.slane %v2070, 4
      %v2089 = vrot.slane %v2072, 4
      %v2090 = vrot.slane %v2074, 4
      %v2091 = vsel %vm313, %v2075, %v2076
      %v2092 = vsel %vm579, %v2044, %v2091
      %v2093 = vsel %vm313, %v2077, %v2078
      %v2094 = vsel %vm579, %v2048, %v2093
      %v2095 = vsel %vm313, %v2079, %v2080
      %v2096 = vsel %vm579, %v2052, %v2095
      %v2097 = vsel %vm313, %v2081, %v2082
      %v2098 = vsel %vm579, %v2056, %v2097
      %v2099 = vsel %vm313, %v2083, %v2084
      %v2100 = vsel %vm579, %v2060, %v2099
      %v2101 = vsel %vm313, %v2085, %v2086
      %v2102 = vsel %vm579, %v2064, %v2101
      %v2103 = vsel %vm313, %v2087, %v2088
      %v2104 = vsel %vm579, %v2068, %v2103
      %v2105 = vsel %vm313, %v2089, %v2090
      %v2106 = vsel %vm579, %v2072, %v2105
      %2115 = vst [vmem:[#allocation4 + $0x180] sm:$0xff] %v2092
      %2116 = vst [vmem:[#allocation4 + $0x188] sm:$0xff] %v2094
      %2117 = vst [vmem:[#allocation4 + $0x190] sm:$0xff] %v2096
      %2118 = vst [vmem:[#allocation4 + $0x198] sm:$0xff] %v2098
      %2119 = vst [vmem:[#allocation4 + $0x1a0] sm:$0xff] %v2100
      %2120 = vst [vmem:[#allocation4 + $0x1a8] sm:$0xff] %v2102
      %2121 = vst [vmem:[#allocation4 + $0x1b0] sm:$0xff] %v2104
      %2122 = vst [vmem:[#allocation4 + $0x1b8] sm:$0xff] %v2106
      %v2123 = vld [vmem:[#allocation2 + $0x4] sm:$0xff]
      %v2124 = vld [vmem:[#allocation2 + $0xc] sm:$0xf]
      %v2125 = vld [vmem:[#allocation2 + $0x14] sm:$0xff]
      %v2126 = vld [vmem:[#allocation2 + $0x1c] sm:$0xf]
      %v2127 = vld [vmem:[#allocation2 + $0x24] sm:$0xff]
      %v2128 = vld [vmem:[#allocation2 + $0x2c] sm:$0xf]
      %v2129 = vld [vmem:[#allocation2 + $0x34] sm:$0xff]
      %v2130 = vld [vmem:[#allocation2 + $0x3c] sm:$0xf]
      %v2131 = vld [vmem:[#allocation2 + $0x44] sm:$0xff]
      %v2132 = vld [vmem:[#allocation2 + $0x4c] sm:$0xf]
      %v2133 = vld [vmem:[#allocation2 + $0x54] sm:$0xff]
      %v2134 = vld [vmem:[#allocation2 + $0x5c] sm:$0xf]
      %v2135 = vld [vmem:[#allocation2 + $0x64] sm:$0xff]
      %v2136 = vld [vmem:[#allocation2 + $0x6c] sm:$0xf]
      %v2137 = vld [vmem:[#allocation2 + $0x74] sm:$0xff]
      %v2138 = vld [vmem:[#allocation2 + $0x7c] sm:$0xf]
      %2155 = vrot.lane.b32.xlu0 %v2123, 112
      %v2156 = vpop.permute.xlu0 %2155
      %2157 = vrot.lane.b32.xlu0 %v2124, 112
      %v2158 = vpop.permute.xlu0 %2157
      %2159 = vrot.lane.b32.xlu0 %v2125, 112
      %v2160 = vpop.permute.xlu0 %2159
      %2161 = vrot.lane.b32.xlu0 %v2126, 112
      %v2162 = vpop.permute.xlu0 %2161
      %2163 = vrot.lane.b32.xlu0 %v2127, 112
      %v2164 = vpop.permute.xlu0 %2163
      %2165 = vrot.lane.b32.xlu0 %v2128, 112
      %v2166 = vpop.permute.xlu0 %2165
      %2167 = vrot.lane.b32.xlu0 %v2129, 112
      %v2168 = vpop.permute.xlu0 %2167
      %2169 = vrot.lane.b32.xlu0 %v2130, 112
      %v2170 = vpop.permute.xlu0 %2169
      %2171 = vrot.lane.b32.xlu0 %v2131, 112
      %v2172 = vpop.permute.xlu0 %2171
      %2173 = vrot.lane.b32.xlu0 %v2132, 112
      %v2174 = vpop.permute.xlu0 %2173
      %2175 = vrot.lane.b32.xlu0 %v2133, 112
      %v2176 = vpop.permute.xlu0 %2175
      %2177 = vrot.lane.b32.xlu0 %v2134, 112
      %v2178 = vpop.permute.xlu0 %2177
      %2179 = vrot.lane.b32.xlu0 %v2135, 112
      %v2180 = vpop.permute.xlu0 %2179
      %2181 = vrot.lane.b32.xlu0 %v2136, 112
      %v2182 = vpop.permute.xlu0 %2181
      %2183 = vrot.lane.b32.xlu0 %v2137, 112
      %v2184 = vpop.permute.xlu0 %2183
      %2185 = vrot.lane.b32.xlu0 %v2138, 112
      %v2186 = vpop.permute.xlu0 %2185
      %v2187 = vrot.slane %v2156, 4
      %v2188 = vrot.slane %v2158, 4
      %v2189 = vrot.slane %v2160, 4
      %v2190 = vrot.slane %v2162, 4
      %v2191 = vrot.slane %v2164, 4
      %v2192 = vrot.slane %v2166, 4
      %v2193 = vrot.slane %v2168, 4
      %v2194 = vrot.slane %v2170, 4
      %v2195 = vrot.slane %v2172, 4
      %v2196 = vrot.slane %v2174, 4
      %v2197 = vrot.slane %v2176, 4
      %v2198 = vrot.slane %v2178, 4
      %v2199 = vrot.slane %v2180, 4
      %v2200 = vrot.slane %v2182, 4
      %v2201 = vrot.slane %v2184, 4
      %v2202 = vrot.slane %v2186, 4
      %v2203 = vsel %vm313, %v2187, %v2188
      %v2204 = vsel %vm608, %v2156, %v2203
      %v2205 = vsel %vm313, %v2189, %v2190
      %v2206 = vsel %vm608, %v2160, %v2205
      %v2207 = vsel %vm313, %v2191, %v2192
      %v2208 = vsel %vm608, %v2164, %v2207
      %v2209 = vsel %vm313, %v2193, %v2194
      %v2210 = vsel %vm608, %v2168, %v2209
      %v2211 = vsel %vm313, %v2195, %v2196
      %v2212 = vsel %vm608, %v2172, %v2211
      %v2213 = vsel %vm313, %v2197, %v2198
      %v2214 = vsel %vm608, %v2176, %v2213
      %v2215 = vsel %vm313, %v2199, %v2200
      %v2216 = vsel %vm608, %v2180, %v2215
      %v2217 = vsel %vm313, %v2201, %v2202
      %v2218 = vsel %vm608, %v2184, %v2217
      %2227 = vst [vmem:[#allocation4 + $0x1c0] sm:$0xff] %v2204
      %2228 = vst [vmem:[#allocation4 + $0x1c8] sm:$0xff] %v2206
      %2229 = vst [vmem:[#allocation4 + $0x1d0] sm:$0xff] %v2208
      %2230 = vst [vmem:[#allocation4 + $0x1d8] sm:$0xff] %v2210
      %2231 = vst [vmem:[#allocation4 + $0x1e0] sm:$0xff] %v2212
      %2232 = vst [vmem:[#allocation4 + $0x1e8] sm:$0xff] %v2214
      %2233 = vst [vmem:[#allocation4 + $0x1f0] sm:$0xff] %v2216
      %2234 = vst [vmem:[#allocation4 + $0x1f8] sm:$0xff] %v2218
      %v2235 = vld [vmem:[#allocation2 + $0x4] sm:$0xff]
      %v2236 = vld [vmem:[#allocation2 + $0xc] sm:$0xf]
      %v2237 = vld [vmem:[#allocation2 + $0x14] sm:$0xff]
      %v2238 = vld [vmem:[#allocation2 + $0x1c] sm:$0xf]
      %v2239 = vld [vmem:[#allocation2 + $0x24] sm:$0xff]
      %v2240 = vld [vmem:[#allocation2 + $0x2c] sm:$0xf]
      %v2241 = vld [vmem:[#allocation2 + $0x34] sm:$0xff]
      %v2242 = vld [vmem:[#allocation2 + $0x3c] sm:$0xf]
      %v2243 = vld [vmem:[#allocation2 + $0x44] sm:$0xff]
      %v2244 = vld [vmem:[#allocation2 + $0x4c] sm:$0xf]
      %v2245 = vld [vmem:[#allocation2 + $0x54] sm:$0xff]
      %v2246 = vld [vmem:[#allocation2 + $0x5c] sm:$0xf]
      %v2247 = vld [vmem:[#allocation2 + $0x64] sm:$0xff]
      %v2248 = vld [vmem:[#allocation2 + $0x6c] sm:$0xf]
      %v2249 = vld [vmem:[#allocation2 + $0x74] sm:$0xff]
      %v2250 = vld [vmem:[#allocation2 + $0x7c] sm:$0xf]
      %v2251 = vunpack.c.l.bf16 %v2235
      %v2252 = vunpack.c.h.bf16 %v2235
      %v2253 = vunpack.c.l.bf16 %v2236
      %v2254 = vunpack.c.l.bf16 %v2237
      %v2255 = vunpack.c.h.bf16 %v2237
      %v2256 = vunpack.c.l.bf16 %v2238
      %v2257 = vunpack.c.l.bf16 %v2239
      %v2258 = vunpack.c.h.bf16 %v2239
      %v2259 = vunpack.c.l.bf16 %v2240
      %v2260 = vunpack.c.l.bf16 %v2241
      %v2261 = vunpack.c.h.bf16 %v2241
      %v2262 = vunpack.c.l.bf16 %v2242
      %v2263 = vunpack.c.l.bf16 %v2243
      %v2264 = vunpack.c.h.bf16 %v2243
      %v2265 = vunpack.c.l.bf16 %v2244
      %v2266 = vunpack.c.l.bf16 %v2245
      %v2267 = vunpack.c.h.bf16 %v2245
      %v2268 = vunpack.c.l.bf16 %v2246
      %v2269 = vunpack.c.l.bf16 %v2247
      %v2270 = vunpack.c.h.bf16 %v2247
      %v2271 = vunpack.c.l.bf16 %v2248
      %v2272 = vunpack.c.l.bf16 %v2249
      %v2273 = vunpack.c.h.bf16 %v2249
      %v2274 = vunpack.c.l.bf16 %v2250
      %2275 = vrot.lane.b32.xlu0 %v1407, 17
      %v2276 = vpop.permute.xlu0 %2275
      %2277 = vrot.lane.b32.xlu0 %v1408, 17
      %v2278 = vpop.permute.xlu0 %2277
      %v2279 = vsel %vm630, %v2276, %v2278
      %v2283 = vmul.f32 %v2251, %v2276
      %v2284 = vmul.f32 %v2252, %v2279
      %v2285 = vmul.f32 %v2253, %v2278
      %v2286 = vmul.f32 %v2254, %v2276
      %v2287 = vmul.f32 %v2255, %v2279
      %v2288 = vmul.f32 %v2256, %v2278
      %v2289 = vmul.f32 %v2257, %v2276
      %v2290 = vmul.f32 %v2258, %v2279
      %v2291 = vmul.f32 %v2259, %v2278
      %v2292 = vmul.f32 %v2260, %v2276
      %v2293 = vmul.f32 %v2261, %v2279
      %v2294 = vmul.f32 %v2262, %v2278
      %v2295 = vmul.f32 %v2263, %v2276
      %v2296 = vmul.f32 %v2264, %v2279
      %v2297 = vmul.f32 %v2265, %v2278
      %v2298 = vmul.f32 %v2266, %v2276
      %v2299 = vmul.f32 %v2267, %v2279
      %v2300 = vmul.f32 %v2268, %v2278
      %v2301 = vmul.f32 %v2269, %v2276
      %v2302 = vmul.f32 %v2270, %v2279
      %v2303 = vmul.f32 %v2271, %v2278
      %v2304 = vmul.f32 %v2272, %v2276
      %v2305 = vmul.f32 %v2273, %v2279
      %v2306 = vmul.f32 %v2274, %v2278
      %v2307 = vpack.c.bf16 %v2284, %v2283
      %v2308 = vpack.c.bf16 %v2285, %v2285
      %v2309 = vpack.c.bf16 %v2287, %v2286
      %v2310 = vpack.c.bf16 %v2288, %v2288
      %v2311 = vpack.c.bf16 %v2290, %v2289
      %v2312 = vpack.c.bf16 %v2291, %v2291
      %v2313 = vpack.c.bf16 %v2293, %v2292
      %v2314 = vpack.c.bf16 %v2294, %v2294
      %v2315 = vpack.c.bf16 %v2296, %v2295
      %v2316 = vpack.c.bf16 %v2297, %v2297
      %v2317 = vpack.c.bf16 %v2299, %v2298
      %v2318 = vpack.c.bf16 %v2300, %v2300
      %v2319 = vpack.c.bf16 %v2302, %v2301
      %v2320 = vpack.c.bf16 %v2303, %v2303
      %v2321 = vpack.c.bf16 %v2305, %v2304
      %v2322 = vpack.c.bf16 %v2306, %v2306
      %2339 = vrot.lane.b32.xlu0 %v2307, 111
      %v2340 = vpop.permute.xlu0 %2339
      %2341 = vrot.lane.b32.xlu0 %v2308, 111
      %v2342 = vpop.permute.xlu0 %2341
      %2343 = vrot.lane.b32.xlu0 %v2309, 111
      %v2344 = vpop.permute.xlu0 %2343
      %2345 = vrot.lane.b32.xlu0 %v2310, 111
      %v2346 = vpop.permute.xlu0 %2345
      %2347 = vrot.lane.b32.xlu0 %v2311, 111
      %v2348 = vpop.permute.xlu0 %2347
      %2349 = vrot.lane.b32.xlu0 %v2312, 111
      %v2350 = vpop.permute.xlu0 %2349
      %2351 = vrot.lane.b32.xlu0 %v2313, 111
      %v2352 = vpop.permute.xlu0 %2351
      %2353 = vrot.lane.b32.xlu0 %v2314, 111
      %v2354 = vpop.permute.xlu0 %2353
      %2355 = vrot.lane.b32.xlu0 %v2315, 111
      %v2356 = vpop.permute.xlu0 %2355
      %2357 = vrot.lane.b32.xlu0 %v2316, 111
      %v2358 = vpop.permute.xlu0 %2357
      %2359 = vrot.lane.b32.xlu0 %v2317, 111
      %v2360 = vpop.permute.xlu0 %2359
      %2361 = vrot.lane.b32.xlu0 %v2318, 111
      %v2362 = vpop.permute.xlu0 %2361
      %2363 = vrot.lane.b32.xlu0 %v2319, 111
      %v2364 = vpop.permute.xlu0 %2363
      %2365 = vrot.lane.b32.xlu0 %v2320, 111
      %v2366 = vpop.permute.xlu0 %2365
      %2367 = vrot.lane.b32.xlu0 %v2321, 111
      %v2368 = vpop.permute.xlu0 %2367
      %2369 = vrot.lane.b32.xlu0 %v2322, 111
      %v2370 = vpop.permute.xlu0 %2369
      %v2371 = vrot.slane %v2340, 4
      %v2372 = vrot.slane %v2342, 4
      %v2373 = vrot.slane %v2344, 4
      %v2374 = vrot.slane %v2346, 4
      %v2375 = vrot.slane %v2348, 4
      %v2376 = vrot.slane %v2350, 4
      %v2377 = vrot.slane %v2352, 4
      %v2378 = vrot.slane %v2354, 4
      %v2379 = vrot.slane %v2356, 4
      %v2380 = vrot.slane %v2358, 4
      %v2381 = vrot.slane %v2360, 4
      %v2382 = vrot.slane %v2362, 4
      %v2383 = vrot.slane %v2364, 4
      %v2384 = vrot.slane %v2366, 4
      %v2385 = vrot.slane %v2368, 4
      %v2386 = vrot.slane %v2370, 4
      %v2387 = vsel %vm313, %v2371, %v2372
      %v2388 = vsel %vm662, %v2340, %v2387
      %v2389 = vsel %vm313, %v2373, %v2374
      %v2390 = vsel %vm662, %v2344, %v2389
      %v2391 = vsel %vm313, %v2375, %v2376
      %v2392 = vsel %vm662, %v2348, %v2391
      %v2393 = vsel %vm313, %v2377, %v2378
      %v2394 = vsel %vm662, %v2352, %v2393
      %v2395 = vsel %vm313, %v2379, %v2380
      %v2396 = vsel %vm662, %v2356, %v2395
      %v2397 = vsel %vm313, %v2381, %v2382
      %v2398 = vsel %vm662, %v2360, %v2397
      %v2399 = vsel %vm313, %v2383, %v2384
      %v2400 = vsel %vm662, %v2364, %v2399
      %v2401 = vsel %vm313, %v2385, %v2386
      %v2402 = vsel %vm662, %v2368, %v2401
      %2411 = vst [vmem:[#allocation4 + $0x200] sm:$0xff] %v2388
      %2412 = vst [vmem:[#allocation4 + $0x208] sm:$0xff] %v2390
      %2413 = vst [vmem:[#allocation4 + $0x210] sm:$0xff] %v2392
      %2414 = vst [vmem:[#allocation4 + $0x218] sm:$0xff] %v2394
      %2415 = vst [vmem:[#allocation4 + $0x220] sm:$0xff] %v2396
      %2416 = vst [vmem:[#allocation4 + $0x228] sm:$0xff] %v2398
      %2417 = vst [vmem:[#allocation4 + $0x230] sm:$0xff] %v2400
      %2418 = vst [vmem:[#allocation4 + $0x238] sm:$0xff] %v2402
      %v2419 = vld [vmem:[%s3] sm:$0xff]
      %v2420 = vld [vmem:[%s3 + $0x8] sm:$0xff]
      %v2421 = vld [vmem:[%s3 + $0x10] sm:$0xf]
      %v2422 = vld [vmem:[%s3 + $0x14] sm:$0xff]
      %v2423 = vld [vmem:[%s3 + $0x1c] sm:$0xff]
      %v2424 = vld [vmem:[%s3 + $0x24] sm:$0xf]
      %v2425 = vld [vmem:[%s3 + $0x28] sm:$0xff]
      %v2426 = vld [vmem:[%s3 + $0x30] sm:$0xff]
      %v2427 = vld [vmem:[%s3 + $0x38] sm:$0xf]
      %v2428 = vld [vmem:[%s3 + $0x3c] sm:$0xff]
      %v2429 = vld [vmem:[%s3 + $0x44] sm:$0xff]
      %v2430 = vld [vmem:[%s3 + $0x4c] sm:$0xf]
      %v2431 = vld [vmem:[%s3 + $0x50] sm:$0xff]
      %v2432 = vld [vmem:[%s3 + $0x58] sm:$0xff]
      %v2433 = vld [vmem:[%s3 + $0x60] sm:$0xf]
      %v2434 = vld [vmem:[%s3 + $0x64] sm:$0xff]
      %v2435 = vld [vmem:[%s3 + $0x6c] sm:$0xff]
      %v2436 = vld [vmem:[%s3 + $0x74] sm:$0xf]
      %v2437 = vld [vmem:[%s3 + $0x78] sm:$0xff]
      %v2438 = vld [vmem:[%s3 + $0x80] sm:$0xff]
      %v2439 = vld [vmem:[%s3 + $0x88] sm:$0xf]
      %v2440 = vld [vmem:[%s3 + $0x8c] sm:$0xff]
      %v2441 = vld [vmem:[%s3 + $0x94] sm:$0xff]
      %v2442 = vld [vmem:[%s3 + $0x9c] sm:$0xf]
      %v2443 = vld [vmem:[#allocation4] sm:$0xff]
      %v2444 = vld [vmem:[#allocation4 + $0x8] sm:$0xff]
      %v2445 = vld [vmem:[#allocation4 + $0x10] sm:$0xff]
      %v2446 = vld [vmem:[#allocation4 + $0x18] sm:$0xff]
      %v2447 = vld [vmem:[#allocation4 + $0x20] sm:$0xff]
      %v2448 = vld [vmem:[#allocation4 + $0x28] sm:$0xff]
      %v2449 = vld [vmem:[#allocation4 + $0x30] sm:$0xff]
      %v2450 = vld [vmem:[#allocation4 + $0x38] sm:$0xff]
      %v2451 = vld [vmem:[#allocation4 + $0x40] sm:$0xff]
      %v2452 = vld [vmem:[#allocation4 + $0x48] sm:$0xff]
      %v2453 = vld [vmem:[#allocation4 + $0x50] sm:$0xff]
      %v2454 = vld [vmem:[#allocation4 + $0x58] sm:$0xff]
      %v2455 = vld [vmem:[#allocation4 + $0x60] sm:$0xff]
      %v2456 = vld [vmem:[#allocation4 + $0x68] sm:$0xff]
      %v2457 = vld [vmem:[#allocation4 + $0x70] sm:$0xff]
      %v2458 = vld [vmem:[#allocation4 + $0x78] sm:$0xff]
      %v2459 = vld [vmem:[#allocation4 + $0x80] sm:$0xff]
      %v2460 = vld [vmem:[#allocation4 + $0x88] sm:$0xff]
      %v2461 = vld [vmem:[#allocation4 + $0x90] sm:$0xff]
      %v2462 = vld [vmem:[#allocation4 + $0x98] sm:$0xff]
      %v2463 = vld [vmem:[#allocation4 + $0xa0] sm:$0xff]
      %v2464 = vld [vmem:[#allocation4 + $0xa8] sm:$0xff]
      %v2465 = vld [vmem:[#allocation4 + $0xb0] sm:$0xff]
      %v2466 = vld [vmem:[#allocation4 + $0xb8] sm:$0xff]
      %v2467 = vld [vmem:[#allocation4 + $0xc0] sm:$0xff]
      %v2468 = vld [vmem:[#allocation4 + $0xc8] sm:$0xff]
      %v2469 = vld [vmem:[#allocation4 + $0xd0] sm:$0xff]
      %v2470 = vld [vmem:[#allocation4 + $0xd8] sm:$0xff]
      %v2471 = vld [vmem:[#allocation4 + $0xe0] sm:$0xff]
      %v2472 = vld [vmem:[#allocation4 + $0xe8] sm:$0xff]
      %v2473 = vld [vmem:[#allocation4 + $0xf0] sm:$0xff]
      %v2474 = vld [vmem:[#allocation4 + $0xf8] sm:$0xff]
      %v2475 = vld [vmem:[#allocation4 + $0x100] sm:$0xff]
      %v2476 = vld [vmem:[#allocation4 + $0x108] sm:$0xff]
      %v2477 = vld [vmem:[#allocation4 + $0x110] sm:$0xff]
      %v2478 = vld [vmem:[#allocation4 + $0x118] sm:$0xff]
      %v2479 = vld [vmem:[#allocation4 + $0x120] sm:$0xff]
      %v2480 = vld [vmem:[#allocation4 + $0x128] sm:$0xff]
      %v2481 = vld [vmem:[#allocation4 + $0x130] sm:$0xff]
      %v2482 = vld [vmem:[#allocation4 + $0x138] sm:$0xff]
      %v2483 = vld [vmem:[#allocation4 + $0x140] sm:$0xff]
      %v2484 = vld [vmem:[#allocation4 + $0x148] sm:$0xff]
      %v2485 = vld [vmem:[#allocation4 + $0x150] sm:$0xff]
      %v2486 = vld [vmem:[#allocation4 + $0x158] sm:$0xff]
      %v2487 = vld [vmem:[#allocation4 + $0x160] sm:$0xff]
      %v2488 = vld [vmem:[#allocation4 + $0x168] sm:$0xff]
      %v2489 = vld [vmem:[#allocation4 + $0x170] sm:$0xff]
      %v2490 = vld [vmem:[#allocation4 + $0x178] sm:$0xff]
      %v2491 = vld [vmem:[#allocation4 + $0x180] sm:$0xff]
      %v2492 = vld [vmem:[#allocation4 + $0x188] sm:$0xff]
      %v2493 = vld [vmem:[#allocation4 + $0x190] sm:$0xff]
      %v2494 = vld [vmem:[#allocation4 + $0x198] sm:$0xff]
      %v2495 = vld [vmem:[#allocation4 + $0x1a0] sm:$0xff]
      %v2496 = vld [vmem:[#allocation4 + $0x1a8] sm:$0xff]
      %v2497 = vld [vmem:[#allocation4 + $0x1b0] sm:$0xff]
      %v2498 = vld [vmem:[#allocation4 + $0x1b8] sm:$0xff]
      %v2499 = vld [vmem:[#allocation4 + $0x1c0] sm:$0xff]
      %v2500 = vld [vmem:[#allocation4 + $0x1c8] sm:$0xff]
      %v2501 = vld [vmem:[#allocation4 + $0x1d0] sm:$0xff]
      %v2502 = vld [vmem:[#allocation4 + $0x1d8] sm:$0xff]
      %v2503 = vld [vmem:[#allocation4 + $0x1e0] sm:$0xff]
      %v2504 = vld [vmem:[#allocation4 + $0x1e8] sm:$0xff]
      %v2505 = vld [vmem:[#allocation4 + $0x1f0] sm:$0xff]
      %v2506 = vld [vmem:[#allocation4 + $0x1f8] sm:$0xff]
      %v2507 = vld [vmem:[#allocation4 + $0x200] sm:$0xff]
      %v2508 = vld [vmem:[#allocation4 + $0x208] sm:$0xff]
      %v2509 = vld [vmem:[#allocation4 + $0x210] sm:$0xff]
      %v2510 = vld [vmem:[#allocation4 + $0x218] sm:$0xff]
      %v2511 = vld [vmem:[#allocation4 + $0x220] sm:$0xff]
      %v2512 = vld [vmem:[#allocation4 + $0x228] sm:$0xff]
      %v2513 = vld [vmem:[#allocation4 + $0x230] sm:$0xff]
      %v2514 = vld [vmem:[#allocation4 + $0x238] sm:$0xff]
      %v2515 = vld [vmem:[%s4] sm:$0xff]
      %v2516 = vld [vmem:[%s4 + $0x8] sm:$0xff]
      %v2517 = vld [vmem:[%s4 + $0x10] sm:$0xff]
      %v2518 = vld [vmem:[%s4 + $0x18] sm:$0xff]
      %v2519 = vld [vmem:[%s4 + $0x20] sm:$0xff]
      %v2520 = vld [vmem:[%s4 + $0x28] sm:$0xff]
      %v2521 = vld [vmem:[%s4 + $0x30] sm:$0xff]
      %v2522 = vld [vmem:[%s4 + $0x38] sm:$0xff]
      %2524 = vset.pattern.permute.xlu0 0
      %2525 = vperm.xlu0 %2524, %v2515
      %v2526 = vpop.permute.xlu0 %2525
      %2529 = vset.pattern.permute.xlu0 0
      %2530 = vperm.xlu0 %2529, %v2516
      %v2531 = vpop.permute.xlu0 %2530
      %2534 = vset.pattern.permute.xlu0 0
      %2535 = vperm.xlu0 %2534, %v2517
      %v2536 = vpop.permute.xlu0 %2535
      %2539 = vset.pattern.permute.xlu0 0
      %2540 = vperm.xlu0 %2539, %v2518
      %v2541 = vpop.permute.xlu0 %2540
      %2544 = vset.pattern.permute.xlu0 0
      %2545 = vperm.xlu0 %2544, %v2519
      %v2546 = vpop.permute.xlu0 %2545
      %2549 = vset.pattern.permute.xlu0 0
      %2550 = vperm.xlu0 %2549, %v2520
      %v2551 = vpop.permute.xlu0 %2550
      %2554 = vset.pattern.permute.xlu0 0
      %2555 = vperm.xlu0 %2554, %v2521
      %v2556 = vpop.permute.xlu0 %2555
      %2559 = vset.pattern.permute.xlu0 0
      %2560 = vperm.xlu0 %2559, %v2522
      %v2561 = vpop.permute.xlu0 %2560
      %v2587 = vunpack.c.l.b16 %v2419
      %v2588 = vunpack.c.h.b16 %v2419
      %v2589 = vunpack.c.l.b16 %v2420
      %v2590 = vunpack.c.h.b16 %v2420
      %v2591 = vunpack.c.l.b16 %v2421
      %v2592 = vunpack.c.l.b16 %v2422
      %v2593 = vunpack.c.h.b16 %v2422
      %v2594 = vunpack.c.l.b16 %v2423
      %v2595 = vunpack.c.h.b16 %v2423
      %v2596 = vunpack.c.l.b16 %v2424
      %v2597 = vunpack.c.l.b16 %v2425
      %v2598 = vunpack.c.h.b16 %v2425
      %v2599 = vunpack.c.l.b16 %v2426
      %v2600 = vunpack.c.h.b16 %v2426
      %v2601 = vunpack.c.l.b16 %v2427
      %v2602 = vunpack.c.l.b16 %v2428
      %v2603 = vunpack.c.h.b16 %v2428
      %v2604 = vunpack.c.l.b16 %v2429
      %v2605 = vunpack.c.h.b16 %v2429
      %v2606 = vunpack.c.l.b16 %v2430
      %v2607 = vunpack.c.l.b16 %v2431
      %v2608 = vunpack.c.h.b16 %v2431
      %v2609 = vunpack.c.l.b16 %v2432
      %v2610 = vunpack.c.h.b16 %v2432
      %v2611 = vunpack.c.l.b16 %v2433
      %v2612 = vunpack.c.l.b16 %v2434
      %v2613 = vunpack.c.h.b16 %v2434
      %v2614 = vunpack.c.l.b16 %v2435
      %v2615 = vunpack.c.h.b16 %v2435
      %v2616 = vunpack.c.l.b16 %v2436
      %v2617 = vunpack.c.l.b16 %v2437
      %v2618 = vunpack.c.h.b16 %v2437
      %v2619 = vunpack.c.l.b16 %v2438
      %v2620 = vunpack.c.h.b16 %v2438
      %v2621 = vunpack.c.l.b16 %v2439
      %v2622 = vunpack.c.l.b16 %v2440
      %v2623 = vunpack.c.h.b16 %v2440
      %v2624 = vunpack.c.l.b16 %v2441
      %v2625 = vunpack.c.h.b16 %v2441
      %v2626 = vunpack.c.l.b16 %v2442
      %v2627 = vpack.c.b16 %v2592, %v2587
      %v2628 = vpack.c.b16 %v2593, %v2588
      %v2629 = vpack.c.b16 %v2594, %v2589
      %v2630 = vpack.c.b16 %v2595, %v2590
      %v2631 = vpack.c.b16 %v2596, %v2591
      %v2632 = vpack.c.b16 %v2602, %v2597
      %v2633 = vpack.c.b16 %v2603, %v2598
      %v2634 = vpack.c.b16 %v2604, %v2599
      %v2635 = vpack.c.b16 %v2605, %v2600
      %v2636 = vpack.c.b16 %v2606, %v2601
      %v2637 = vpack.c.b16 %v2612, %v2607
      %v2638 = vpack.c.b16 %v2613, %v2608
      %v2639 = vpack.c.b16 %v2614, %v2609
      %v2640 = vpack.c.b16 %v2615, %v2610
      %v2641 = vpack.c.b16 %v2616, %v2611
      %v2642 = vpack.c.b16 %v2622, %v2617
      %v2643 = vpack.c.b16 %v2623, %v2618
      %v2644 = vpack.c.b16 %v2624, %v2619
      %v2645 = vpack.c.b16 %v2625, %v2620
      %v2646 = vpack.c.b16 %v2626, %v2621
      %v2735 = vunpack.c.l.b16 %v2443
      %v2736 = vunpack.c.h.b16 %v2443
      %v2737 = vunpack.c.l.b16 %v2444
      %v2738 = vunpack.c.h.b16 %v2444
      %v2739 = vunpack.c.l.b16 %v2445
      %v2740 = vunpack.c.h.b16 %v2445
      %v2741 = vunpack.c.l.b16 %v2446
      %v2742 = vunpack.c.h.b16 %v2446
      %v2743 = vunpack.c.l.b16 %v2447
      %v2744 = vunpack.c.h.b16 %v2447
      %v2745 = vunpack.c.l.b16 %v2448
      %v2746 = vunpack.c.h.b16 %v2448
      %v2747 = vunpack.c.l.b16 %v2449
      %v2748 = vunpack.c.h.b16 %v2449
      %v2749 = vunpack.c.l.b16 %v2450
      %v2750 = vunpack.c.h.b16 %v2450
      %v2751 = vunpack.c.l.b16 %v2451
      %v2752 = vunpack.c.h.b16 %v2451
      %v2753 = vunpack.c.l.b16 %v2452
      %v2754 = vunpack.c.h.b16 %v2452
      %v2755 = vunpack.c.l.b16 %v2453
      %v2756 = vunpack.c.h.b16 %v2453
      %v2757 = vunpack.c.l.b16 %v2454
      %v2758 = vunpack.c.h.b16 %v2454
      %v2759 = vunpack.c.l.b16 %v2455
      %v2760 = vunpack.c.h.b16 %v2455
      %v2761 = vunpack.c.l.b16 %v2456
      %v2762 = vunpack.c.h.b16 %v2456
      %v2763 = vunpack.c.l.b16 %v2457
      %v2764 = vunpack.c.h.b16 %v2457
      %v2765 = vunpack.c.l.b16 %v2458
      %v2766 = vunpack.c.h.b16 %v2458
      %v2767 = vunpack.c.l.b16 %v2459
      %v2768 = vunpack.c.h.b16 %v2459
      %v2769 = vunpack.c.l.b16 %v2460
      %v2770 = vunpack.c.h.b16 %v2460
      %v2771 = vunpack.c.l.b16 %v2461
      %v2772 = vunpack.c.h.b16 %v2461
      %v2773 = vunpack.c.l.b16 %v2462
      %v2774 = vunpack.c.h.b16 %v2462
      %v2775 = vunpack.c.l.b16 %v2463
      %v2776 = vunpack.c.h.b16 %v2463
      %v2777 = vunpack.c.l.b16 %v2464
      %v2778 = vunpack.c.h.b16 %v2464
      %v2779 = vunpack.c.l.b16 %v2465
      %v2780 = vunpack.c.h.b16 %v2465
      %v2781 = vunpack.c.l.b16 %v2466
      %v2782 = vunpack.c.h.b16 %v2466
      %v2783 = vunpack.c.l.b16 %v2467
      %v2784 = vunpack.c.h.b16 %v2467
      %v2785 = vunpack.c.l.b16 %v2468
      %v2786 = vunpack.c.h.b16 %v2468
      %v2787 = vunpack.c.l.b16 %v2469
      %v2788 = vunpack.c.h.b16 %v2469
      %v2789 = vunpack.c.l.b16 %v2470
      %v2790 = vunpack.c.h.b16 %v2470
      %v2791 = vunpack.c.l.b16 %v2471
      %v2792 = vunpack.c.h.b16 %v2471
      %v2793 = vunpack.c.l.b16 %v2472
      %v2794 = vunpack.c.h.b16 %v2472
      %v2795 = vunpack.c.l.b16 %v2473
      %v2796 = vunpack.c.h.b16 %v2473
      %v2797 = vunpack.c.l.b16 %v2474
      %v2798 = vunpack.c.h.b16 %v2474
      %v2799 = vunpack.c.l.b16 %v2475
      %v2800 = vunpack.c.h.b16 %v2475
      %v2801 = vunpack.c.l.b16 %v2476
      %v2802 = vunpack.c.h.b16 %v2476
      %v2803 = vunpack.c.l.b16 %v2477
      %v2804 = vunpack.c.h.b16 %v2477
      %v2805 = vunpack.c.l.b16 %v2478
      %v2806 = vunpack.c.h.b16 %v2478
      %v2807 = vunpack.c.l.b16 %v2479
      %v2808 = vunpack.c.h.b16 %v2479
      %v2809 = vunpack.c.l.b16 %v2480
      %v2810 = vunpack.c.h.b16 %v2480
      %v2811 = vunpack.c.l.b16 %v2481
      %v2812 = vunpack.c.h.b16 %v2481
      %v2813 = vunpack.c.l.b16 %v2482
      %v2814 = vunpack.c.h.b16 %v2482
      %v2815 = vunpack.c.l.b16 %v2483
      %v2816 = vunpack.c.h.b16 %v2483
      %v2817 = vunpack.c.l.b16 %v2484
      %v2818 = vunpack.c.h.b16 %v2484
      %v2819 = vunpack.c.l.b16 %v2485
      %v2820 = vunpack.c.h.b16 %v2485
      %v2821 = vunpack.c.l.b16 %v2486
      %v2822 = vunpack.c.h.b16 %v2486
      %v2823 = vunpack.c.l.b16 %v2487
      %v2824 = vunpack.c.h.b16 %v2487
      %v2825 = vunpack.c.l.b16 %v2488
      %v2826 = vunpack.c.h.b16 %v2488
      %v2827 = vunpack.c.l.b16 %v2489
      %v2828 = vunpack.c.h.b16 %v2489
      %v2829 = vunpack.c.l.b16 %v2490
      %v2830 = vunpack.c.h.b16 %v2490
      %v2831 = vunpack.c.l.b16 %v2491
      %v2832 = vunpack.c.h.b16 %v2491
      %v2833 = vunpack.c.l.b16 %v2492
      %v2834 = vunpack.c.h.b16 %v2492
      %v2835 = vunpack.c.l.b16 %v2493
      %v2836 = vunpack.c.h.b16 %v2493
      %v2837 = vunpack.c.l.b16 %v2494
      %v2838 = vunpack.c.h.b16 %v2494
      %v2839 = vunpack.c.l.b16 %v2495
      %v2840 = vunpack.c.h.b16 %v2495
      %v2841 = vunpack.c.l.b16 %v2496
      %v2842 = vunpack.c.h.b16 %v2496
      %v2843 = vunpack.c.l.b16 %v2497
      %v2844 = vunpack.c.h.b16 %v2497
      %v2845 = vunpack.c.l.b16 %v2498
      %v2846 = vunpack.c.h.b16 %v2498
      %v2847 = vunpack.c.l.b16 %v2499
      %v2848 = vunpack.c.h.b16 %v2499
      %v2849 = vunpack.c.l.b16 %v2500
      %v2850 = vunpack.c.h.b16 %v2500
      %v2851 = vunpack.c.l.b16 %v2501
      %v2852 = vunpack.c.h.b16 %v2501
      %v2853 = vunpack.c.l.b16 %v2502
      %v2854 = vunpack.c.h.b16 %v2502
      %v2855 = vunpack.c.l.b16 %v2503
      %v2856 = vunpack.c.h.b16 %v2503
      %v2857 = vunpack.c.l.b16 %v2504
      %v2858 = vunpack.c.h.b16 %v2504
      %v2859 = vunpack.c.l.b16 %v2505
      %v2860 = vunpack.c.h.b16 %v2505
      %v2861 = vunpack.c.l.b16 %v2506
      %v2862 = vunpack.c.h.b16 %v2506
      %v2863 = vunpack.c.l.b16 %v2507
      %v2864 = vunpack.c.h.b16 %v2507
      %v2865 = vunpack.c.l.b16 %v2508
      %v2866 = vunpack.c.h.b16 %v2508
      %v2867 = vunpack.c.l.b16 %v2509
      %v2868 = vunpack.c.h.b16 %v2509
      %v2869 = vunpack.c.l.b16 %v2510
      %v2870 = vunpack.c.h.b16 %v2510
      %v2871 = vunpack.c.l.b16 %v2511
      %v2872 = vunpack.c.h.b16 %v2511
      %v2873 = vunpack.c.l.b16 %v2512
      %v2874 = vunpack.c.h.b16 %v2512
      %v2875 = vunpack.c.l.b16 %v2513
      %v2876 = vunpack.c.h.b16 %v2513
      %v2877 = vunpack.c.l.b16 %v2514
      %v2878 = vunpack.c.h.b16 %v2514
      %v2879 = vpack.c.b16 %v2737, %v2735
      %v2880 = vpack.c.b16 %v2738, %v2736
      %v2881 = vpack.c.b16 %v2741, %v2739
      %v2882 = vpack.c.b16 %v2742, %v2740
      %v2883 = vpack.c.b16 %v2745, %v2743
      %v2884 = vpack.c.b16 %v2746, %v2744
      %v2885 = vpack.c.b16 %v2749, %v2747
      %v2886 = vpack.c.b16 %v2750, %v2748
      %v2887 = vpack.c.b16 %v2753, %v2751
      %v2888 = vpack.c.b16 %v2754, %v2752
      %v2889 = vpack.c.b16 %v2757, %v2755
      %v2890 = vpack.c.b16 %v2758, %v2756
      %v2891 = vpack.c.b16 %v2761, %v2759
      %v2892 = vpack.c.b16 %v2762, %v2760
      %v2893 = vpack.c.b16 %v2765, %v2763
      %v2894 = vpack.c.b16 %v2766, %v2764
      %v2895 = vpack.c.b16 %v2769, %v2767
      %v2896 = vpack.c.b16 %v2770, %v2768
      %v2897 = vpack.c.b16 %v2773, %v2771
      %v2898 = vpack.c.b16 %v2774, %v2772
      %v2899 = vpack.c.b16 %v2777, %v2775
      %v2900 = vpack.c.b16 %v2778, %v2776
      %v2901 = vpack.c.b16 %v2781, %v2779
      %v2902 = vpack.c.b16 %v2782, %v2780
      %v2903 = vpack.c.b16 %v2785, %v2783
      %v2904 = vpack.c.b16 %v2786, %v2784
      %v2905 = vpack.c.b16 %v2789, %v2787
      %v2906 = vpack.c.b16 %v2790, %v2788
      %v2907 = vpack.c.b16 %v2793, %v2791
      %v2908 = vpack.c.b16 %v2794, %v2792
      %v2909 = vpack.c.b16 %v2797, %v2795
      %v2910 = vpack.c.b16 %v2798, %v2796
      %v2911 = vpack.c.b16 %v2801, %v2799
      %v2912 = vpack.c.b16 %v2802, %v2800
      %v2913 = vpack.c.b16 %v2805, %v2803
      %v2914 = vpack.c.b16 %v2806, %v2804
      %v2915 = vpack.c.b16 %v2809, %v2807
      %v2916 = vpack.c.b16 %v2810, %v2808
      %v2917 = vpack.c.b16 %v2813, %v2811
      %v2918 = vpack.c.b16 %v2814, %v2812
      %v2919 = vpack.c.b16 %v2817, %v2815
      %v2920 = vpack.c.b16 %v2818, %v2816
      %v2921 = vpack.c.b16 %v2821, %v2819
      %v2922 = vpack.c.b16 %v2822, %v2820
      %v2923 = vpack.c.b16 %v2825, %v2823
      %v2924 = vpack.c.b16 %v2826, %v2824
      %v2925 = vpack.c.b16 %v2829, %v2827
      %v2926 = vpack.c.b16 %v2830, %v2828
      %v2927 = vpack.c.b16 %v2833, %v2831
      %v2928 = vpack.c.b16 %v2834, %v2832
      %v2929 = vpack.c.b16 %v2837, %v2835
      %v2930 = vpack.c.b16 %v2838, %v2836
      %v2931 = vpack.c.b16 %v2841, %v2839
      %v2932 = vpack.c.b16 %v2842, %v2840
      %v2933 = vpack.c.b16 %v2845, %v2843
      %v2934 = vpack.c.b16 %v2846, %v2844
      %v2935 = vpack.c.b16 %v2849, %v2847
      %v2936 = vpack.c.b16 %v2850, %v2848
      %v2937 = vpack.c.b16 %v2853, %v2851
      %v2938 = vpack.c.b16 %v2854, %v2852
      %v2939 = vpack.c.b16 %v2857, %v2855
      %v2940 = vpack.c.b16 %v2858, %v2856
      %v2941 = vpack.c.b16 %v2861, %v2859
      %v2942 = vpack.c.b16 %v2862, %v2860
      %v2943 = vpack.c.b16 %v2865, %v2863
      %v2944 = vpack.c.b16 %v2866, %v2864
      %v2945 = vpack.c.b16 %v2869, %v2867
      %v2946 = vpack.c.b16 %v2870, %v2868
      %v2947 = vpack.c.b16 %v2873, %v2871
      %v2948 = vpack.c.b16 %v2874, %v2872
      %v2949 = vpack.c.b16 %v2877, %v2875
      %v2950 = vpack.c.b16 %v2878, %v2876
      %vm3023 = vcmask 523264
      %v3025 = vsel %vm3023, %v2631, 0
      %v3028 = vsel %vm3023, %v2636, 0
      %v3031 = vsel %vm3023, %v2641, 0
      %v3034 = vsel %vm3023, %v2646, 0
      %3036 = vmatpush.bf16.msra.mxu0 %v2893
      %3037 = vmatpush.bf16.msra.mxu0 %v2891
      %3038 = vmatpush.bf16.msra.mxu0 %v2889
      %3039 = vmatpush.bf16.msra.mxu0 %v2887
      %3040 = vmatpush.bf16.msra.mxu0 %v2885
      %3041 = vmatpush.bf16.msra.mxu0 %v2883
      %3042 = vmatpush.bf16.msra.mxu0 %v2881
      %3043 = vmatpush.bf16.msra.mxu0 %v2879
      %3044 = vmatmul.bf16.gmra.mxu0 %v2627
      %v3045 = vpop.f32.mrf.mxu0
      %v3046 = vadd.f32 %v2526, %v3045
      %v3047 = vpop.f32.mrf.mxu0
      %v3048 = vadd.f32 %v2531, %v3047
      %3049 = vmatmul.bf16.gmra.mxu0 %v2632
      %v3050 = vpop.f32.mrf.mxu0
      %v3051 = vadd.f32 %v2536, %v3050
      %v3052 = vpop.f32.mrf.mxu0
      %v3053 = vadd.f32 %v2541, %v3052
      %3054 = vmatmul.bf16.gmra.mxu0 %v2637
      %v3055 = vpop.f32.mrf.mxu0
      %v3056 = vadd.f32 %v2546, %v3055
      %v3057 = vpop.f32.mrf.mxu0
      %v3058 = vadd.f32 %v2551, %v3057
      %3059 = vmatmul.bf16.gmra.mxu0 %v2642
      %v3060 = vpop.f32.mrf.mxu0
      %v3061 = vadd.f32 %v2556, %v3060
      %v3062 = vpop.f32.mrf.mxu0
      %v3063 = vadd.f32 %v2561, %v3062
      %3064 = vdwg.mxu0
      %3065 = vmatpush.bf16.msra.mxu0 %v2909
      %3066 = vmatpush.bf16.msra.mxu0 %v2907
      %3067 = vmatpush.bf16.msra.mxu0 %v2905
      %3068 = vmatpush.bf16.msra.mxu0 %v2903
      %3069 = vmatpush.bf16.msra.mxu0 %v2901
      %3070 = vmatpush.bf16.msra.mxu0 %v2899
      %3071 = vmatpush.bf16.msra.mxu0 %v2897
      %3072 = vmatpush.bf16.msra.mxu0 %v2895
      %3073 = vmatmul.bf16.gmra.mxu0 %v2628
      %v3074 = vpop.f32.mrf.mxu0
      %v3075 = vadd.f32 %v3046, %v3074
      %v3076 = vpop.f32.mrf.mxu0
      %v3077 = vadd.f32 %v3048, %v3076
      %3078 = vmatmul.bf16.gmra.mxu0 %v2633
      %v3079 = vpop.f32.mrf.mxu0
      %v3080 = vadd.f32 %v3051, %v3079
      %v3081 = vpop.f32.mrf.mxu0
      %v3082 = vadd.f32 %v3053, %v3081
      %3083 = vmatmul.bf16.gmra.mxu0 %v2638
      %v3084 = vpop.f32.mrf.mxu0
      %v3085 = vadd.f32 %v3056, %v3084
      %v3086 = vpop.f32.mrf.mxu0
      %v3087 = vadd.f32 %v3058, %v3086
      %3088 = vmatmul.bf16.gmra.mxu0 %v2643
      %v3089 = vpop.f32.mrf.mxu0
      %v3090 = vadd.f32 %v3061, %v3089
      %v3091 = vpop.f32.mrf.mxu0
      %v3092 = vadd.f32 %v3063, %v3091
      %3093 = vdwg.mxu0
      %3094 = vmatpush.bf16.msra.mxu0 %v2925
      %3095 = vmatpush.bf16.msra.mxu0 %v2923
      %3096 = vmatpush.bf16.msra.mxu0 %v2921
      %3097 = vmatpush.bf16.msra.mxu0 %v2919
      %3098 = vmatpush.bf16.msra.mxu0 %v2917
      %3099 = vmatpush.bf16.msra.mxu0 %v2915
      %3100 = vmatpush.bf16.msra.mxu0 %v2913
      %3101 = vmatpush.bf16.msra.mxu0 %v2911
      %3102 = vmatmul.bf16.gmra.mxu0 %v2629
      %v3103 = vpop.f32.mrf.mxu0
      %v3104 = vadd.f32 %v3075, %v3103
      %v3105 = vpop.f32.mrf.mxu0
      %v3106 = vadd.f32 %v3077, %v3105
      %3107 = vmatmul.bf16.gmra.mxu0 %v2634
      %v3108 = vpop.f32.mrf.mxu0
      %v3109 = vadd.f32 %v3080, %v3108
      %v3110 = vpop.f32.mrf.mxu0
      %v3111 = vadd.f32 %v3082, %v3110
      %3112 = vmatmul.bf16.gmra.mxu0 %v2639
      %v3113 = vpop.f32.mrf.mxu0
      %v3114 = vadd.f32 %v3085, %v3113
      %v3115 = vpop.f32.mrf.mxu0
      %v3116 = vadd.f32 %v3087, %v3115
      %3117 = vmatmul.bf16.gmra.mxu0 %v2644
      %v3118 = vpop.f32.mrf.mxu0
      %v3119 = vadd.f32 %v3090, %v3118
      %v3120 = vpop.f32.mrf.mxu0
      %v3121 = vadd.f32 %v3092, %v3120
      %3122 = vdwg.mxu0
      %3123 = vmatpush.bf16.msra.mxu0 %v2941
      %3124 = vmatpush.bf16.msra.mxu0 %v2939
      %3125 = vmatpush.bf16.msra.mxu0 %v2937
      %3126 = vmatpush.bf16.msra.mxu0 %v2935
      %3127 = vmatpush.bf16.msra.mxu0 %v2933
      %3128 = vmatpush.bf16.msra.mxu0 %v2931
      %3129 = vmatpush.bf16.msra.mxu0 %v2929
      %3130 = vmatpush.bf16.msra.mxu0 %v2927
      %3131 = vmatmul.bf16.gmra.mxu0 %v2630
      %v3132 = vpop.f32.mrf.mxu0
      %v3133 = vadd.f32 %v3104, %v3132
      %v3134 = vpop.f32.mrf.mxu0
      %v3135 = vadd.f32 %v3106, %v3134
      %3136 = vmatmul.bf16.gmra.mxu0 %v2635
      %v3137 = vpop.f32.mrf.mxu0
      %v3138 = vadd.f32 %v3109, %v3137
      %v3139 = vpop.f32.mrf.mxu0
      %v3140 = vadd.f32 %v3111, %v3139
      %3141 = vmatmul.bf16.gmra.mxu0 %v2640
      %v3142 = vpop.f32.mrf.mxu0
      %v3143 = vadd.f32 %v3114, %v3142
      %v3144 = vpop.f32.mrf.mxu0
      %v3145 = vadd.f32 %v3116, %v3144
      %3146 = vmatmul.bf16.gmra.mxu0 %v2645
      %v3147 = vpop.f32.mrf.mxu0
      %v3148 = vadd.f32 %v3119, %v3147
      %v3149 = vpop.f32.mrf.mxu0
      %v3150 = vadd.f32 %v3121, %v3149
      %3151 = vdwg.mxu0
      %3152 = vmatpush.bf16.msra.mxu0 0
      %3153 = vmatpush.bf16.msra.mxu0 0
      %3154 = vmatpush.bf16.msra.mxu0 0
      %3155 = vmatpush.bf16.msra.mxu0 0
      %3156 = vmatpush.bf16.msra.mxu0 %v2949
      %3157 = vmatpush.bf16.msra.mxu0 %v2947
      %3158 = vmatpush.bf16.msra.mxu0 %v2945
      %3159 = vmatpush.bf16.msra.mxu0 %v2943
      %3160 = vmatmul.bf16.gmra.mxu0 %v3025
      %v3161 = vpop.f32.mrf.mxu0
      %v3162 = vadd.f32 %v3133, %v3161
      %v3163 = vpop.f32.mrf.mxu0
      %v3164 = vadd.f32 %v3135, %v3163
      %3165 = vmatmul.bf16.gmra.mxu0 %v3028
      %v3166 = vpop.f32.mrf.mxu0
      %v3167 = vadd.f32 %v3138, %v3166
      %v3168 = vpop.f32.mrf.mxu0
      %v3169 = vadd.f32 %v3140, %v3168
      %3170 = vmatmul.bf16.gmra.mxu0 %v3031
      %v3171 = vpop.f32.mrf.mxu0
      %v3172 = vadd.f32 %v3143, %v3171
      %v3173 = vpop.f32.mrf.mxu0
      %v3174 = vadd.f32 %v3145, %v3173
      %3175 = vmatmul.bf16.gmra.mxu0 %v3034
      %v3176 = vpop.f32.mrf.mxu0
      %v3177 = vadd.f32 %v3148, %v3176
      %v3178 = vpop.f32.mrf.mxu0
      %v3179 = vadd.f32 %v3150, %v3178
      %3180 = vdwg.mxu0
      %3181 = vmatpush.bf16.msra.mxu0 %v2894
      %3182 = vmatpush.bf16.msra.mxu0 %v2892
      %3183 = vmatpush.bf16.msra.mxu0 %v2890
      %3184 = vmatpush.bf16.msra.mxu0 %v2888
      %3185 = vmatpush.bf16.msra.mxu0 %v2886
      %3186 = vmatpush.bf16.msra.mxu0 %v2884
      %3187 = vmatpush.bf16.msra.mxu0 %v2882
      %3188 = vmatpush.bf16.msra.mxu0 %v2880
      %3189 = vmatmul.bf16.gmra.mxu0 %v2627
      %v3190 = vpop.f32.mrf.mxu0
      %v3191 = vadd.f32 %v2526, %v3190
      %v3192 = vpop.f32.mrf.mxu0
      %v3193 = vadd.f32 %v2531, %v3192
      %3194 = vmatmul.bf16.gmra.mxu0 %v2632
      %v3195 = vpop.f32.mrf.mxu0
      %v3196 = vadd.f32 %v2536, %v3195
      %v3197 = vpop.f32.mrf.mxu0
      %v3198 = vadd.f32 %v2541, %v3197
      %3199 = vmatmul.bf16.gmra.mxu0 %v2637
      %v3200 = vpop.f32.mrf.mxu0
      %v3201 = vadd.f32 %v2546, %v3200
      %v3202 = vpop.f32.mrf.mxu0
      %v3203 = vadd.f32 %v2551, %v3202
      %3204 = vmatmul.bf16.gmra.mxu0 %v2642
      %v3205 = vpop.f32.mrf.mxu0
      %v3206 = vadd.f32 %v2556, %v3205
      %v3207 = vpop.f32.mrf.mxu0
      %v3208 = vadd.f32 %v2561, %v3207
      %3209 = vdwg.mxu0
      %3210 = vmatpush.bf16.msra.mxu0 %v2910
      %3211 = vmatpush.bf16.msra.mxu0 %v2908
      %3212 = vmatpush.bf16.msra.mxu0 %v2906
      %3213 = vmatpush.bf16.msra.mxu0 %v2904
      %3214 = vmatpush.bf16.msra.mxu0 %v2902
      %3215 = vmatpush.bf16.msra.mxu0 %v2900
      %3216 = vmatpush.bf16.msra.mxu0 %v2898
      %3217 = vmatpush.bf16.msra.mxu0 %v2896
      %3218 = vmatmul.bf16.gmra.mxu0 %v2628
      %v3219 = vpop.f32.mrf.mxu0
      %v3220 = vadd.f32 %v3191, %v3219
      %v3221 = vpop.f32.mrf.mxu0
      %v3222 = vadd.f32 %v3193, %v3221
      %3223 = vmatmul.bf16.gmra.mxu0 %v2633
      %v3224 = vpop.f32.mrf.mxu0
      %v3225 = vadd.f32 %v3196, %v3224
      %v3226 = vpop.f32.mrf.mxu0
      %v3227 = vadd.f32 %v3198, %v3226
      %3228 = vmatmul.bf16.gmra.mxu0 %v2638
      %v3229 = vpop.f32.mrf.mxu0
      %v3230 = vadd.f32 %v3201, %v3229
      %v3231 = vpop.f32.mrf.mxu0
      %v3232 = vadd.f32 %v3203, %v3231
      %3233 = vmatmul.bf16.gmra.mxu0 %v2643
      %v3234 = vpop.f32.mrf.mxu0
      %v3235 = vadd.f32 %v3206, %v3234
      %v3236 = vpop.f32.mrf.mxu0
      %v3237 = vadd.f32 %v3208, %v3236
      %3238 = vdwg.mxu0
      %3239 = vmatpush.bf16.msra.mxu0 %v2926
      %3240 = vmatpush.bf16.msra.mxu0 %v2924
      %3241 = vmatpush.bf16.msra.mxu0 %v2922
      %3242 = vmatpush.bf16.msra.mxu0 %v2920
      %3243 = vmatpush.bf16.msra.mxu0 %v2918
      %3244 = vmatpush.bf16.msra.mxu0 %v2916
      %3245 = vmatpush.bf16.msra.mxu0 %v2914
      %3246 = vmatpush.bf16.msra.mxu0 %v2912
      %3247 = vmatmul.bf16.gmra.mxu0 %v2629
      %v3248 = vpop.f32.mrf.mxu0
      %v3249 = vadd.f32 %v3220, %v3248
      %v3250 = vpop.f32.mrf.mxu0
      %v3251 = vadd.f32 %v3222, %v3250
      %3252 = vmatmul.bf16.gmra.mxu0 %v2634
      %v3253 = vpop.f32.mrf.mxu0
      %v3254 = vadd.f32 %v3225, %v3253
      %v3255 = vpop.f32.mrf.mxu0
      %v3256 = vadd.f32 %v3227, %v3255
      %3257 = vmatmul.bf16.gmra.mxu0 %v2639
      %v3258 = vpop.f32.mrf.mxu0
      %v3259 = vadd.f32 %v3230, %v3258
      %v3260 = vpop.f32.mrf.mxu0
      %v3261 = vadd.f32 %v3232, %v3260
      %3262 = vmatmul.bf16.gmra.mxu0 %v2644
      %v3263 = vpop.f32.mrf.mxu0
      %v3264 = vadd.f32 %v3235, %v3263
      %v3265 = vpop.f32.mrf.mxu0
      %v3266 = vadd.f32 %v3237, %v3265
      %3267 = vdwg.mxu0
      %3268 = vmatpush.bf16.msra.mxu0 %v2942
      %3269 = vmatpush.bf16.msra.mxu0 %v2940
      %3270 = vmatpush.bf16.msra.mxu0 %v2938
      %3271 = vmatpush.bf16.msra.mxu0 %v2936
      %3272 = vmatpush.bf16.msra.mxu0 %v2934
      %3273 = vmatpush.bf16.msra.mxu0 %v2932
      %3274 = vmatpush.bf16.msra.mxu0 %v2930
      %3275 = vmatpush.bf16.msra.mxu0 %v2928
      %3276 = vmatmul.bf16.gmra.mxu0 %v2630
      %v3277 = vpop.f32.mrf.mxu0
      %v3278 = vadd.f32 %v3249, %v3277
      %v3279 = vpop.f32.mrf.mxu0
      %v3280 = vadd.f32 %v3251, %v3279
      %3281 = vmatmul.bf16.gmra.mxu0 %v2635
      %v3282 = vpop.f32.mrf.mxu0
      %v3283 = vadd.f32 %v3254, %v3282
      %v3284 = vpop.f32.mrf.mxu0
      %v3285 = vadd.f32 %v3256, %v3284
      %3286 = vmatmul.bf16.gmra.mxu0 %v2640
      %v3287 = vpop.f32.mrf.mxu0
      %v3288 = vadd.f32 %v3259, %v3287
      %v3289 = vpop.f32.mrf.mxu0
      %v3290 = vadd.f32 %v3261, %v3289
      %3291 = vmatmul.bf16.gmra.mxu0 %v2645
      %v3292 = vpop.f32.mrf.mxu0
      %v3293 = vadd.f32 %v3264, %v3292
      %v3294 = vpop.f32.mrf.mxu0
      %v3295 = vadd.f32 %v3266, %v3294
      %3296 = vdwg.mxu0
      %3297 = vmatpush.bf16.msra.mxu0 0
      %3298 = vmatpush.bf16.msra.mxu0 0
      %3299 = vmatpush.bf16.msra.mxu0 0
      %3300 = vmatpush.bf16.msra.mxu0 0
      %3301 = vmatpush.bf16.msra.mxu0 %v2950
      %3302 = vmatpush.bf16.msra.mxu0 %v2948
      %3303 = vmatpush.bf16.msra.mxu0 %v2946
      %3304 = vmatpush.bf16.msra.mxu0 %v2944
      %3305 = vmatmul.bf16.gmra.mxu0 %v3025
      %v3306 = vpop.f32.mrf.mxu0
      %v3307 = vadd.f32 %v3278, %v3306
      %v3308 = vpop.f32.mrf.mxu0
      %v3309 = vadd.f32 %v3280, %v3308
      %3310 = vmatmul.bf16.gmra.mxu0 %v3028
      %v3311 = vpop.f32.mrf.mxu0
      %v3312 = vadd.f32 %v3283, %v3311
      %v3313 = vpop.f32.mrf.mxu0
      %v3314 = vadd.f32 %v3285, %v3313
      %3315 = vmatmul.bf16.gmra.mxu0 %v3031
      %v3316 = vpop.f32.mrf.mxu0
      %v3317 = vadd.f32 %v3288, %v3316
      %v3318 = vpop.f32.mrf.mxu0
      %v3319 = vadd.f32 %v3290, %v3318
      %3320 = vmatmul.bf16.gmra.mxu0 %v3034
      %v3321 = vpop.f32.mrf.mxu0
      %v3322 = vadd.f32 %v3293, %v3321
      %v3323 = vpop.f32.mrf.mxu0
      %v3324 = vadd.f32 %v3295, %v3323
      %3325 = vdwg.mxu0
      %v3326 = vmax.f32 %v3162, 0.0
      %v3327 = vmax.f32 %v3307, 0.0
      %v3328 = vmax.f32 %v3164, 0.0
      %v3329 = vmax.f32 %v3309, 0.0
      %v3330 = vmax.f32 %v3167, 0.0
      %v3331 = vmax.f32 %v3312, 0.0
      %v3332 = vmax.f32 %v3169, 0.0
      %v3333 = vmax.f32 %v3314, 0.0
      %v3334 = vmax.f32 %v3172, 0.0
      %v3335 = vmax.f32 %v3317, 0.0
      %v3336 = vmax.f32 %v3174, 0.0
      %v3337 = vmax.f32 %v3319, 0.0
      %v3338 = vmax.f32 %v3177, 0.0
      %v3339 = vmax.f32 %v3322, 0.0
      %v3340 = vmax.f32 %v3179, 0.0
      %v3341 = vmax.f32 %v3324, 0.0
      %3342 = vst [vmem:[%s251] sm:$0xff] %v3326
      %3343 = vst [vmem:[%s251 + $0x8] sm:$0xff] %v3327
      %3344 = vst [vmem:[%s251 + $0x10] sm:$0xff] %v3328
      %3345 = vst [vmem:[%s251 + $0x18] sm:$0xff] %v3329
      %3346 = vst [vmem:[%s251 + $0x20] sm:$0xff] %v3330
      %3347 = vst [vmem:[%s251 + $0x28] sm:$0xff] %v3331
      %3348 = vst [vmem:[%s251 + $0x30] sm:$0xff] %v3332
      %3349 = vst [vmem:[%s251 + $0x38] sm:$0xff] %v3333
      %3350 = vst [vmem:[%s251 + $0x40] sm:$0xff] %v3334
      %3351 = vst [vmem:[%s251 + $0x48] sm:$0xff] %v3335
      %3352 = vst [vmem:[%s251 + $0x50] sm:$0xff] %v3336
      %3353 = vst [vmem:[%s251 + $0x58] sm:$0xff] %v3337
      %3354 = vst [vmem:[%s251 + $0x60] sm:$0xff] %v3338
      %3355 = vst [vmem:[%s251 + $0x68] sm:$0xff] %v3339
      %3356 = vst [vmem:[%s251 + $0x70] sm:$0xff] %v3340
      %3357 = vst [vmem:[%s251 + $0x78] sm:$0xff] %v3341
      %p3358 = scmp.lt.s32.totalorder %s17, 1
      %s3359 = scalar_select %p3358, %s17, 1
      %s3360 = smul.addr %s3359, 16
      %s3361 = smul.addr %s3360, 8
      %s3362 = scalar_lea.vmem %s6, %s3361
      // Predicated region
      $region45: #{double_conv_pallas.1} parent=43 // pred_check
        %p3363 = pneg %p166
      $region46: #{double_conv_pallas.1} parent=43 // pred_check_branch
        %3365 = sbr.rel (%p3363) target = $region48
      $region47: #{double_conv_pallas.1} parent=43 // pred_region
        _
      $region48: #{double_conv_pallas.1} parent=43 // pred_fallthru
        _
    $region44: #{double_conv_pallas.1} parent=5 // pred_fallthru
      _
    %p3366 = scmp.le.s32.totalorder 2, %s12
    // Predicated region
    $region49: #{double_conv_pallas.1} parent=5 // pred_check
      %p3367 = pneg %p3366
    $region50: #{double_conv_pallas.1} parent=5 // pred_check_branch
      %3369 = sbr.rel (%p3367) target = $region52
    $region51: #{double_conv_pallas.1} parent=5 // pred_region
      %s3370 = ssub.s32 %s12, 2
      // Predicated region
      $region53: #{double_conv_pallas.1} parent=51 // pred_check
        %p3371 = pneg %p172
      $region54: #{double_conv_pallas.1} parent=51 // pred_check_branch
        %3373 = sbr.rel (%p3371) target = $region56
      $region55: #{double_conv_pallas.1} parent=51 // pred_region
        %p3374 = scmp.lt.s32.totalorder %s18, 1
        %s3375 = scalar_select %p3374, %s18, 1
        %s3376 = smul.addr %s3375, 16
        %s3377 = smul.addr %s3376, 8
        %s3378 = scalar_lea.vmem %s6, %s3377
      $region56: #{double_conv_pallas.1} parent=51 // pred_fallthru
        _
    $region52: #{double_conv_pallas.1} parent=5 // pred_fallthru
      _
  $region6: #{double_conv_pallas.1} parent=0 // loop_footer
    %s16 = sadd.s32 1, %s12
  $region7: #{double_conv_pallas.1} parent=0 // loop_footer_branch
    %11 = sbr.rel target = $region3
  $region8: #{double_conv_pallas.1} parent=0 // loop_exit
    _

</llo_original>
